<compile_context>
chip_gen: v7x
topology: tpu7x:2x2x1
jax: 0.10.0
libtpu: 0.0.40
codegen_flags: <defaults>
</compile_context>

<pallas_src>
import jax
import jax.numpy as jnp
import numpy as np
from jax import lax
from jax.experimental import pallas as pl
from jax.experimental.pallas import tpu as pltpu


# ----------------------------------------------------------------------------------------
# Hardware introspection helpers (best-effort; safe fallbacks)
# ----------------------------------------------------------------------------------------
def _device_kind():
    try:
        return jax.devices()[0].device_kind.lower()
    except Exception:
        return ""


def _mxu_rows():
    # v2-v5: 128-row MXU; v6e/v7x: 256.  Only used to cap the default batch shard.
    kind = _device_kind()
    if any(g in kind for g in ("v2", "v3", "v4", "v5")):
        return 128
    return 256


def _vmem_capacity_bytes():
    try:
        return int(pltpu.get_tpu_info().vmem_capacity_bytes)
    except Exception:
        pass
    # v5e/v6e: 128 MiB physical VMEM; v7x: 64 MiB per TensorCore.
    return (64 << 20) if "v7" in _device_kind() else (128 << 20)


# ----------------------------------------------------------------------------------------
# Kernel
# ----------------------------------------------------------------------------------------
def make_gru_generator_kernel(num_layers: int, hidden_dim: int, chunk: int,
                              compute_dtype, unroll: int):
    H = hidden_dim
    Tc = chunk

    def kernel(*refs):
        # refs = x_ref, [w_ih_T, w_hh_T, b_rzn, b_hn] * L, w_lin_T, b_lin,
        #        o_ref, h_ref, seq_ref, gx_ref
        x_ref = refs[0]                      # (Tc, Bs, F)   leading shard dim squeezed
        n_w = 4 * num_layers + 2
        w_refs = refs[1:1 + n_w]
        o_ref = refs[1 + n_w]                # (Tc, Bs, H)
        h_ref = refs[2 + n_w]                # (L, Bs, H)  f32: hidden state, persists across chunks
        seq_ref = refs[3 + n_w]              # (Tc, Bs, H) f32: current layer's output slab
        gx_ref = refs[4 + n_w]               # (Tc, Bs, 3H) f32: staged input projection

        Bs = x_ref.shape[1]
        F = x_ref.shape[2]

        # New batch shard <=> the (innermost) time-chunk index resets -> zero hidden state.
        @pl.when(pl.program_id(1) == 0)
        def _init():
            h_ref[...] = jnp.zeros_like(h_ref)

        for l in range(num_layers):
            w_ih_T = w_refs[4 * l][...]        # (in_l, 3H), gate order r|z|n (PyTorch)
            w_hh_T = w_refs[4 * l + 1][...]    # (H, 3H)
            b_rzn = w_refs[4 * l + 2][...]     # (1, 3H) = [b_ir+b_hr | b_iz+b_hz | b_in]
            b_hn = w_refs[4 * l + 3][...]      # (1, H)

            if l == 0:
                inp2d = x_ref[...].reshape(Tc * Bs, F).astype(compute_dtype)
            else:
                inp2d = seq_ref[...].reshape(Tc * Bs, H).astype(compute_dtype)

            # Hoisted input projection for the whole chunk (off the serial path), staged to VMEM.
            gx = jnp.dot(inp2d, w_ih_T, preferred_element_type=jnp.float32) + b_rzn
            gx_ref[...] = gx.reshape(Tc, Bs, 3 * H)

            # Serial recurrence: only the h-matmul + gate math per timestep.
            def step(t, h):
                gxt = gx_ref[t]                                       # (Bs, 3H) f32
                gh = jnp.dot(h.astype(compute_dtype), w_hh_T,
                             preferred_element_type=jnp.float32)      # (Bs, 3H)
                rz = jax.nn.sigmoid(gxt[:, :2 * H] + gh[:, :2 * H])   # fused r|z sigmoid
                r = rz[:, :H]
                z = rz[:, H:]
                n = jnp.tanh(gxt[:, 2 * H:] + r * (gh[:, 2 * H:] + b_hn))
                h_new = (1.0 - z) * n + z * h
                seq_ref[t] = h_new
                return h_new

            h_ref[l] = lax.fori_loop(0, Tc, step, h_ref[l], unroll=unroll)

        # Linear + Sigmoid over the whole chunk of the top layer (lane-dense writeback).
        w_lin_T = w_refs[4 * num_layers][...]        # (H, H)
        b_lin = w_refs[4 * num_layers + 1][...]      # (1, H)
        top = seq_ref[...].reshape(Tc * Bs, H).astype(compute_dtype)
        y = jax.nn.sigmoid(jnp.dot(top, w_lin_T, preferred_element_type=jnp.float32) + b_lin)
        o_ref[...] = y.reshape(Tc, Bs, H).astype(o_ref.dtype)

    return kernel


# ----------------------------------------------------------------------------------------
# Wrapper
# ----------------------------------------------------------------------------------------
def generator_pallas(x, params, c=None, *, chunk=32, batch_shard=None,
                     weight_dtype=jnp.bfloat16):
    """Forward pass equivalent to Generator.forward(x, c) (GRU variant, batch_first)."""
    if c is not None:
        x = jnp.concatenate([x, c], axis=-1)
    B, T, F = x.shape
    layer_params = params["layers"]
    num_layers = len(layer_params)
    H = params["w_lin"].shape[0]
    # NOTE: gate slicing is lane-aligned when H % 128 == 0; other H values stay correct but
    # pay cross-lane relayouts.

    # ---- batch shard (MXU-height aware) & time chunk selection ---------------------------
    B8 = pl.cdiv(B, 8) * 8                       # f32 sublane granularity
    if batch_shard is None:
        mxu = _mxu_rows()
        n_shards = pl.cdiv(B8, mxu)              # fewest shards with Bs <= MXU height
        Bs = pl.cdiv(pl.cdiv(B8, n_shards), 8) * 8
        # NOTE(v7x): with 2 TensorCores/chip, pass batch_shard≈B//2 (>=8) explicitly so the
        # "parallel" shard axis has >=2 entries and both cores get work.
    else:
        Bs = max(8, pl.cdiv(int(batch_shard), 8) * 8)
        n_shards = pl.cdiv(B8, Bs)
    B_pad = n_shards * Bs

    Tc = max(1, min(int(chunk), T))
    T_pad = pl.cdiv(T, Tc) * Tc
    n_chunks = T_pad // Tc
    unroll = 8 if Tc % 8 == 0 else (4 if Tc % 4 == 0 else (2 if Tc % 2 == 0 else 1))

    x = x.astype(jnp.float32)
    if B_pad != B or T_pad != T:
        x = jnp.pad(x, ((0, B_pad - B), (0, T_pad - T), (0, 0)))

    # [B_pad, T_pad, F] -> [S, T_pad, Bs, F]  (time-major within each batch shard)
    x_tm = x.reshape(n_shards, Bs, T_pad, F).transpose(0, 2, 1, 3)

    # ---- flatten parameters (pre-transposed for the MXU, biases pre-combined, bf16 weights)
    flat = []
    for (w_ih, w_hh, b_ih, b_hh) in layer_params:
        b_ih = b_ih.astype(jnp.float32)
        b_hh = b_hh.astype(jnp.float32)
        b_rzn = jnp.concatenate([b_ih[:2 * H] + b_hh[:2 * H], b_ih[2 * H:]]).reshape(1, 3 * H)
        flat += [w_ih.T.astype(weight_dtype), w_hh.T.astype(weight_dtype),
                 b_rzn, b_hh[2 * H:].reshape(1, H)]
    flat += [params["w_lin"].T.astype(weight_dtype),
             params["b_lin"].reshape(1, -1).astype(jnp.float32)]

    weight_bytes = sum(int(a.size) * a.dtype.itemsize for a in flat)
    # Weights are grid-invariant (constant index_map -> never re-DMA'd), so double-buffering
    # them is pure VMEM waste; single-buffer once they are big enough to matter (H >= ~512).
    single_buf_weights = (2 * weight_bytes) > (8 << 20)

    in_specs = [pl.BlockSpec((pl.Squeezed(), Tc, Bs, F), lambda s, t: (s, t, 0, 0))]
    for a in flat:
        if single_buf_weights:
            in_specs.append(pl.BlockSpec(a.shape, lambda s, t: (0, 0),
                                         pipeline_mode=pl.Buffered(1)))
        else:
            in_specs.append(pl.BlockSpec(a.shape, lambda s, t: (0, 0)))

    out_specs = pl.BlockSpec((pl.Squeezed(), Tc, Bs, H), lambda s, t: (s, t, 0, 0))

    scratch_shapes = [
        pltpu.VMEM((num_layers, Bs, H), jnp.float32),   # resident per-layer hidden state
        pltpu.VMEM((Tc, Bs, H), jnp.float32),           # current layer output slab
        pltpu.VMEM((Tc, Bs, 3 * H), jnp.float32),       # staged input projection gx
    ]

    # ---- explicit, generation-aware VMEM budget -------------------------------------------
    w_resident = weight_bytes if single_buf_weights else 2 * weight_bytes
    block_bytes = (Tc * Bs * F + Tc * Bs * H) * 4            # one input + one output block (f32)
    scratch_bytes = (num_layers * Bs * H + Tc * Bs * H + Tc * Bs * 3 * H) * 4
    est = w_resident + 2 * block_bytes + scratch_bytes       # x/o blocks are double-buffered
    cap = _vmem_capacity_bytes()                              # 128 MiB v5e/v6e, 64 MiB v7x
    vmem_limit = int(min(max(2 * est, 32 << 20), int(0.8 * cap)))

    y_tm = pl.pallas_call(
        make_gru_generator_kernel(num_layers, H, Tc, weight_dtype, unroll),
        out_shape=jax.ShapeDtypeStruct((n_shards, T_pad, Bs, H), jnp.float32),
        grid_spec=pltpu.PrefetchScalarGridSpec(
            num_scalar_prefetch=0,
            grid=(n_shards, n_chunks),
            in_specs=in_specs,
            out_specs=out_specs,
            scratch_shapes=scratch_shapes,
        ),
        compiler_params=pltpu.CompilerParams(
            # Batch shards are independent ("parallel"); the time-chunk axis carries the
            # serial recurrence ("arbitrary") and MUST stay innermost (hidden-state reset
            # keys off pl.program_id(1) == 0).
            dimension_semantics=("parallel", "arbitrary"),
            vmem_limit_bytes=vmem_limit,
        ),
    )(x_tm, *flat)

    # [S, T_pad, Bs, H] -> [B, T, H]
    y = y_tm.transpose(0, 2, 1, 3).reshape(B_pad, T_pad, H)
    return y[:B, :T]


# ----------------------------------------------------------------------------------------
# Parameter init + pure-JAX reference (mirrors torch.nn.GRU + Linear + Sigmoid)
# ----------------------------------------------------------------------------------------
def init_params(key, input_features, hidden_dim, num_layers):
    """Deterministic init matching PyTorch GRU/Linear parameter shapes."""
    keys = jax.random.split(key, num_layers * 4 + 2)
    k = 1.0 / np.sqrt(hidden_dim)
    layers = []
    idx = 0
    in_dim = input_features
    for _ in range(num_layers):
        w_ih = jax.random.uniform(keys[idx], (3 * hidden_dim, in_dim), minval=-k, maxval=k); idx += 1
        w_hh = jax.random.uniform(keys[idx], (3 * hidden_dim, hidden_dim), minval=-k, maxval=k); idx += 1
        b_ih = jax.random.uniform(keys[idx], (3 * hidden_dim,), minval=-k, maxval=k); idx += 1
        b_hh = jax.random.uniform(keys[idx], (3 * hidden_dim,), minval=-k, maxval=k); idx += 1
        layers.append((w_ih, w_hh, b_ih, b_hh))
        in_dim = hidden_dim
    w_lin = jax.random.uniform(keys[idx], (hidden_dim, hidden_dim), minval=-k, maxval=k); idx += 1
    b_lin = jax.random.uniform(keys[idx], (hidden_dim,), minval=-k, maxval=k)
    return {"layers": layers, "w_lin": w_lin, "b_lin": b_lin}


def generator_reference(x, params, c=None):
    """Pure-JAX reference with full-precision matmuls."""
    hi = jax.lax.Precision.HIGHEST
    if c is not None:
        x = jnp.concatenate([x, c], axis=-1)
    B, T, _ = x.shape
    inp = x
    for (w_ih, w_hh, b_ih, b_hh) in params["layers"]:
        H = w_hh.shape[1]
        h = jnp.zeros((B, H), jnp.float32)
        outs = []
        for t in range(T):
            gx = jnp.dot(inp[:, t], w_ih.T, precision=hi) + b_ih
            gh = jnp.dot(h, w_hh.T, precision=hi) + b_hh
            r = jax.nn.sigmoid(gx[:, :H] + gh[:, :H])
            z = jax.nn.sigmoid(gx[:, H:2 * H] + gh[:, H:2 * H])
            n = jnp.tanh(gx[:, 2 * H:] + r * gh[:, 2 * H:])
            h = (1.0 - z) * n + z * h
            outs.append(h)
        inp = jnp.stack(outs, axis=1)
    return jax.nn.sigmoid(jnp.dot(inp, params["w_lin"].T, precision=hi) + params["b_lin"])


if __name__ == "__main__":
    B, T = 2, 8
    FX, FC = 4, 4                  # noise features + condition features (concatenated in forward)
    HIDDEN, NUM_LAYERS = 128, 2    # GRU hidden_dim / num_layers

    root = jax.random.PRNGKey(0)
    kx, kc, kp = jax.random.split(root, 3)
    x = jax.random.normal(kx, (B, T, FX), dtype=jnp.float32)
    c = jax.random.normal(kc, (B, T, FC), dtype=jnp.float32)
    params = init_params(kp, FX + FC, HIDDEN, NUM_LAYERS)

    ref = jax.block_until_ready(generator_reference(x, params, c=c))

    # Default (bf16 MXU) path
    out = jax.block_until_ready(generator_pallas(x, params, c=c))
    assert out.shape == (B, T, HIDDEN), out.shape
    np.testing.assert_allclose(np.asarray(out), np.asarray(ref), rtol=2e-2, atol=2e-2)

    # Exact-semantics f32 path
    out32 = jax.block_until_ready(generator_pallas(x, params, c=c, weight_dtype=jnp.float32))
    np.testing.assert_allclose(np.asarray(out32), np.asarray(ref), rtol=5e-3, atol=5e-3)

    print("KERNEL_OK")
</pallas_src>

<mosaic_0001>
module attributes {stable_mosaic.version = 11 : i64} {
  func.func @kernel(%arg0: i32, %arg1: i32, %arg2: memref<1x8x8x8xf32, #tpu.memory_space<vmem>>, %arg3: memref<8x384xbf16, #tpu.memory_space<vmem>>, %arg4: memref<128x384xbf16, #tpu.memory_space<vmem>>, %arg5: memref<1x384xf32, #tpu.memory_space<vmem>>, %arg6: memref<1x128xf32, #tpu.memory_space<vmem>>, %arg7: memref<128x384xbf16, #tpu.memory_space<vmem>>, %arg8: memref<128x384xbf16, #tpu.memory_space<vmem>>, %arg9: memref<1x384xf32, #tpu.memory_space<vmem>>, %arg10: memref<1x128xf32, #tpu.memory_space<vmem>>, %arg11: memref<128x128xbf16, #tpu.memory_space<vmem>>, %arg12: memref<1x128xf32, #tpu.memory_space<vmem>>, %arg13: memref<1x8x8x128xf32, #tpu.memory_space<vmem>>, %arg14: memref<2x8x128xf32, #tpu.memory_space<vmem>>, %arg15: memref<8x8x128xf32, #tpu.memory_space<vmem>>, %arg16: memref<8x8x384xf32, #tpu.memory_space<vmem>>) attributes {dimension_semantics = [#tpu.dimension_semantics<parallel>, #tpu.dimension_semantics<arbitrary>], iteration_bounds = array<i64: 1, 1>, scalar_prefetch = 0 : i64, scratch_operands = 3 : i64, tpu.core_type = #tpu.core_type<tc>, window_params = [{transform_indices = @transform_0, window_bounds = array<i64: 1, 8, 8, 8>}, {pipeline_mode = #tpu.pipeline_mode<synchronous>, transform_indices = @transform_1, window_bounds = array<i64: 8, 384>}, {pipeline_mode = #tpu.pipeline_mode<synchronous>, transform_indices = @transform_2, window_bounds = array<i64: 128, 384>}, {pipeline_mode = #tpu.pipeline_mode<synchronous>, transform_indices = @transform_3, window_bounds = array<i64: 1, 384>}, {pipeline_mode = #tpu.pipeline_mode<synchronous>, transform_indices = @transform_4, window_bounds = array<i64: 1, 128>}, {pipeline_mode = #tpu.pipeline_mode<synchronous>, transform_indices = @transform_5, window_bounds = array<i64: 128, 384>}, {pipeline_mode = #tpu.pipeline_mode<synchronous>, transform_indices = @transform_6, window_bounds = array<i64: 128, 384>}, {pipeline_mode = #tpu.pipeline_mode<synchronous>, transform_indices = @transform_7, window_bounds = array<i64: 1, 384>}, {pipeline_mode = #tpu.pipeline_mode<synchronous>, transform_indices = @transform_8, window_bounds = array<i64: 1, 128>}, {pipeline_mode = #tpu.pipeline_mode<synchronous>, transform_indices = @transform_9, window_bounds = array<i64: 128, 128>}, {pipeline_mode = #tpu.pipeline_mode<synchronous>, transform_indices = @transform_10, window_bounds = array<i64: 1, 128>}, {transform_indices = @transform_11, window_bounds = array<i64: 1, 8, 8, 128>}]} {
    %c0_i32 = arith.constant 0 : i32
    %0 = arith.cmpi eq, %arg1, %c0_i32 : i32
    %1 = arith.extui %0 : i1 to i32
    %c0_i32_0 = arith.constant 0 : i32
    %2 = arith.cmpi ne, %1, %c0_i32_0 : i32
    scf.if %2 {
      %cst_176 = arith.constant 0.000000e+00 : f32
      %551 = vector.broadcast %cst_176 : f32 to vector<2x8x128xf32>
      %c0_177 = arith.constant 0 : index
      %c0_178 = arith.constant 0 : index
      %c0_179 = arith.constant 0 : index
      %552 = vector.load %arg14[%c0_177, %c0_178, %c0_179] : memref<2x8x128xf32, #tpu.memory_space<vmem>>, vector<2x8x128xf32>
      tpu.vector_store %arg14[%c0_177, %c0_178, %c0_179], %551 {strides = array<i32>} : memref<2x8x128xf32, #tpu.memory_space<vmem>>, vector<2x8x128xf32>,
    } else {
    }
    %c0 = arith.constant 0 : index
    %c0_1 = arith.constant 0 : index
    %3 = vector.load %arg3[%c0, %c0_1] : memref<8x384xbf16, #tpu.memory_space<vmem>>, vector<8x384xbf16>
    %c0_2 = arith.constant 0 : index
    %c0_3 = arith.constant 0 : index
    %4 = vector.load %arg4[%c0_2, %c0_3] : memref<128x384xbf16, #tpu.memory_space<vmem>>, vector<128x384xbf16>
    %c0_4 = arith.constant 0 : index
    %c0_5 = arith.constant 0 : index
    %5 = vector.load %arg5[%c0_4, %c0_5] : memref<1x384xf32, #tpu.memory_space<vmem>>, vector<1x384xf32>
    %c0_6 = arith.constant 0 : index
    %c0_7 = arith.constant 0 : index
    %6 = vector.load %arg6[%c0_6, %c0_7] : memref<1x128xf32, #tpu.memory_space<vmem>>, vector<1x128xf32>
    %c0_8 = arith.constant 0 : index
    %c0_9 = arith.constant 0 : index
    %c0_10 = arith.constant 0 : index
    %c0_11 = arith.constant 0 : index
    %7 = vector.load %arg2[%c0_8, %c0_9, %c0_10, %c0_11] : memref<1x8x8x8xf32, #tpu.memory_space<vmem>>, vector<1x8x8x8xf32>
    %8 = vector.shape_cast %7 : vector<1x8x8x8xf32> to vector<8x8x8xf32>
    %9 = vector.shape_cast %8 : vector<8x8x8xf32> to vector<64x8xf32>
    %10 = arith.truncf %9 : vector<64x8xf32> to vector<64x8xbf16>
    %cst = arith.constant dense<0.000000e+00> : vector<64x384xf32>
    %11 = tpu.matmul %10, %3, %cst {dimension_numbers = #tpu.dot_dimension_numbers<[1], [0], [0], [1], [0, 0, 1, 1], [], []>} : vector<64x8xbf16>, vector<8x384xbf16>, vector<64x384xf32> -> vector<64x384xf32>
    %12 = vector.broadcast %5 : vector<1x384xf32> to vector<64x384xf32>
    %13 = arith.addf %11, %12 : vector<64x384xf32>
    %14 = vector.shape_cast %13 : vector<64x384xf32> to vector<8x8x384xf32>
    %c0_12 = arith.constant 0 : index
    %c0_13 = arith.constant 0 : index
    %c0_14 = arith.constant 0 : index
    %15 = vector.load %arg16[%c0_12, %c0_13, %c0_14] : memref<8x8x384xf32, #tpu.memory_space<vmem>>, vector<8x8x384xf32>
    tpu.vector_store %arg16[%c0_12, %c0_13, %c0_14], %14 {strides = array<i32>} : memref<8x8x384xf32, #tpu.memory_space<vmem>>, vector<8x8x384xf32>,
    %c0_15 = arith.constant 0 : index
    %c0_16 = arith.constant 0 : index
    %c0_17 = arith.constant 0 : index
    %16 = vector.load %arg14[%c0_15, %c0_16, %c0_17] : memref<2x8x128xf32, #tpu.memory_space<vmem>>, vector<1x8x128xf32>
    %17 = vector.shape_cast %16 : vector<1x8x128xf32> to vector<8x128xf32>
    %c0_i32_18 = arith.constant 0 : i32
    %18 = arith.index_cast %c0_i32_18 : i32 to index
    %c0_19 = arith.constant 0 : index
    %c0_20 = arith.constant 0 : index
    %19 = vector.load %arg16[%18, %c0_19, %c0_20] : memref<8x8x384xf32, #tpu.memory_space<vmem>>, vector<1x8x384xf32>
    %20 = vector.shape_cast %19 : vector<1x8x384xf32> to vector<8x384xf32>
    %21 = arith.truncf %17 : vector<8x128xf32> to vector<8x128xbf16>
    %cst_21 = arith.constant dense<0.000000e+00> : vector<8x384xf32>
    %22 = tpu.matmul %21, %4, %cst_21 {dimension_numbers = #tpu.dot_dimension_numbers<[1], [0], [0], [1], [0, 0, 1, 1], [], []>} : vector<8x128xbf16>, vector<128x384xbf16>, vector<8x384xf32> -> vector<8x384xf32>
    %23 = vector.extract_strided_slice %20 {offsets = [0, 0], sizes = [8, 256], strides = [1, 1]} : vector<8x384xf32> to vector<8x256xf32>
    %24 = vector.extract_strided_slice %22 {offsets = [0, 0], sizes = [8, 256], strides = [1, 1]} : vector<8x384xf32> to vector<8x256xf32>
    %25 = arith.addf %23, %24 : vector<8x256xf32>
    %26 = arith.negf %25 : vector<8x256xf32>
    %27 = math.exp %26 : vector<8x256xf32>
    %cst_22 = arith.constant 1.000000e+00 : f32
    %28 = vector.broadcast %cst_22 : f32 to vector<8x256xf32>
    %29 = arith.addf %28, %27 : vector<8x256xf32>
    %30 = arith.divf %28, %29 : vector<8x256xf32>
    %31 = vector.extract_strided_slice %30 {offsets = [0, 0], sizes = [8, 128], strides = [1, 1]} : vector<8x256xf32> to vector<8x128xf32>
    %32 = vector.extract_strided_slice %30 {offsets = [0, 128], sizes = [8, 128], strides = [1, 1]} : vector<8x256xf32> to vector<8x128xf32>
    %33 = vector.extract_strided_slice %20 {offsets = [0, 256], sizes = [8, 128], strides = [1, 1]} : vector<8x384xf32> to vector<8x128xf32>
    %34 = vector.extract_strided_slice %22 {offsets = [0, 256], sizes = [8, 128], strides = [1, 1]} : vector<8x384xf32> to vector<8x128xf32>
    %35 = vector.broadcast %6 : vector<1x128xf32> to vector<8x128xf32>
    %36 = arith.addf %34, %35 : vector<8x128xf32>
    %37 = arith.mulf %31, %36 : vector<8x128xf32>
    %38 = arith.addf %33, %37 : vector<8x128xf32>
    %39 = math.tanh %38 : vector<8x128xf32>
    %cst_23 = arith.constant 1.000000e+00 : f32
    %40 = vector.broadcast %cst_23 : f32 to vector<8x128xf32>
    %41 = arith.subf %40, %32 : vector<8x128xf32>
    %42 = arith.mulf %41, %39 : vector<8x128xf32>
    %43 = arith.mulf %32, %17 : vector<8x128xf32>
    %44 = arith.addf %42, %43 : vector<8x128xf32>
    %45 = arith.index_cast %c0_i32_18 : i32 to index
    %c0_24 = arith.constant 0 : index
    %c0_25 = arith.constant 0 : index
    %46 = vector.load %arg15[%45, %c0_24, %c0_25] : memref<8x8x128xf32, #tpu.memory_space<vmem>>, vector<1x8x128xf32>
    %47 = vector.shape_cast %46 : vector<1x8x128xf32> to vector<8x128xf32>
    %48 = vector.shape_cast %44 : vector<8x128xf32> to vector<1x8x128xf32>
    tpu.vector_store %arg15[%45, %c0_24, %c0_25], %48 {strides = array<i32>} : memref<8x8x128xf32, #tpu.memory_space<vmem>>, vector<1x8x128xf32>,
    %c1_i32 = arith.constant 1 : i32
    %49 = arith.index_cast %c1_i32 : i32 to index
    %c0_26 = arith.constant 0 : index
    %c0_27 = arith.constant 0 : index
    %50 = vector.load %arg16[%49, %c0_26, %c0_27] : memref<8x8x384xf32, #tpu.memory_space<vmem>>, vector<1x8x384xf32>
    %51 = vector.shape_cast %50 : vector<1x8x384xf32> to vector<8x384xf32>
    %52 = arith.truncf %44 : vector<8x128xf32> to vector<8x128xbf16>
    %cst_28 = arith.constant dense<0.000000e+00> : vector<8x384xf32>
    %53 = tpu.matmul %52, %4, %cst_28 {dimension_numbers = #tpu.dot_dimension_numbers<[1], [0], [0], [1], [0, 0, 1, 1], [], []>} : vector<8x128xbf16>, vector<128x384xbf16>, vector<8x384xf32> -> vector<8x384xf32>
    %54 = vector.extract_strided_slice %51 {offsets = [0, 0], sizes = [8, 256], strides = [1, 1]} : vector<8x384xf32> to vector<8x256xf32>
    %55 = vector.extract_strided_slice %53 {offsets = [0, 0], sizes = [8, 256], strides = [1, 1]} : vector<8x384xf32> to vector<8x256xf32>
    %56 = arith.addf %54, %55 : vector<8x256xf32>
    %57 = arith.negf %56 : vector<8x256xf32>
    %58 = math.exp %57 : vector<8x256xf32>
    %cst_29 = arith.constant 1.000000e+00 : f32
    %59 = vector.broadcast %cst_29 : f32 to vector<8x256xf32>
    %60 = arith.addf %59, %58 : vector<8x256xf32>
    %61 = arith.divf %59, %60 : vector<8x256xf32>
    %62 = vector.extract_strided_slice %61 {offsets = [0, 0], sizes = [8, 128], strides = [1, 1]} : vector<8x256xf32> to vector<8x128xf32>
    %63 = vector.extract_strided_slice %61 {offsets = [0, 128], sizes = [8, 128], strides = [1, 1]} : vector<8x256xf32> to vector<8x128xf32>
    %64 = vector.extract_strided_slice %51 {offsets = [0, 256], sizes = [8, 128], strides = [1, 1]} : vector<8x384xf32> to vector<8x128xf32>
    %65 = vector.extract_strided_slice %53 {offsets = [0, 256], sizes = [8, 128], strides = [1, 1]} : vector<8x384xf32> to vector<8x128xf32>
    %66 = vector.broadcast %6 : vector<1x128xf32> to vector<8x128xf32>
    %67 = arith.addf %65, %66 : vector<8x128xf32>
    %68 = arith.mulf %62, %67 : vector<8x128xf32>
    %69 = arith.addf %64, %68 : vector<8x128xf32>
    %70 = math.tanh %69 : vector<8x128xf32>
    %cst_30 = arith.constant 1.000000e+00 : f32
    %71 = vector.broadcast %cst_30 : f32 to vector<8x128xf32>
    %72 = arith.subf %71, %63 : vector<8x128xf32>
    %73 = arith.mulf %72, %70 : vector<8x128xf32>
    %74 = arith.mulf %63, %44 : vector<8x128xf32>
    %75 = arith.addf %73, %74 : vector<8x128xf32>
    %76 = arith.index_cast %c1_i32 : i32 to index
    %c0_31 = arith.constant 0 : index
    %c0_32 = arith.constant 0 : index
    %77 = vector.load %arg15[%76, %c0_31, %c0_32] : memref<8x8x128xf32, #tpu.memory_space<vmem>>, vector<1x8x128xf32>
    %78 = vector.shape_cast %77 : vector<1x8x128xf32> to vector<8x128xf32>
    %79 = vector.shape_cast %75 : vector<8x128xf32> to vector<1x8x128xf32>
    tpu.vector_store %arg15[%76, %c0_31, %c0_32], %79 {strides = array<i32>} : memref<8x8x128xf32, #tpu.memory_space<vmem>>, vector<1x8x128xf32>,
    %c2_i32 = arith.constant 2 : i32
    %80 = arith.index_cast %c2_i32 : i32 to index
    %c0_33 = arith.constant 0 : index
    %c0_34 = arith.constant 0 : index
    %81 = vector.load %arg16[%80, %c0_33, %c0_34] : memref<8x8x384xf32, #tpu.memory_space<vmem>>, vector<1x8x384xf32>
    %82 = vector.shape_cast %81 : vector<1x8x384xf32> to vector<8x384xf32>
    %83 = arith.truncf %75 : vector<8x128xf32> to vector<8x128xbf16>
    %cst_35 = arith.constant dense<0.000000e+00> : vector<8x384xf32>
    %84 = tpu.matmul %83, %4, %cst_35 {dimension_numbers = #tpu.dot_dimension_numbers<[1], [0], [0], [1], [0, 0, 1, 1], [], []>} : vector<8x128xbf16>, vector<128x384xbf16>, vector<8x384xf32> -> vector<8x384xf32>
    %85 = vector.extract_strided_slice %82 {offsets = [0, 0], sizes = [8, 256], strides = [1, 1]} : vector<8x384xf32> to vector<8x256xf32>
    %86 = vector.extract_strided_slice %84 {offsets = [0, 0], sizes = [8, 256], strides = [1, 1]} : vector<8x384xf32> to vector<8x256xf32>
    %87 = arith.addf %85, %86 : vector<8x256xf32>
    %88 = arith.negf %87 : vector<8x256xf32>
    %89 = math.exp %88 : vector<8x256xf32>
    %cst_36 = arith.constant 1.000000e+00 : f32
    %90 = vector.broadcast %cst_36 : f32 to vector<8x256xf32>
    %91 = arith.addf %90, %89 : vector<8x256xf32>
    %92 = arith.divf %90, %91 : vector<8x256xf32>
    %93 = vector.extract_strided_slice %92 {offsets = [0, 0], sizes = [8, 128], strides = [1, 1]} : vector<8x256xf32> to vector<8x128xf32>
    %94 = vector.extract_strided_slice %92 {offsets = [0, 128], sizes = [8, 128], strides = [1, 1]} : vector<8x256xf32> to vector<8x128xf32>
    %95 = vector.extract_strided_slice %82 {offsets = [0, 256], sizes = [8, 128], strides = [1, 1]} : vector<8x384xf32> to vector<8x128xf32>
    %96 = vector.extract_strided_slice %84 {offsets = [0, 256], sizes = [8, 128], strides = [1, 1]} : vector<8x384xf32> to vector<8x128xf32>
    %97 = vector.broadcast %6 : vector<1x128xf32> to vector<8x128xf32>
    %98 = arith.addf %96, %97 : vector<8x128xf32>
    %99 = arith.mulf %93, %98 : vector<8x128xf32>
    %100 = arith.addf %95, %99 : vector<8x128xf32>
    %101 = math.tanh %100 : vector<8x128xf32>
    %cst_37 = arith.constant 1.000000e+00 : f32
    %102 = vector.broadcast %cst_37 : f32 to vector<8x128xf32>
    %103 = arith.subf %102, %94 : vector<8x128xf32>
    %104 = arith.mulf %103, %101 : vector<8x128xf32>
    %105 = arith.mulf %94, %75 : vector<8x128xf32>
    %106 = arith.addf %104, %105 : vector<8x128xf32>
    %107 = arith.index_cast %c2_i32 : i32 to index
    %c0_38 = arith.constant 0 : index
    %c0_39 = arith.constant 0 : index
    %108 = vector.load %arg15[%107, %c0_38, %c0_39] : memref<8x8x128xf32, #tpu.memory_space<vmem>>, vector<1x8x128xf32>
    %109 = vector.shape_cast %108 : vector<1x8x128xf32> to vector<8x128xf32>
    %110 = vector.shape_cast %106 : vector<8x128xf32> to vector<1x8x128xf32>
    tpu.vector_store %arg15[%107, %c0_38, %c0_39], %110 {strides = array<i32>} : memref<8x8x128xf32, #tpu.memory_space<vmem>>, vector<1x8x128xf32>,
    %c3_i32 = arith.constant 3 : i32
    %111 = arith.index_cast %c3_i32 : i32 to index
    %c0_40 = arith.constant 0 : index
    %c0_41 = arith.constant 0 : index
    %112 = vector.load %arg16[%111, %c0_40, %c0_41] : memref<8x8x384xf32, #tpu.memory_space<vmem>>, vector<1x8x384xf32>
    %113 = vector.shape_cast %112 : vector<1x8x384xf32> to vector<8x384xf32>
    %114 = arith.truncf %106 : vector<8x128xf32> to vector<8x128xbf16>
    %cst_42 = arith.constant dense<0.000000e+00> : vector<8x384xf32>
    %115 = tpu.matmul %114, %4, %cst_42 {dimension_numbers = #tpu.dot_dimension_numbers<[1], [0], [0], [1], [0, 0, 1, 1], [], []>} : vector<8x128xbf16>, vector<128x384xbf16>, vector<8x384xf32> -> vector<8x384xf32>
    %116 = vector.extract_strided_slice %113 {offsets = [0, 0], sizes = [8, 256], strides = [1, 1]} : vector<8x384xf32> to vector<8x256xf32>
    %117 = vector.extract_strided_slice %115 {offsets = [0, 0], sizes = [8, 256], strides = [1, 1]} : vector<8x384xf32> to vector<8x256xf32>
    %118 = arith.addf %116, %117 : vector<8x256xf32>
    %119 = arith.negf %118 : vector<8x256xf32>
    %120 = math.exp %119 : vector<8x256xf32>
    %cst_43 = arith.constant 1.000000e+00 : f32
    %121 = vector.broadcast %cst_43 : f32 to vector<8x256xf32>
    %122 = arith.addf %121, %120 : vector<8x256xf32>
    %123 = arith.divf %121, %122 : vector<8x256xf32>
    %124 = vector.extract_strided_slice %123 {offsets = [0, 0], sizes = [8, 128], strides = [1, 1]} : vector<8x256xf32> to vector<8x128xf32>
    %125 = vector.extract_strided_slice %123 {offsets = [0, 128], sizes = [8, 128], strides = [1, 1]} : vector<8x256xf32> to vector<8x128xf32>
    %126 = vector.extract_strided_slice %113 {offsets = [0, 256], sizes = [8, 128], strides = [1, 1]} : vector<8x384xf32> to vector<8x128xf32>
    %127 = vector.extract_strided_slice %115 {offsets = [0, 256], sizes = [8, 128], strides = [1, 1]} : vector<8x384xf32> to vector<8x128xf32>
    %128 = vector.broadcast %6 : vector<1x128xf32> to vector<8x128xf32>
    %129 = arith.addf %127, %128 : vector<8x128xf32>
    %130 = arith.mulf %124, %129 : vector<8x128xf32>
    %131 = arith.addf %126, %130 : vector<8x128xf32>
    %132 = math.tanh %131 : vector<8x128xf32>
    %cst_44 = arith.constant 1.000000e+00 : f32
    %133 = vector.broadcast %cst_44 : f32 to vector<8x128xf32>
    %134 = arith.subf %133, %125 : vector<8x128xf32>
    %135 = arith.mulf %134, %132 : vector<8x128xf32>
    %136 = arith.mulf %125, %106 : vector<8x128xf32>
    %137 = arith.addf %135, %136 : vector<8x128xf32>
    %138 = arith.index_cast %c3_i32 : i32 to index
    %c0_45 = arith.constant 0 : index
    %c0_46 = arith.constant 0 : index
    %139 = vector.load %arg15[%138, %c0_45, %c0_46] : memref<8x8x128xf32, #tpu.memory_space<vmem>>, vector<1x8x128xf32>
    %140 = vector.shape_cast %139 : vector<1x8x128xf32> to vector<8x128xf32>
    %141 = vector.shape_cast %137 : vector<8x128xf32> to vector<1x8x128xf32>
    tpu.vector_store %arg15[%138, %c0_45, %c0_46], %141 {strides = array<i32>} : memref<8x8x128xf32, #tpu.memory_space<vmem>>, vector<1x8x128xf32>,
    %c4_i32 = arith.constant 4 : i32
    %142 = arith.index_cast %c4_i32 : i32 to index
    %c0_47 = arith.constant 0 : index
    %c0_48 = arith.constant 0 : index
    %143 = vector.load %arg16[%142, %c0_47, %c0_48] : memref<8x8x384xf32, #tpu.memory_space<vmem>>, vector<1x8x384xf32>
    %144 = vector.shape_cast %143 : vector<1x8x384xf32> to vector<8x384xf32>
    %145 = arith.truncf %137 : vector<8x128xf32> to vector<8x128xbf16>
    %cst_49 = arith.constant dense<0.000000e+00> : vector<8x384xf32>
    %146 = tpu.matmul %145, %4, %cst_49 {dimension_numbers = #tpu.dot_dimension_numbers<[1], [0], [0], [1], [0, 0, 1, 1], [], []>} : vector<8x128xbf16>, vector<128x384xbf16>, vector<8x384xf32> -> vector<8x384xf32>
    %147 = vector.extract_strided_slice %144 {offsets = [0, 0], sizes = [8, 256], strides = [1, 1]} : vector<8x384xf32> to vector<8x256xf32>
    %148 = vector.extract_strided_slice %146 {offsets = [0, 0], sizes = [8, 256], strides = [1, 1]} : vector<8x384xf32> to vector<8x256xf32>
    %149 = arith.addf %147, %148 : vector<8x256xf32>
    %150 = arith.negf %149 : vector<8x256xf32>
    %151 = math.exp %150 : vector<8x256xf32>
    %cst_50 = arith.constant 1.000000e+00 : f32
    %152 = vector.broadcast %cst_50 : f32 to vector<8x256xf32>
    %153 = arith.addf %152, %151 : vector<8x256xf32>
    %154 = arith.divf %152, %153 : vector<8x256xf32>
    %155 = vector.extract_strided_slice %154 {offsets = [0, 0], sizes = [8, 128], strides = [1, 1]} : vector<8x256xf32> to vector<8x128xf32>
    %156 = vector.extract_strided_slice %154 {offsets = [0, 128], sizes = [8, 128], strides = [1, 1]} : vector<8x256xf32> to vector<8x128xf32>
    %157 = vector.extract_strided_slice %144 {offsets = [0, 256], sizes = [8, 128], strides = [1, 1]} : vector<8x384xf32> to vector<8x128xf32>
    %158 = vector.extract_strided_slice %146 {offsets = [0, 256], sizes = [8, 128], strides = [1, 1]} : vector<8x384xf32> to vector<8x128xf32>
    %159 = vector.broadcast %6 : vector<1x128xf32> to vector<8x128xf32>
    %160 = arith.addf %158, %159 : vector<8x128xf32>
    %161 = arith.mulf %155, %160 : vector<8x128xf32>
    %162 = arith.addf %157, %161 : vector<8x128xf32>
    %163 = math.tanh %162 : vector<8x128xf32>
    %cst_51 = arith.constant 1.000000e+00 : f32
    %164 = vector.broadcast %cst_51 : f32 to vector<8x128xf32>
    %165 = arith.subf %164, %156 : vector<8x128xf32>
    %166 = arith.mulf %165, %163 : vector<8x128xf32>
    %167 = arith.mulf %156, %137 : vector<8x128xf32>
    %168 = arith.addf %166, %167 : vector<8x128xf32>
    %169 = arith.index_cast %c4_i32 : i32 to index
    %c0_52 = arith.constant 0 : index
    %c0_53 = arith.constant 0 : index
    %170 = vector.load %arg15[%169, %c0_52, %c0_53] : memref<8x8x128xf32, #tpu.memory_space<vmem>>, vector<1x8x128xf32>
    %171 = vector.shape_cast %170 : vector<1x8x128xf32> to vector<8x128xf32>
    %172 = vector.shape_cast %168 : vector<8x128xf32> to vector<1x8x128xf32>
    tpu.vector_store %arg15[%169, %c0_52, %c0_53], %172 {strides = array<i32>} : memref<8x8x128xf32, #tpu.memory_space<vmem>>, vector<1x8x128xf32>,
    %c5_i32 = arith.constant 5 : i32
    %173 = arith.index_cast %c5_i32 : i32 to index
    %c0_54 = arith.constant 0 : index
    %c0_55 = arith.constant 0 : index
    %174 = vector.load %arg16[%173, %c0_54, %c0_55] : memref<8x8x384xf32, #tpu.memory_space<vmem>>, vector<1x8x384xf32>
    %175 = vector.shape_cast %174 : vector<1x8x384xf32> to vector<8x384xf32>
    %176 = arith.truncf %168 : vector<8x128xf32> to vector<8x128xbf16>
    %cst_56 = arith.constant dense<0.000000e+00> : vector<8x384xf32>
    %177 = tpu.matmul %176, %4, %cst_56 {dimension_numbers = #tpu.dot_dimension_numbers<[1], [0], [0], [1], [0, 0, 1, 1], [], []>} : vector<8x128xbf16>, vector<128x384xbf16>, vector<8x384xf32> -> vector<8x384xf32>
    %178 = vector.extract_strided_slice %175 {offsets = [0, 0], sizes = [8, 256], strides = [1, 1]} : vector<8x384xf32> to vector<8x256xf32>
    %179 = vector.extract_strided_slice %177 {offsets = [0, 0], sizes = [8, 256], strides = [1, 1]} : vector<8x384xf32> to vector<8x256xf32>
    %180 = arith.addf %178, %179 : vector<8x256xf32>
    %181 = arith.negf %180 : vector<8x256xf32>
    %182 = math.exp %181 : vector<8x256xf32>
    %cst_57 = arith.constant 1.000000e+00 : f32
    %183 = vector.broadcast %cst_57 : f32 to vector<8x256xf32>
    %184 = arith.addf %183, %182 : vector<8x256xf32>
    %185 = arith.divf %183, %184 : vector<8x256xf32>
    %186 = vector.extract_strided_slice %185 {offsets = [0, 0], sizes = [8, 128], strides = [1, 1]} : vector<8x256xf32> to vector<8x128xf32>
    %187 = vector.extract_strided_slice %185 {offsets = [0, 128], sizes = [8, 128], strides = [1, 1]} : vector<8x256xf32> to vector<8x128xf32>
    %188 = vector.extract_strided_slice %175 {offsets = [0, 256], sizes = [8, 128], strides = [1, 1]} : vector<8x384xf32> to vector<8x128xf32>
    %189 = vector.extract_strided_slice %177 {offsets = [0, 256], sizes = [8, 128], strides = [1, 1]} : vector<8x384xf32> to vector<8x128xf32>
    %190 = vector.broadcast %6 : vector<1x128xf32> to vector<8x128xf32>
    %191 = arith.addf %189, %190 : vector<8x128xf32>
    %192 = arith.mulf %186, %191 : vector<8x128xf32>
    %193 = arith.addf %188, %192 : vector<8x128xf32>
    %194 = math.tanh %193 : vector<8x128xf32>
    %cst_58 = arith.constant 1.000000e+00 : f32
    %195 = vector.broadcast %cst_58 : f32 to vector<8x128xf32>
    %196 = arith.subf %195, %187 : vector<8x128xf32>
    %197 = arith.mulf %196, %194 : vector<8x128xf32>
    %198 = arith.mulf %187, %168 : vector<8x128xf32>
    %199 = arith.addf %197, %198 : vector<8x128xf32>
    %200 = arith.index_cast %c5_i32 : i32 to index
    %c0_59 = arith.constant 0 : index
    %c0_60 = arith.constant 0 : index
    %201 = vector.load %arg15[%200, %c0_59, %c0_60] : memref<8x8x128xf32, #tpu.memory_space<vmem>>, vector<1x8x128xf32>
    %202 = vector.shape_cast %201 : vector<1x8x128xf32> to vector<8x128xf32>
    %203 = vector.shape_cast %199 : vector<8x128xf32> to vector<1x8x128xf32>
    tpu.vector_store %arg15[%200, %c0_59, %c0_60], %203 {strides = array<i32>} : memref<8x8x128xf32, #tpu.memory_space<vmem>>, vector<1x8x128xf32>,
    %c6_i32 = arith.constant 6 : i32
    %204 = arith.index_cast %c6_i32 : i32 to index
    %c0_61 = arith.constant 0 : index
    %c0_62 = arith.constant 0 : index
    %205 = vector.load %arg16[%204, %c0_61, %c0_62] : memref<8x8x384xf32, #tpu.memory_space<vmem>>, vector<1x8x384xf32>
    %206 = vector.shape_cast %205 : vector<1x8x384xf32> to vector<8x384xf32>
    %207 = arith.truncf %199 : vector<8x128xf32> to vector<8x128xbf16>
    %cst_63 = arith.constant dense<0.000000e+00> : vector<8x384xf32>
    %208 = tpu.matmul %207, %4, %cst_63 {dimension_numbers = #tpu.dot_dimension_numbers<[1], [0], [0], [1], [0, 0, 1, 1], [], []>} : vector<8x128xbf16>, vector<128x384xbf16>, vector<8x384xf32> -> vector<8x384xf32>
    %209 = vector.extract_strided_slice %206 {offsets = [0, 0], sizes = [8, 256], strides = [1, 1]} : vector<8x384xf32> to vector<8x256xf32>
    %210 = vector.extract_strided_slice %208 {offsets = [0, 0], sizes = [8, 256], strides = [1, 1]} : vector<8x384xf32> to vector<8x256xf32>
    %211 = arith.addf %209, %210 : vector<8x256xf32>
    %212 = arith.negf %211 : vector<8x256xf32>
    %213 = math.exp %212 : vector<8x256xf32>
    %cst_64 = arith.constant 1.000000e+00 : f32
    %214 = vector.broadcast %cst_64 : f32 to vector<8x256xf32>
    %215 = arith.addf %214, %213 : vector<8x256xf32>
    %216 = arith.divf %214, %215 : vector<8x256xf32>
    %217 = vector.extract_strided_slice %216 {offsets = [0, 0], sizes = [8, 128], strides = [1, 1]} : vector<8x256xf32> to vector<8x128xf32>
    %218 = vector.extract_strided_slice %216 {offsets = [0, 128], sizes = [8, 128], strides = [1, 1]} : vector<8x256xf32> to vector<8x128xf32>
    %219 = vector.extract_strided_slice %206 {offsets = [0, 256], sizes = [8, 128], strides = [1, 1]} : vector<8x384xf32> to vector<8x128xf32>
    %220 = vector.extract_strided_slice %208 {offsets = [0, 256], sizes = [8, 128], strides = [1, 1]} : vector<8x384xf32> to vector<8x128xf32>
    %221 = vector.broadcast %6 : vector<1x128xf32> to vector<8x128xf32>
    %222 = arith.addf %220, %221 : vector<8x128xf32>
    %223 = arith.mulf %217, %222 : vector<8x128xf32>
    %224 = arith.addf %219, %223 : vector<8x128xf32>
    %225 = math.tanh %224 : vector<8x128xf32>
    %cst_65 = arith.constant 1.000000e+00 : f32
    %226 = vector.broadcast %cst_65 : f32 to vector<8x128xf32>
    %227 = arith.subf %226, %218 : vector<8x128xf32>
    %228 = arith.mulf %227, %225 : vector<8x128xf32>
    %229 = arith.mulf %218, %199 : vector<8x128xf32>
    %230 = arith.addf %228, %229 : vector<8x128xf32>
    %231 = arith.index_cast %c6_i32 : i32 to index
    %c0_66 = arith.constant 0 : index
    %c0_67 = arith.constant 0 : index
    %232 = vector.load %arg15[%231, %c0_66, %c0_67] : memref<8x8x128xf32, #tpu.memory_space<vmem>>, vector<1x8x128xf32>
    %233 = vector.shape_cast %232 : vector<1x8x128xf32> to vector<8x128xf32>
    %234 = vector.shape_cast %230 : vector<8x128xf32> to vector<1x8x128xf32>
    tpu.vector_store %arg15[%231, %c0_66, %c0_67], %234 {strides = array<i32>} : memref<8x8x128xf32, #tpu.memory_space<vmem>>, vector<1x8x128xf32>,
    %c7_i32 = arith.constant 7 : i32
    %235 = arith.index_cast %c7_i32 : i32 to index
    %c0_68 = arith.constant 0 : index
    %c0_69 = arith.constant 0 : index
    %236 = vector.load %arg16[%235, %c0_68, %c0_69] : memref<8x8x384xf32, #tpu.memory_space<vmem>>, vector<1x8x384xf32>
    %237 = vector.shape_cast %236 : vector<1x8x384xf32> to vector<8x384xf32>
    %238 = arith.truncf %230 : vector<8x128xf32> to vector<8x128xbf16>
    %cst_70 = arith.constant dense<0.000000e+00> : vector<8x384xf32>
    %239 = tpu.matmul %238, %4, %cst_70 {dimension_numbers = #tpu.dot_dimension_numbers<[1], [0], [0], [1], [0, 0, 1, 1], [], []>} : vector<8x128xbf16>, vector<128x384xbf16>, vector<8x384xf32> -> vector<8x384xf32>
    %240 = vector.extract_strided_slice %237 {offsets = [0, 0], sizes = [8, 256], strides = [1, 1]} : vector<8x384xf32> to vector<8x256xf32>
    %241 = vector.extract_strided_slice %239 {offsets = [0, 0], sizes = [8, 256], strides = [1, 1]} : vector<8x384xf32> to vector<8x256xf32>
    %242 = arith.addf %240, %241 : vector<8x256xf32>
    %243 = arith.negf %242 : vector<8x256xf32>
    %244 = math.exp %243 : vector<8x256xf32>
    %cst_71 = arith.constant 1.000000e+00 : f32
    %245 = vector.broadcast %cst_71 : f32 to vector<8x256xf32>
    %246 = arith.addf %245, %244 : vector<8x256xf32>
    %247 = arith.divf %245, %246 : vector<8x256xf32>
    %248 = vector.extract_strided_slice %247 {offsets = [0, 0], sizes = [8, 128], strides = [1, 1]} : vector<8x256xf32> to vector<8x128xf32>
    %249 = vector.extract_strided_slice %247 {offsets = [0, 128], sizes = [8, 128], strides = [1, 1]} : vector<8x256xf32> to vector<8x128xf32>
    %250 = vector.extract_strided_slice %237 {offsets = [0, 256], sizes = [8, 128], strides = [1, 1]} : vector<8x384xf32> to vector<8x128xf32>
    %251 = vector.extract_strided_slice %239 {offsets = [0, 256], sizes = [8, 128], strides = [1, 1]} : vector<8x384xf32> to vector<8x128xf32>
    %252 = vector.broadcast %6 : vector<1x128xf32> to vector<8x128xf32>
    %253 = arith.addf %251, %252 : vector<8x128xf32>
    %254 = arith.mulf %248, %253 : vector<8x128xf32>
    %255 = arith.addf %250, %254 : vector<8x128xf32>
    %256 = math.tanh %255 : vector<8x128xf32>
    %cst_72 = arith.constant 1.000000e+00 : f32
    %257 = vector.broadcast %cst_72 : f32 to vector<8x128xf32>
    %258 = arith.subf %257, %249 : vector<8x128xf32>
    %259 = arith.mulf %258, %256 : vector<8x128xf32>
    %260 = arith.mulf %249, %230 : vector<8x128xf32>
    %261 = arith.addf %259, %260 : vector<8x128xf32>
    %262 = arith.index_cast %c7_i32 : i32 to index
    %c0_73 = arith.constant 0 : index
    %c0_74 = arith.constant 0 : index
    %263 = vector.load %arg15[%262, %c0_73, %c0_74] : memref<8x8x128xf32, #tpu.memory_space<vmem>>, vector<1x8x128xf32>
    %264 = vector.shape_cast %263 : vector<1x8x128xf32> to vector<8x128xf32>
    %265 = vector.shape_cast %261 : vector<8x128xf32> to vector<1x8x128xf32>
    tpu.vector_store %arg15[%262, %c0_73, %c0_74], %265 {strides = array<i32>} : memref<8x8x128xf32, #tpu.memory_space<vmem>>, vector<1x8x128xf32>,
    %c8_i32 = arith.constant 8 : i32
    %c0_75 = arith.constant 0 : index
    %c0_76 = arith.constant 0 : index
    %c0_77 = arith.constant 0 : index
    %266 = vector.load %arg14[%c0_75, %c0_76, %c0_77] : memref<2x8x128xf32, #tpu.memory_space<vmem>>, vector<1x8x128xf32>
    %267 = vector.shape_cast %266 : vector<1x8x128xf32> to vector<8x128xf32>
    %268 = vector.shape_cast %261 : vector<8x128xf32> to vector<1x8x128xf32>
    tpu.vector_store %arg14[%c0_75, %c0_76, %c0_77], %268 {strides = array<i32>} : memref<2x8x128xf32, #tpu.memory_space<vmem>>, vector<1x8x128xf32>,
    %c0_78 = arith.constant 0 : index
    %c0_79 = arith.constant 0 : index
    %269 = vector.load %arg7[%c0_78, %c0_79] : memref<128x384xbf16, #tpu.memory_space<vmem>>, vector<128x384xbf16>
    %c0_80 = arith.constant 0 : index
    %c0_81 = arith.constant 0 : index
    %270 = vector.load %arg8[%c0_80, %c0_81] : memref<128x384xbf16, #tpu.memory_space<vmem>>, vector<128x384xbf16>
    %c0_82 = arith.constant 0 : index
    %c0_83 = arith.constant 0 : index
    %271 = vector.load %arg9[%c0_82, %c0_83] : memref<1x384xf32, #tpu.memory_space<vmem>>, vector<1x384xf32>
    %c0_84 = arith.constant 0 : index
    %c0_85 = arith.constant 0 : index
    %272 = vector.load %arg10[%c0_84, %c0_85] : memref<1x128xf32, #tpu.memory_space<vmem>>, vector<1x128xf32>
    %c0_86 = arith.constant 0 : index
    %c0_87 = arith.constant 0 : index
    %c0_88 = arith.constant 0 : index
    %273 = vector.load %arg15[%c0_86, %c0_87, %c0_88] : memref<8x8x128xf32, #tpu.memory_space<vmem>>, vector<8x8x128xf32>
    %274 = vector.shape_cast %273 : vector<8x8x128xf32> to vector<64x128xf32>
    %275 = arith.truncf %274 : vector<64x128xf32> to vector<64x128xbf16>
    %cst_89 = arith.constant dense<0.000000e+00> : vector<64x384xf32>
    %276 = tpu.matmul %275, %269, %cst_89 {dimension_numbers = #tpu.dot_dimension_numbers<[1], [0], [0], [1], [0, 0, 1, 1], [], []>} : vector<64x128xbf16>, vector<128x384xbf16>, vector<64x384xf32> -> vector<64x384xf32>
    %277 = vector.broadcast %271 : vector<1x384xf32> to vector<64x384xf32>
    %278 = arith.addf %276, %277 : vector<64x384xf32>
    %279 = vector.shape_cast %278 : vector<64x384xf32> to vector<8x8x384xf32>
    %c0_90 = arith.constant 0 : index
    %c0_91 = arith.constant 0 : index
    %c0_92 = arith.constant 0 : index
    %280 = vector.load %arg16[%c0_90, %c0_91, %c0_92] : memref<8x8x384xf32, #tpu.memory_space<vmem>>, vector<8x8x384xf32>
    tpu.vector_store %arg16[%c0_90, %c0_91, %c0_92], %279 {strides = array<i32>} : memref<8x8x384xf32, #tpu.memory_space<vmem>>, vector<8x8x384xf32>,
    %c1 = arith.constant 1 : index
    %c0_93 = arith.constant 0 : index
    %c0_94 = arith.constant 0 : index
    %281 = vector.load %arg14[%c1, %c0_93, %c0_94] : memref<2x8x128xf32, #tpu.memory_space<vmem>>, vector<1x8x128xf32>
    %282 = vector.shape_cast %281 : vector<1x8x128xf32> to vector<8x128xf32>
    %c0_i32_95 = arith.constant 0 : i32
    %283 = arith.index_cast %c0_i32_95 : i32 to index
    %c0_96 = arith.constant 0 : index
    %c0_97 = arith.constant 0 : index
    %284 = vector.load %arg16[%283, %c0_96, %c0_97] : memref<8x8x384xf32, #tpu.memory_space<vmem>>, vector<1x8x384xf32>
    %285 = vector.shape_cast %284 : vector<1x8x384xf32> to vector<8x384xf32>
    %286 = arith.truncf %282 : vector<8x128xf32> to vector<8x128xbf16>
    %cst_98 = arith.constant dense<0.000000e+00> : vector<8x384xf32>
    %287 = tpu.matmul %286, %270, %cst_98 {dimension_numbers = #tpu.dot_dimension_numbers<[1], [0], [0], [1], [0, 0, 1, 1], [], []>} : vector<8x128xbf16>, vector<128x384xbf16>, vector<8x384xf32> -> vector<8x384xf32>
    %288 = vector.extract_strided_slice %285 {offsets = [0, 0], sizes = [8, 256], strides = [1, 1]} : vector<8x384xf32> to vector<8x256xf32>
    %289 = vector.extract_strided_slice %287 {offsets = [0, 0], sizes = [8, 256], strides = [1, 1]} : vector<8x384xf32> to vector<8x256xf32>
    %290 = arith.addf %288, %289 : vector<8x256xf32>
    %291 = arith.negf %290 : vector<8x256xf32>
    %292 = math.exp %291 : vector<8x256xf32>
    %cst_99 = arith.constant 1.000000e+00 : f32
    %293 = vector.broadcast %cst_99 : f32 to vector<8x256xf32>
    %294 = arith.addf %293, %292 : vector<8x256xf32>
    %295 = arith.divf %293, %294 : vector<8x256xf32>
    %296 = vector.extract_strided_slice %295 {offsets = [0, 0], sizes = [8, 128], strides = [1, 1]} : vector<8x256xf32> to vector<8x128xf32>
    %297 = vector.extract_strided_slice %295 {offsets = [0, 128], sizes = [8, 128], strides = [1, 1]} : vector<8x256xf32> to vector<8x128xf32>
    %298 = vector.extract_strided_slice %285 {offsets = [0, 256], sizes = [8, 128], strides = [1, 1]} : vector<8x384xf32> to vector<8x128xf32>
    %299 = vector.extract_strided_slice %287 {offsets = [0, 256], sizes = [8, 128], strides = [1, 1]} : vector<8x384xf32> to vector<8x128xf32>
    %300 = vector.broadcast %272 : vector<1x128xf32> to vector<8x128xf32>
    %301 = arith.addf %299, %300 : vector<8x128xf32>
    %302 = arith.mulf %296, %301 : vector<8x128xf32>
    %303 = arith.addf %298, %302 : vector<8x128xf32>
    %304 = math.tanh %303 : vector<8x128xf32>
    %cst_100 = arith.constant 1.000000e+00 : f32
    %305 = vector.broadcast %cst_100 : f32 to vector<8x128xf32>
    %306 = arith.subf %305, %297 : vector<8x128xf32>
    %307 = arith.mulf %306, %304 : vector<8x128xf32>
    %308 = arith.mulf %297, %282 : vector<8x128xf32>
    %309 = arith.addf %307, %308 : vector<8x128xf32>
    %310 = arith.index_cast %c0_i32_95 : i32 to index
    %c0_101 = arith.constant 0 : index
    %c0_102 = arith.constant 0 : index
    %311 = vector.load %arg15[%310, %c0_101, %c0_102] : memref<8x8x128xf32, #tpu.memory_space<vmem>>, vector<1x8x128xf32>
    %312 = vector.shape_cast %311 : vector<1x8x128xf32> to vector<8x128xf32>
    %313 = vector.shape_cast %309 : vector<8x128xf32> to vector<1x8x128xf32>
    tpu.vector_store %arg15[%310, %c0_101, %c0_102], %313 {strides = array<i32>} : memref<8x8x128xf32, #tpu.memory_space<vmem>>, vector<1x8x128xf32>,
    %c1_i32_103 = arith.constant 1 : i32
    %314 = arith.index_cast %c1_i32_103 : i32 to index
    %c0_104 = arith.constant 0 : index
    %c0_105 = arith.constant 0 : index
    %315 = vector.load %arg16[%314, %c0_104, %c0_105] : memref<8x8x384xf32, #tpu.memory_space<vmem>>, vector<1x8x384xf32>
    %316 = vector.shape_cast %315 : vector<1x8x384xf32> to vector<8x384xf32>
    %317 = arith.truncf %309 : vector<8x128xf32> to vector<8x128xbf16>
    %cst_106 = arith.constant dense<0.000000e+00> : vector<8x384xf32>
    %318 = tpu.matmul %317, %270, %cst_106 {dimension_numbers = #tpu.dot_dimension_numbers<[1], [0], [0], [1], [0, 0, 1, 1], [], []>} : vector<8x128xbf16>, vector<128x384xbf16>, vector<8x384xf32> -> vector<8x384xf32>
    %319 = vector.extract_strided_slice %316 {offsets = [0, 0], sizes = [8, 256], strides = [1, 1]} : vector<8x384xf32> to vector<8x256xf32>
    %320 = vector.extract_strided_slice %318 {offsets = [0, 0], sizes = [8, 256], strides = [1, 1]} : vector<8x384xf32> to vector<8x256xf32>
    %321 = arith.addf %319, %320 : vector<8x256xf32>
    %322 = arith.negf %321 : vector<8x256xf32>
    %323 = math.exp %322 : vector<8x256xf32>
    %cst_107 = arith.constant 1.000000e+00 : f32
    %324 = vector.broadcast %cst_107 : f32 to vector<8x256xf32>
    %325 = arith.addf %324, %323 : vector<8x256xf32>
    %326 = arith.divf %324, %325 : vector<8x256xf32>
    %327 = vector.extract_strided_slice %326 {offsets = [0, 0], sizes = [8, 128], strides = [1, 1]} : vector<8x256xf32> to vector<8x128xf32>
    %328 = vector.extract_strided_slice %326 {offsets = [0, 128], sizes = [8, 128], strides = [1, 1]} : vector<8x256xf32> to vector<8x128xf32>
    %329 = vector.extract_strided_slice %316 {offsets = [0, 256], sizes = [8, 128], strides = [1, 1]} : vector<8x384xf32> to vector<8x128xf32>
    %330 = vector.extract_strided_slice %318 {offsets = [0, 256], sizes = [8, 128], strides = [1, 1]} : vector<8x384xf32> to vector<8x128xf32>
    %331 = vector.broadcast %272 : vector<1x128xf32> to vector<8x128xf32>
    %332 = arith.addf %330, %331 : vector<8x128xf32>
    %333 = arith.mulf %327, %332 : vector<8x128xf32>
    %334 = arith.addf %329, %333 : vector<8x128xf32>
    %335 = math.tanh %334 : vector<8x128xf32>
    %cst_108 = arith.constant 1.000000e+00 : f32
    %336 = vector.broadcast %cst_108 : f32 to vector<8x128xf32>
    %337 = arith.subf %336, %328 : vector<8x128xf32>
    %338 = arith.mulf %337, %335 : vector<8x128xf32>
    %339 = arith.mulf %328, %309 : vector<8x128xf32>
    %340 = arith.addf %338, %339 : vector<8x128xf32>
    %341 = arith.index_cast %c1_i32_103 : i32 to index
    %c0_109 = arith.constant 0 : index
    %c0_110 = arith.constant 0 : index
    %342 = vector.load %arg15[%341, %c0_109, %c0_110] : memref<8x8x128xf32, #tpu.memory_space<vmem>>, vector<1x8x128xf32>
    %343 = vector.shape_cast %342 : vector<1x8x128xf32> to vector<8x128xf32>
    %344 = vector.shape_cast %340 : vector<8x128xf32> to vector<1x8x128xf32>
    tpu.vector_store %arg15[%341, %c0_109, %c0_110], %344 {strides = array<i32>} : memref<8x8x128xf32, #tpu.memory_space<vmem>>, vector<1x8x128xf32>,
    %c2_i32_111 = arith.constant 2 : i32
    %345 = arith.index_cast %c2_i32_111 : i32 to index
    %c0_112 = arith.constant 0 : index
    %c0_113 = arith.constant 0 : index
    %346 = vector.load %arg16[%345, %c0_112, %c0_113] : memref<8x8x384xf32, #tpu.memory_space<vmem>>, vector<1x8x384xf32>
    %347 = vector.shape_cast %346 : vector<1x8x384xf32> to vector<8x384xf32>
    %348 = arith.truncf %340 : vector<8x128xf32> to vector<8x128xbf16>
    %cst_114 = arith.constant dense<0.000000e+00> : vector<8x384xf32>
    %349 = tpu.matmul %348, %270, %cst_114 {dimension_numbers = #tpu.dot_dimension_numbers<[1], [0], [0], [1], [0, 0, 1, 1], [], []>} : vector<8x128xbf16>, vector<128x384xbf16>, vector<8x384xf32> -> vector<8x384xf32>
    %350 = vector.extract_strided_slice %347 {offsets = [0, 0], sizes = [8, 256], strides = [1, 1]} : vector<8x384xf32> to vector<8x256xf32>
    %351 = vector.extract_strided_slice %349 {offsets = [0, 0], sizes = [8, 256], strides = [1, 1]} : vector<8x384xf32> to vector<8x256xf32>
    %352 = arith.addf %350, %351 : vector<8x256xf32>
    %353 = arith.negf %352 : vector<8x256xf32>
    %354 = math.exp %353 : vector<8x256xf32>
    %cst_115 = arith.constant 1.000000e+00 : f32
    %355 = vector.broadcast %cst_115 : f32 to vector<8x256xf32>
    %356 = arith.addf %355, %354 : vector<8x256xf32>
    %357 = arith.divf %355, %356 : vector<8x256xf32>
    %358 = vector.extract_strided_slice %357 {offsets = [0, 0], sizes = [8, 128], strides = [1, 1]} : vector<8x256xf32> to vector<8x128xf32>
    %359 = vector.extract_strided_slice %357 {offsets = [0, 128], sizes = [8, 128], strides = [1, 1]} : vector<8x256xf32> to vector<8x128xf32>
    %360 = vector.extract_strided_slice %347 {offsets = [0, 256], sizes = [8, 128], strides = [1, 1]} : vector<8x384xf32> to vector<8x128xf32>
    %361 = vector.extract_strided_slice %349 {offsets = [0, 256], sizes = [8, 128], strides = [1, 1]} : vector<8x384xf32> to vector<8x128xf32>
    %362 = vector.broadcast %272 : vector<1x128xf32> to vector<8x128xf32>
    %363 = arith.addf %361, %362 : vector<8x128xf32>
    %364 = arith.mulf %358, %363 : vector<8x128xf32>
    %365 = arith.addf %360, %364 : vector<8x128xf32>
    %366 = math.tanh %365 : vector<8x128xf32>
    %cst_116 = arith.constant 1.000000e+00 : f32
    %367 = vector.broadcast %cst_116 : f32 to vector<8x128xf32>
    %368 = arith.subf %367, %359 : vector<8x128xf32>
    %369 = arith.mulf %368, %366 : vector<8x128xf32>
    %370 = arith.mulf %359, %340 : vector<8x128xf32>
    %371 = arith.addf %369, %370 : vector<8x128xf32>
    %372 = arith.index_cast %c2_i32_111 : i32 to index
    %c0_117 = arith.constant 0 : index
    %c0_118 = arith.constant 0 : index
    %373 = vector.load %arg15[%372, %c0_117, %c0_118] : memref<8x8x128xf32, #tpu.memory_space<vmem>>, vector<1x8x128xf32>
    %374 = vector.shape_cast %373 : vector<1x8x128xf32> to vector<8x128xf32>
    %375 = vector.shape_cast %371 : vector<8x128xf32> to vector<1x8x128xf32>
    tpu.vector_store %arg15[%372, %c0_117, %c0_118], %375 {strides = array<i32>} : memref<8x8x128xf32, #tpu.memory_space<vmem>>, vector<1x8x128xf32>,
    %c3_i32_119 = arith.constant 3 : i32
    %376 = arith.index_cast %c3_i32_119 : i32 to index
    %c0_120 = arith.constant 0 : index
    %c0_121 = arith.constant 0 : index
    %377 = vector.load %arg16[%376, %c0_120, %c0_121] : memref<8x8x384xf32, #tpu.memory_space<vmem>>, vector<1x8x384xf32>
    %378 = vector.shape_cast %377 : vector<1x8x384xf32> to vector<8x384xf32>
    %379 = arith.truncf %371 : vector<8x128xf32> to vector<8x128xbf16>
    %cst_122 = arith.constant dense<0.000000e+00> : vector<8x384xf32>
    %380 = tpu.matmul %379, %270, %cst_122 {dimension_numbers = #tpu.dot_dimension_numbers<[1], [0], [0], [1], [0, 0, 1, 1], [], []>} : vector<8x128xbf16>, vector<128x384xbf16>, vector<8x384xf32> -> vector<8x384xf32>
    %381 = vector.extract_strided_slice %378 {offsets = [0, 0], sizes = [8, 256], strides = [1, 1]} : vector<8x384xf32> to vector<8x256xf32>
    %382 = vector.extract_strided_slice %380 {offsets = [0, 0], sizes = [8, 256], strides = [1, 1]} : vector<8x384xf32> to vector<8x256xf32>
    %383 = arith.addf %381, %382 : vector<8x256xf32>
    %384 = arith.negf %383 : vector<8x256xf32>
    %385 = math.exp %384 : vector<8x256xf32>
    %cst_123 = arith.constant 1.000000e+00 : f32
    %386 = vector.broadcast %cst_123 : f32 to vector<8x256xf32>
    %387 = arith.addf %386, %385 : vector<8x256xf32>
    %388 = arith.divf %386, %387 : vector<8x256xf32>
    %389 = vector.extract_strided_slice %388 {offsets = [0, 0], sizes = [8, 128], strides = [1, 1]} : vector<8x256xf32> to vector<8x128xf32>
    %390 = vector.extract_strided_slice %388 {offsets = [0, 128], sizes = [8, 128], strides = [1, 1]} : vector<8x256xf32> to vector<8x128xf32>
    %391 = vector.extract_strided_slice %378 {offsets = [0, 256], sizes = [8, 128], strides = [1, 1]} : vector<8x384xf32> to vector<8x128xf32>
    %392 = vector.extract_strided_slice %380 {offsets = [0, 256], sizes = [8, 128], strides = [1, 1]} : vector<8x384xf32> to vector<8x128xf32>
    %393 = vector.broadcast %272 : vector<1x128xf32> to vector<8x128xf32>
    %394 = arith.addf %392, %393 : vector<8x128xf32>
    %395 = arith.mulf %389, %394 : vector<8x128xf32>
    %396 = arith.addf %391, %395 : vector<8x128xf32>
    %397 = math.tanh %396 : vector<8x128xf32>
    %cst_124 = arith.constant 1.000000e+00 : f32
    %398 = vector.broadcast %cst_124 : f32 to vector<8x128xf32>
    %399 = arith.subf %398, %390 : vector<8x128xf32>
    %400 = arith.mulf %399, %397 : vector<8x128xf32>
    %401 = arith.mulf %390, %371 : vector<8x128xf32>
    %402 = arith.addf %400, %401 : vector<8x128xf32>
    %403 = arith.index_cast %c3_i32_119 : i32 to index
    %c0_125 = arith.constant 0 : index
    %c0_126 = arith.constant 0 : index
    %404 = vector.load %arg15[%403, %c0_125, %c0_126] : memref<8x8x128xf32, #tpu.memory_space<vmem>>, vector<1x8x128xf32>
    %405 = vector.shape_cast %404 : vector<1x8x128xf32> to vector<8x128xf32>
    %406 = vector.shape_cast %402 : vector<8x128xf32> to vector<1x8x128xf32>
    tpu.vector_store %arg15[%403, %c0_125, %c0_126], %406 {strides = array<i32>} : memref<8x8x128xf32, #tpu.memory_space<vmem>>, vector<1x8x128xf32>,
    %c4_i32_127 = arith.constant 4 : i32
    %407 = arith.index_cast %c4_i32_127 : i32 to index
    %c0_128 = arith.constant 0 : index
    %c0_129 = arith.constant 0 : index
    %408 = vector.load %arg16[%407, %c0_128, %c0_129] : memref<8x8x384xf32, #tpu.memory_space<vmem>>, vector<1x8x384xf32>
    %409 = vector.shape_cast %408 : vector<1x8x384xf32> to vector<8x384xf32>
    %410 = arith.truncf %402 : vector<8x128xf32> to vector<8x128xbf16>
    %cst_130 = arith.constant dense<0.000000e+00> : vector<8x384xf32>
    %411 = tpu.matmul %410, %270, %cst_130 {dimension_numbers = #tpu.dot_dimension_numbers<[1], [0], [0], [1], [0, 0, 1, 1], [], []>} : vector<8x128xbf16>, vector<128x384xbf16>, vector<8x384xf32> -> vector<8x384xf32>
    %412 = vector.extract_strided_slice %409 {offsets = [0, 0], sizes = [8, 256], strides = [1, 1]} : vector<8x384xf32> to vector<8x256xf32>
    %413 = vector.extract_strided_slice %411 {offsets = [0, 0], sizes = [8, 256], strides = [1, 1]} : vector<8x384xf32> to vector<8x256xf32>
    %414 = arith.addf %412, %413 : vector<8x256xf32>
    %415 = arith.negf %414 : vector<8x256xf32>
    %416 = math.exp %415 : vector<8x256xf32>
    %cst_131 = arith.constant 1.000000e+00 : f32
    %417 = vector.broadcast %cst_131 : f32 to vector<8x256xf32>
    %418 = arith.addf %417, %416 : vector<8x256xf32>
    %419 = arith.divf %417, %418 : vector<8x256xf32>
    %420 = vector.extract_strided_slice %419 {offsets = [0, 0], sizes = [8, 128], strides = [1, 1]} : vector<8x256xf32> to vector<8x128xf32>
    %421 = vector.extract_strided_slice %419 {offsets = [0, 128], sizes = [8, 128], strides = [1, 1]} : vector<8x256xf32> to vector<8x128xf32>
    %422 = vector.extract_strided_slice %409 {offsets = [0, 256], sizes = [8, 128], strides = [1, 1]} : vector<8x384xf32> to vector<8x128xf32>
    %423 = vector.extract_strided_slice %411 {offsets = [0, 256], sizes = [8, 128], strides = [1, 1]} : vector<8x384xf32> to vector<8x128xf32>
    %424 = vector.broadcast %272 : vector<1x128xf32> to vector<8x128xf32>
    %425 = arith.addf %423, %424 : vector<8x128xf32>
    %426 = arith.mulf %420, %425 : vector<8x128xf32>
    %427 = arith.addf %422, %426 : vector<8x128xf32>
    %428 = math.tanh %427 : vector<8x128xf32>
    %cst_132 = arith.constant 1.000000e+00 : f32
    %429 = vector.broadcast %cst_132 : f32 to vector<8x128xf32>
    %430 = arith.subf %429, %421 : vector<8x128xf32>
    %431 = arith.mulf %430, %428 : vector<8x128xf32>
    %432 = arith.mulf %421, %402 : vector<8x128xf32>
    %433 = arith.addf %431, %432 : vector<8x128xf32>
    %434 = arith.index_cast %c4_i32_127 : i32 to index
    %c0_133 = arith.constant 0 : index
    %c0_134 = arith.constant 0 : index
    %435 = vector.load %arg15[%434, %c0_133, %c0_134] : memref<8x8x128xf32, #tpu.memory_space<vmem>>, vector<1x8x128xf32>
    %436 = vector.shape_cast %435 : vector<1x8x128xf32> to vector<8x128xf32>
    %437 = vector.shape_cast %433 : vector<8x128xf32> to vector<1x8x128xf32>
    tpu.vector_store %arg15[%434, %c0_133, %c0_134], %437 {strides = array<i32>} : memref<8x8x128xf32, #tpu.memory_space<vmem>>, vector<1x8x128xf32>,
    %c5_i32_135 = arith.constant 5 : i32
    %438 = arith.index_cast %c5_i32_135 : i32 to index
    %c0_136 = arith.constant 0 : index
    %c0_137 = arith.constant 0 : index
    %439 = vector.load %arg16[%438, %c0_136, %c0_137] : memref<8x8x384xf32, #tpu.memory_space<vmem>>, vector<1x8x384xf32>
    %440 = vector.shape_cast %439 : vector<1x8x384xf32> to vector<8x384xf32>
    %441 = arith.truncf %433 : vector<8x128xf32> to vector<8x128xbf16>
    %cst_138 = arith.constant dense<0.000000e+00> : vector<8x384xf32>
    %442 = tpu.matmul %441, %270, %cst_138 {dimension_numbers = #tpu.dot_dimension_numbers<[1], [0], [0], [1], [0, 0, 1, 1], [], []>} : vector<8x128xbf16>, vector<128x384xbf16>, vector<8x384xf32> -> vector<8x384xf32>
    %443 = vector.extract_strided_slice %440 {offsets = [0, 0], sizes = [8, 256], strides = [1, 1]} : vector<8x384xf32> to vector<8x256xf32>
    %444 = vector.extract_strided_slice %442 {offsets = [0, 0], sizes = [8, 256], strides = [1, 1]} : vector<8x384xf32> to vector<8x256xf32>
    %445 = arith.addf %443, %444 : vector<8x256xf32>
    %446 = arith.negf %445 : vector<8x256xf32>
    %447 = math.exp %446 : vector<8x256xf32>
    %cst_139 = arith.constant 1.000000e+00 : f32
    %448 = vector.broadcast %cst_139 : f32 to vector<8x256xf32>
    %449 = arith.addf %448, %447 : vector<8x256xf32>
    %450 = arith.divf %448, %449 : vector<8x256xf32>
    %451 = vector.extract_strided_slice %450 {offsets = [0, 0], sizes = [8, 128], strides = [1, 1]} : vector<8x256xf32> to vector<8x128xf32>
    %452 = vector.extract_strided_slice %450 {offsets = [0, 128], sizes = [8, 128], strides = [1, 1]} : vector<8x256xf32> to vector<8x128xf32>
    %453 = vector.extract_strided_slice %440 {offsets = [0, 256], sizes = [8, 128], strides = [1, 1]} : vector<8x384xf32> to vector<8x128xf32>
    %454 = vector.extract_strided_slice %442 {offsets = [0, 256], sizes = [8, 128], strides = [1, 1]} : vector<8x384xf32> to vector<8x128xf32>
    %455 = vector.broadcast %272 : vector<1x128xf32> to vector<8x128xf32>
    %456 = arith.addf %454, %455 : vector<8x128xf32>
    %457 = arith.mulf %451, %456 : vector<8x128xf32>
    %458 = arith.addf %453, %457 : vector<8x128xf32>
    %459 = math.tanh %458 : vector<8x128xf32>
    %cst_140 = arith.constant 1.000000e+00 : f32
    %460 = vector.broadcast %cst_140 : f32 to vector<8x128xf32>
    %461 = arith.subf %460, %452 : vector<8x128xf32>
    %462 = arith.mulf %461, %459 : vector<8x128xf32>
    %463 = arith.mulf %452, %433 : vector<8x128xf32>
    %464 = arith.addf %462, %463 : vector<8x128xf32>
    %465 = arith.index_cast %c5_i32_135 : i32 to index
    %c0_141 = arith.constant 0 : index
    %c0_142 = arith.constant 0 : index
    %466 = vector.load %arg15[%465, %c0_141, %c0_142] : memref<8x8x128xf32, #tpu.memory_space<vmem>>, vector<1x8x128xf32>
    %467 = vector.shape_cast %466 : vector<1x8x128xf32> to vector<8x128xf32>
    %468 = vector.shape_cast %464 : vector<8x128xf32> to vector<1x8x128xf32>
    tpu.vector_store %arg15[%465, %c0_141, %c0_142], %468 {strides = array<i32>} : memref<8x8x128xf32, #tpu.memory_space<vmem>>, vector<1x8x128xf32>,
    %c6_i32_143 = arith.constant 6 : i32
    %469 = arith.index_cast %c6_i32_143 : i32 to index
    %c0_144 = arith.constant 0 : index
    %c0_145 = arith.constant 0 : index
    %470 = vector.load %arg16[%469, %c0_144, %c0_145] : memref<8x8x384xf32, #tpu.memory_space<vmem>>, vector<1x8x384xf32>
    %471 = vector.shape_cast %470 : vector<1x8x384xf32> to vector<8x384xf32>
    %472 = arith.truncf %464 : vector<8x128xf32> to vector<8x128xbf16>
    %cst_146 = arith.constant dense<0.000000e+00> : vector<8x384xf32>
    %473 = tpu.matmul %472, %270, %cst_146 {dimension_numbers = #tpu.dot_dimension_numbers<[1], [0], [0], [1], [0, 0, 1, 1], [], []>} : vector<8x128xbf16>, vector<128x384xbf16>, vector<8x384xf32> -> vector<8x384xf32>
    %474 = vector.extract_strided_slice %471 {offsets = [0, 0], sizes = [8, 256], strides = [1, 1]} : vector<8x384xf32> to vector<8x256xf32>
    %475 = vector.extract_strided_slice %473 {offsets = [0, 0], sizes = [8, 256], strides = [1, 1]} : vector<8x384xf32> to vector<8x256xf32>
    %476 = arith.addf %474, %475 : vector<8x256xf32>
    %477 = arith.negf %476 : vector<8x256xf32>
    %478 = math.exp %477 : vector<8x256xf32>
    %cst_147 = arith.constant 1.000000e+00 : f32
    %479 = vector.broadcast %cst_147 : f32 to vector<8x256xf32>
    %480 = arith.addf %479, %478 : vector<8x256xf32>
    %481 = arith.divf %479, %480 : vector<8x256xf32>
    %482 = vector.extract_strided_slice %481 {offsets = [0, 0], sizes = [8, 128], strides = [1, 1]} : vector<8x256xf32> to vector<8x128xf32>
    %483 = vector.extract_strided_slice %481 {offsets = [0, 128], sizes = [8, 128], strides = [1, 1]} : vector<8x256xf32> to vector<8x128xf32>
    %484 = vector.extract_strided_slice %471 {offsets = [0, 256], sizes = [8, 128], strides = [1, 1]} : vector<8x384xf32> to vector<8x128xf32>
    %485 = vector.extract_strided_slice %473 {offsets = [0, 256], sizes = [8, 128], strides = [1, 1]} : vector<8x384xf32> to vector<8x128xf32>
    %486 = vector.broadcast %272 : vector<1x128xf32> to vector<8x128xf32>
    %487 = arith.addf %485, %486 : vector<8x128xf32>
    %488 = arith.mulf %482, %487 : vector<8x128xf32>
    %489 = arith.addf %484, %488 : vector<8x128xf32>
    %490 = math.tanh %489 : vector<8x128xf32>
    %cst_148 = arith.constant 1.000000e+00 : f32
    %491 = vector.broadcast %cst_148 : f32 to vector<8x128xf32>
    %492 = arith.subf %491, %483 : vector<8x128xf32>
    %493 = arith.mulf %492, %490 : vector<8x128xf32>
    %494 = arith.mulf %483, %464 : vector<8x128xf32>
    %495 = arith.addf %493, %494 : vector<8x128xf32>
    %496 = arith.index_cast %c6_i32_143 : i32 to index
    %c0_149 = arith.constant 0 : index
    %c0_150 = arith.constant 0 : index
    %497 = vector.load %arg15[%496, %c0_149, %c0_150] : memref<8x8x128xf32, #tpu.memory_space<vmem>>, vector<1x8x128xf32>
    %498 = vector.shape_cast %497 : vector<1x8x128xf32> to vector<8x128xf32>
    %499 = vector.shape_cast %495 : vector<8x128xf32> to vector<1x8x128xf32>
    tpu.vector_store %arg15[%496, %c0_149, %c0_150], %499 {strides = array<i32>} : memref<8x8x128xf32, #tpu.memory_space<vmem>>, vector<1x8x128xf32>,
    %c7_i32_151 = arith.constant 7 : i32
    %500 = arith.index_cast %c7_i32_151 : i32 to index
    %c0_152 = arith.constant 0 : index
    %c0_153 = arith.constant 0 : index
    %501 = vector.load %arg16[%500, %c0_152, %c0_153] : memref<8x8x384xf32, #tpu.memory_space<vmem>>, vector<1x8x384xf32>
    %502 = vector.shape_cast %501 : vector<1x8x384xf32> to vector<8x384xf32>
    %503 = arith.truncf %495 : vector<8x128xf32> to vector<8x128xbf16>
    %cst_154 = arith.constant dense<0.000000e+00> : vector<8x384xf32>
    %504 = tpu.matmul %503, %270, %cst_154 {dimension_numbers = #tpu.dot_dimension_numbers<[1], [0], [0], [1], [0, 0, 1, 1], [], []>} : vector<8x128xbf16>, vector<128x384xbf16>, vector<8x384xf32> -> vector<8x384xf32>
    %505 = vector.extract_strided_slice %502 {offsets = [0, 0], sizes = [8, 256], strides = [1, 1]} : vector<8x384xf32> to vector<8x256xf32>
    %506 = vector.extract_strided_slice %504 {offsets = [0, 0], sizes = [8, 256], strides = [1, 1]} : vector<8x384xf32> to vector<8x256xf32>
    %507 = arith.addf %505, %506 : vector<8x256xf32>
    %508 = arith.negf %507 : vector<8x256xf32>
    %509 = math.exp %508 : vector<8x256xf32>
    %cst_155 = arith.constant 1.000000e+00 : f32
    %510 = vector.broadcast %cst_155 : f32 to vector<8x256xf32>
    %511 = arith.addf %510, %509 : vector<8x256xf32>
    %512 = arith.divf %510, %511 : vector<8x256xf32>
    %513 = vector.extract_strided_slice %512 {offsets = [0, 0], sizes = [8, 128], strides = [1, 1]} : vector<8x256xf32> to vector<8x128xf32>
    %514 = vector.extract_strided_slice %512 {offsets = [0, 128], sizes = [8, 128], strides = [1, 1]} : vector<8x256xf32> to vector<8x128xf32>
    %515 = vector.extract_strided_slice %502 {offsets = [0, 256], sizes = [8, 128], strides = [1, 1]} : vector<8x384xf32> to vector<8x128xf32>
    %516 = vector.extract_strided_slice %504 {offsets = [0, 256], sizes = [8, 128], strides = [1, 1]} : vector<8x384xf32> to vector<8x128xf32>
    %517 = vector.broadcast %272 : vector<1x128xf32> to vector<8x128xf32>
    %518 = arith.addf %516, %517 : vector<8x128xf32>
    %519 = arith.mulf %513, %518 : vector<8x128xf32>
    %520 = arith.addf %515, %519 : vector<8x128xf32>
    %521 = math.tanh %520 : vector<8x128xf32>
    %cst_156 = arith.constant 1.000000e+00 : f32
    %522 = vector.broadcast %cst_156 : f32 to vector<8x128xf32>
    %523 = arith.subf %522, %514 : vector<8x128xf32>
    %524 = arith.mulf %523, %521 : vector<8x128xf32>
    %525 = arith.mulf %514, %495 : vector<8x128xf32>
    %526 = arith.addf %524, %525 : vector<8x128xf32>
    %527 = arith.index_cast %c7_i32_151 : i32 to index
    %c0_157 = arith.constant 0 : index
    %c0_158 = arith.constant 0 : index
    %528 = vector.load %arg15[%527, %c0_157, %c0_158] : memref<8x8x128xf32, #tpu.memory_space<vmem>>, vector<1x8x128xf32>
    %529 = vector.shape_cast %528 : vector<1x8x128xf32> to vector<8x128xf32>
    %530 = vector.shape_cast %526 : vector<8x128xf32> to vector<1x8x128xf32>
    tpu.vector_store %arg15[%527, %c0_157, %c0_158], %530 {strides = array<i32>} : memref<8x8x128xf32, #tpu.memory_space<vmem>>, vector<1x8x128xf32>,
    %c8_i32_159 = arith.constant 8 : i32
    %c1_160 = arith.constant 1 : index
    %c0_161 = arith.constant 0 : index
    %c0_162 = arith.constant 0 : index
    %531 = vector.load %arg14[%c1_160, %c0_161, %c0_162] : memref<2x8x128xf32, #tpu.memory_space<vmem>>, vector<1x8x128xf32>
    %532 = vector.shape_cast %531 : vector<1x8x128xf32> to vector<8x128xf32>
    %533 = vector.shape_cast %526 : vector<8x128xf32> to vector<1x8x128xf32>
    tpu.vector_store %arg14[%c1_160, %c0_161, %c0_162], %533 {strides = array<i32>} : memref<2x8x128xf32, #tpu.memory_space<vmem>>, vector<1x8x128xf32>,
    %c0_163 = arith.constant 0 : index
    %c0_164 = arith.constant 0 : index
    %534 = vector.load %arg11[%c0_163, %c0_164] : memref<128x128xbf16, #tpu.memory_space<vmem>>, vector<128x128xbf16>
    %c0_165 = arith.constant 0 : index
    %c0_166 = arith.constant 0 : index
    %535 = vector.load %arg12[%c0_165, %c0_166] : memref<1x128xf32, #tpu.memory_space<vmem>>, vector<1x128xf32>
    %c0_167 = arith.constant 0 : index
    %c0_168 = arith.constant 0 : index
    %c0_169 = arith.constant 0 : index
    %536 = vector.load %arg15[%c0_167, %c0_168, %c0_169] : memref<8x8x128xf32, #tpu.memory_space<vmem>>, vector<8x8x128xf32>
    %537 = vector.shape_cast %536 : vector<8x8x128xf32> to vector<64x128xf32>
    %538 = arith.truncf %537 : vector<64x128xf32> to vector<64x128xbf16>
    %cst_170 = arith.constant dense<0.000000e+00> : vector<64x128xf32>
    %539 = tpu.matmul %538, %534, %cst_170 {dimension_numbers = #tpu.dot_dimension_numbers<[1], [0], [0], [1], [0, 0, 1, 1], [], []>} : vector<64x128xbf16>, vector<128x128xbf16>, vector<64x128xf32> -> vector<64x128xf32>
    %540 = vector.broadcast %535 : vector<1x128xf32> to vector<64x128xf32>
    %541 = arith.addf %539, %540 : vector<64x128xf32>
    %542 = arith.negf %541 : vector<64x128xf32>
    %543 = math.exp %542 : vector<64x128xf32>
    %cst_171 = arith.constant 1.000000e+00 : f32
    %544 = vector.broadcast %cst_171 : f32 to vector<64x128xf32>
    %545 = arith.addf %544, %543 : vector<64x128xf32>
    %546 = arith.divf %544, %545 : vector<64x128xf32>
    %547 = vector.shape_cast %546 : vector<64x128xf32> to vector<8x8x128xf32>
    %c0_172 = arith.constant 0 : index
    %c0_173 = arith.constant 0 : index
    %c0_174 = arith.constant 0 : index
    %c0_175 = arith.constant 0 : index
    %548 = vector.load %arg13[%c0_172, %c0_173, %c0_174, %c0_175] : memref<1x8x8x128xf32, #tpu.memory_space<vmem>>, vector<1x8x8x128xf32>
    %549 = vector.shape_cast %548 : vector<1x8x8x128xf32> to vector<8x8x128xf32>
    %550 = vector.shape_cast %547 : vector<8x8x128xf32> to vector<1x8x8x128xf32>
    tpu.vector_store %arg13[%c0_172, %c0_173, %c0_174, %c0_175], %550 {strides = array<i32>} : memref<1x8x8x128xf32, #tpu.memory_space<vmem>>, vector<1x8x8x128xf32>,
    return
  }
  func.func @transform_0(%arg0: i32, %arg1: i32) -> (i32, i32, i32, i32) {
    %c0_i32 = arith.constant 0 : i32
    %c0_i32_0 = arith.constant 0 : i32
    %c0_i32_1 = arith.constant 0 : i32
    return %arg0, %arg1, %c0_i32, %c0_i32_0 : i32, i32, i32, i32
  }
  func.func @transform_1(%arg0: i32, %arg1: i32) -> (i32, i32) {
    %c0_i32 = arith.constant 0 : i32
    %c0_i32_0 = arith.constant 0 : i32
    %c0_i32_1 = arith.constant 0 : i32
    return %c0_i32, %c0_i32_0 : i32, i32
  }
  func.func @transform_2(%arg0: i32, %arg1: i32) -> (i32, i32) {
    %c0_i32 = arith.constant 0 : i32
    %c0_i32_0 = arith.constant 0 : i32
    %c0_i32_1 = arith.constant 0 : i32
    return %c0_i32, %c0_i32_0 : i32, i32
  }
  func.func @transform_3(%arg0: i32, %arg1: i32) -> (i32, i32) {
    %c0_i32 = arith.constant 0 : i32
    %c0_i32_0 = arith.constant 0 : i32
    %c0_i32_1 = arith.constant 0 : i32
    return %c0_i32, %c0_i32_0 : i32, i32
  }
  func.func @transform_4(%arg0: i32, %arg1: i32) -> (i32, i32) {
    %c0_i32 = arith.constant 0 : i32
    %c0_i32_0 = arith.constant 0 : i32
    %c0_i32_1 = arith.constant 0 : i32
    return %c0_i32, %c0_i32_0 : i32, i32
  }
  func.func @transform_5(%arg0: i32, %arg1: i32) -> (i32, i32) {
    %c0_i32 = arith.constant 0 : i32
    %c0_i32_0 = arith.constant 0 : i32
    %c0_i32_1 = arith.constant 0 : i32
    return %c0_i32, %c0_i32_0 : i32, i32
  }
  func.func @transform_6(%arg0: i32, %arg1: i32) -> (i32, i32) {
    %c0_i32 = arith.constant 0 : i32
    %c0_i32_0 = arith.constant 0 : i32
    %c0_i32_1 = arith.constant 0 : i32
    return %c0_i32, %c0_i32_0 : i32, i32
  }
  func.func @transform_7(%arg0: i32, %arg1: i32) -> (i32, i32) {
    %c0_i32 = arith.constant 0 : i32
    %c0_i32_0 = arith.constant 0 : i32
    %c0_i32_1 = arith.constant 0 : i32
    return %c0_i32, %c0_i32_0 : i32, i32
  }
  func.func @transform_8(%arg0: i32, %arg1: i32) -> (i32, i32) {
    %c0_i32 = arith.constant 0 : i32
    %c0_i32_0 = arith.constant 0 : i32
    %c0_i32_1 = arith.constant 0 : i32
    return %c0_i32, %c0_i32_0 : i32, i32
  }
  func.func @transform_9(%arg0: i32, %arg1: i32) -> (i32, i32) {
    %c0_i32 = arith.constant 0 : i32
    %c0_i32_0 = arith.constant 0 : i32
    %c0_i32_1 = arith.constant 0 : i32
    return %c0_i32, %c0_i32_0 : i32, i32
  }
  func.func @transform_10(%arg0: i32, %arg1: i32) -> (i32, i32) {
    %c0_i32 = arith.constant 0 : i32
    %c0_i32_0 = arith.constant 0 : i32
    %c0_i32_1 = arith.constant 0 : i32
    return %c0_i32, %c0_i32_0 : i32, i32
  }
  func.func @transform_11(%arg0: i32, %arg1: i32) -> (i32, i32, i32, i32) {
    %c0_i32 = arith.constant 0 : i32
    %c0_i32_0 = arith.constant 0 : i32
    %c0_i32_1 = arith.constant 0 : i32
    return %arg0, %arg1, %c0_i32, %c0_i32_0 : i32, i32, i32, i32
  }
}

</mosaic_0001>

<llo_original>
// kernel: tpu_custom_call.1
$region0: #{tpu_custom_call.1}
  #allocation0 [shape = 'u32[]', space=smem, size = 0x4, offset = 0x4, fixed_abs, tag = 'smem constant byte address 0x4 - core index']
  #allocation1 [shape = 'u32[144,128]{1,0:T(1,128)}', space=vmem, size = 0x12000, scoped, tag = 'internal scratch']
  #allocation2 [shape = 'f32[2,8,128]{2,1,0:T(8,128)}', space=vmem, size = 0x2000, scoped, tag = 'scratch operand']
  #allocation3 [shape = 'f32[8,8,128]{2,1,0:T(8,128)}', space=vmem, size = 0x8000, scoped, tag = 'scratch operand']
  #allocation4 [shape = 'f32[8,8,384]{2,1,0:T(8,128)}', space=vmem, size = 0x18000, scoped, tag = 'scratch operand']
  %s0 = inlined_call_operand.hbm [shape: f32[1,8,8,8], index: 0, kind: input, shape index: {}]
  %s1 = inlined_call_operand.hbm [shape: bf16[8,384], index: 1, kind: input, shape index: {}]
  %s2 = inlined_call_operand.hbm [shape: bf16[128,384], index: 2, kind: input, shape index: {}]
  %s3 = inlined_call_operand.vmem [shape: f32[1,384], index: 3, kind: input, shape index: {}]
  %s4 = inlined_call_operand.vmem [shape: f32[1,128], index: 4, kind: input, shape index: {}]
  %s5 = inlined_call_operand.hbm [shape: bf16[128,384], index: 5, kind: input, shape index: {}]
  %s6 = inlined_call_operand.hbm [shape: bf16[128,384], index: 6, kind: input, shape index: {}]
  %s7 = inlined_call_operand.vmem [shape: f32[1,384], index: 7, kind: input, shape index: {}]
  %s8 = inlined_call_operand.vmem [shape: f32[1,128], index: 8, kind: input, shape index: {}]
  %s9 = inlined_call_operand.hbm [shape: bf16[128,128], index: 9, kind: input, shape index: {}]
  %s10 = inlined_call_operand.vmem [shape: f32[1,128], index: 10, kind: input, shape index: {}]
  %s11 = inlined_call_operand.hbm [shape: f32[1,8,8,128], index: 11, kind: output, shape index: {}]
  %s12 = sld [smem:[#allocation0]]
  $region82: #{tpu_custom_call.1} parent=0
    _
  %s14 = ssub.s32 1, %s12
  %s15 = scalar_select 0, %s14, %s12
  $region1: #{tpu_custom_call.1} parent=0
    #allocation5 [shape = 'u8[32768]{0}', space=vmem, size = 0x8000, scoped, tag = 'input window, operand 0, single buffered']
    #allocation6 [shape = 's32[1]{0}', space=sflag, size = 0x4, scoped, tag = 'scoped memory for tpu_custom_call.1']
    #allocation7 [shape = 's32[1]{0}', space=sflag, size = 0x4, scoped, tag = 'scoped memory for tpu_custom_call.1']
    #allocation8 [shape = 'u8[6144]{0}', space=vmem, size = 0x1800, scoped, tag = 'input window, operand 1, single buffered']
    #allocation9 [shape = 's32[1]{0}', space=sflag, size = 0x4, scoped, tag = 'scoped memory for tpu_custom_call.1']
    #allocation10 [shape = 'u8[98304]{0}', space=vmem, size = 0x18000, scoped, tag = 'input window, operand 2, single buffered']
    #allocation11 [shape = 'u8[98304]{0}', space=vmem, size = 0x18000, scoped, tag = 'input window, operand 5, single buffered']
    #allocation12 [shape = 's32[1]{0}', space=sflag, size = 0x4, scoped, tag = 'scoped memory for tpu_custom_call.1']
    #allocation13 [shape = 'u8[98304]{0}', space=vmem, size = 0x18000, scoped, tag = 'input window, operand 6, single buffered']
    #allocation14 [shape = 'u8[32768]{0}', space=vmem, size = 0x8000, scoped, tag = 'input window, operand 9, single buffered']
    #allocation15 [shape = 's32[1]{0}', space=sflag, size = 0x4, scoped, tag = 'scoped memory for tpu_custom_call.1']
    #allocation16 [shape = 'u8[32768]{0}', space=vmem, size = 0x8000, scoped, tag = 'output window, operand 0, single buffered']
    %16 = vsyncpa [#allocation6], 0
    %17 = vsyncpa [#allocation9], 0
    %18 = vsyncpa [#allocation12], 0
    %19 = vsyncpa [#allocation15], 0
    %20 = vsyncpa [#allocation7], 0
    // Predicated region
    $region2: #{tpu_custom_call.1} parent=1 // pred_check
      _
    $region3: #{tpu_custom_call.1} parent=1 // pred_check_branch
      %22 = sbr.rel (0) target = $region5
    $region4: #{tpu_custom_call.1} parent=1 // pred_region
      %s24 = ssub.s32 1024, 1024
      %25 = vsyncadd [#allocation6], %s24
      %s26 = sshll.u32 [#allocation5], 4
      %s27 = int_to_ptr.vmem [resolvable:$true] %s26
      %32 = dma.hbm_to_vmem [thread:$0]  %s0, 1024, %s27, [#allocation6], 128, 128, 8
    $region5: #{tpu_custom_call.1} parent=1 // pred_fallthru
      _
    // Predicated region
    $region6: #{tpu_custom_call.1} parent=1 // pred_check
      _
    $region7: #{tpu_custom_call.1} parent=1 // pred_check_branch
      %34 = sbr.rel (0) target = $region9
    $region8: #{tpu_custom_call.1} parent=1 // pred_region
      %s36 = ssub.s32 192, 192
      %37 = vsyncadd [#allocation9], %s36
      %s39 = sshll.u32 [#allocation8], 4
      %s40 = int_to_ptr.vmem [resolvable:$true] %s39
      %42 = dma.hbm_to_vmem [thread:$0]  %s1, 192, %s40, [#allocation9]
    $region9: #{tpu_custom_call.1} parent=1 // pred_fallthru
      _
    // Predicated region
    $region10: #{tpu_custom_call.1} parent=1 // pred_check
      _
    $region11: #{tpu_custom_call.1} parent=1 // pred_check_branch
      %44 = sbr.rel (0) target = $region13
    $region12: #{tpu_custom_call.1} parent=1 // pred_region
      %s46 = ssub.s32 3072, 3072
      %47 = vsyncadd [#allocation9], %s46
      %s48 = sshll.u32 [#allocation10], 4
      %s49 = int_to_ptr.vmem [resolvable:$true] %s48
      %54 = dma.hbm_to_vmem [thread:$0]  %s2, 3072, %s49, [#allocation9], 192, 192, 12
    $region13: #{tpu_custom_call.1} parent=1 // pred_fallthru
      _
    // Predicated region
    $region14: #{tpu_custom_call.1} parent=1 // pred_check
      _
    $region15: #{tpu_custom_call.1} parent=1 // pred_check_branch
      %56 = sbr.rel (0) target = $region17
    $region16: #{tpu_custom_call.1} parent=1 // pred_region
      _
    $region17: #{tpu_custom_call.1} parent=1 // pred_fallthru
      _
    // Predicated region
    $region18: #{tpu_custom_call.1} parent=1 // pred_check
      _
    $region19: #{tpu_custom_call.1} parent=1 // pred_check_branch
      %58 = sbr.rel (0) target = $region21
    $region20: #{tpu_custom_call.1} parent=1 // pred_region
      _
    $region21: #{tpu_custom_call.1} parent=1 // pred_fallthru
      _
    // Predicated region
    $region22: #{tpu_custom_call.1} parent=1 // pred_check
      _
    $region23: #{tpu_custom_call.1} parent=1 // pred_check_branch
      %60 = sbr.rel (0) target = $region25
    $region24: #{tpu_custom_call.1} parent=1 // pred_region
      %s62 = ssub.s32 3072, 3072
      %63 = vsyncadd [#allocation12], %s62
      %s64 = sshll.u32 [#allocation11], 4
      %s65 = int_to_ptr.vmem [resolvable:$true] %s64
      %70 = dma.hbm_to_vmem [thread:$0]  %s5, 3072, %s65, [#allocation12], 192, 192, 12
    $region25: #{tpu_custom_call.1} parent=1 // pred_fallthru
      _
    // Predicated region
    $region26: #{tpu_custom_call.1} parent=1 // pred_check
      _
    $region27: #{tpu_custom_call.1} parent=1 // pred_check_branch
      %72 = sbr.rel (0) target = $region29
    $region28: #{tpu_custom_call.1} parent=1 // pred_region
      %s74 = ssub.s32 3072, 3072
      %75 = vsyncadd [#allocation12], %s74
      %s76 = sshll.u32 [#allocation13], 4
      %s77 = int_to_ptr.vmem [resolvable:$true] %s76
      %82 = dma.hbm_to_vmem [thread:$0]  %s6, 3072, %s77, [#allocation12], 192, 192, 12
    $region29: #{tpu_custom_call.1} parent=1 // pred_fallthru
      _
    // Predicated region
    $region30: #{tpu_custom_call.1} parent=1 // pred_check
      _
    $region31: #{tpu_custom_call.1} parent=1 // pred_check_branch
      %84 = sbr.rel (0) target = $region33
    $region32: #{tpu_custom_call.1} parent=1 // pred_region
      _
    $region33: #{tpu_custom_call.1} parent=1 // pred_fallthru
      _
    // Predicated region
    $region34: #{tpu_custom_call.1} parent=1 // pred_check
      _
    $region35: #{tpu_custom_call.1} parent=1 // pred_check_branch
      %86 = sbr.rel (0) target = $region37
    $region36: #{tpu_custom_call.1} parent=1 // pred_region
      _
    $region37: #{tpu_custom_call.1} parent=1 // pred_fallthru
      _
    // Predicated region
    $region38: #{tpu_custom_call.1} parent=1 // pred_check
      _
    $region39: #{tpu_custom_call.1} parent=1 // pred_check_branch
      %88 = sbr.rel (0) target = $region41
    $region40: #{tpu_custom_call.1} parent=1 // pred_region
      %s90 = ssub.s32 1024, 1024
      %91 = vsyncadd [#allocation15], %s90
      %s92 = sshll.u32 [#allocation14], 4
      %s93 = int_to_ptr.vmem [resolvable:$true] %s92
      %98 = dma.hbm_to_vmem [thread:$0]  %s9, 1024, %s93, [#allocation15], 64, 64, 4
    $region41: #{tpu_custom_call.1} parent=1 // pred_fallthru
      _
    // Predicated region
    $region42: #{tpu_custom_call.1} parent=1 // pred_check
      _
    $region43: #{tpu_custom_call.1} parent=1 // pred_check_branch
      %100 = sbr.rel (0) target = $region45
    $region44: #{tpu_custom_call.1} parent=1 // pred_region
      _
    $region45: #{tpu_custom_call.1} parent=1 // pred_fallthru
      _
    // Predicated region
    $region46: #{tpu_custom_call.1} parent=1 // pred_check
      _
    $region47: #{tpu_custom_call.1} parent=1 // pred_check_branch
      %102 = sbr.rel (0) target = $region49
    $region48: #{tpu_custom_call.1} parent=1 // pred_region
      %103 = dma.done [#allocation6], 1024
    $region49: #{tpu_custom_call.1} parent=1 // pred_fallthru
      _
    // Predicated region
    $region50: #{tpu_custom_call.1} parent=1 // pred_check
      _
    $region51: #{tpu_custom_call.1} parent=1 // pred_check_branch
      %105 = sbr.rel (0) target = $region53
    $region52: #{tpu_custom_call.1} parent=1 // pred_region
      %106 = dma.done [#allocation9], 192
    $region53: #{tpu_custom_call.1} parent=1 // pred_fallthru
      _
    // Predicated region
    $region54: #{tpu_custom_call.1} parent=1 // pred_check
      _
    $region55: #{tpu_custom_call.1} parent=1 // pred_check_branch
      %108 = sbr.rel (0) target = $region57
    $region56: #{tpu_custom_call.1} parent=1 // pred_region
      %109 = dma.done [#allocation9], 3072
    $region57: #{tpu_custom_call.1} parent=1 // pred_fallthru
      _
    // Predicated region
    $region58: #{tpu_custom_call.1} parent=1 // pred_check
      _
    $region59: #{tpu_custom_call.1} parent=1 // pred_check_branch
      %111 = sbr.rel (0) target = $region61
    $region60: #{tpu_custom_call.1} parent=1 // pred_region
      %112 = dma.done [#allocation12], 3072
    $region61: #{tpu_custom_call.1} parent=1 // pred_fallthru
      _
    // Predicated region
    $region62: #{tpu_custom_call.1} parent=1 // pred_check
      _
    $region63: #{tpu_custom_call.1} parent=1 // pred_check_branch
      %114 = sbr.rel (0) target = $region65
    $region64: #{tpu_custom_call.1} parent=1 // pred_region
      %115 = dma.done [#allocation12], 3072
    $region65: #{tpu_custom_call.1} parent=1 // pred_fallthru
      _
    // Predicated region
    $region66: #{tpu_custom_call.1} parent=1 // pred_check
      _
    $region67: #{tpu_custom_call.1} parent=1 // pred_check_branch
      %117 = sbr.rel (0) target = $region69
    $region68: #{tpu_custom_call.1} parent=1 // pred_region
      %118 = dma.done [#allocation15], 1024
    $region69: #{tpu_custom_call.1} parent=1 // pred_fallthru
      _
    %p120 = scmp.eq.s32.totalorder 0, 0
    // Predicated region
    $region70: #{tpu_custom_call.1} parent=1 // pred_check
      %p121 = pneg %p120
    $region71: #{tpu_custom_call.1} parent=1 // pred_check_branch
      %123 = sbr.rel (%p121) target = $region73
    $region72: #{tpu_custom_call.1} parent=1 // pred_region
      %124 = vst [vmem:[#allocation2] sm:$0xff] 0.0
      %125 = vst [vmem:[#allocation2 + $0x8] sm:$0xff] 0.0
    $region73: #{tpu_custom_call.1} parent=1 // pred_fallthru
      _
    %v126 = vld [vmem:[#allocation8] sm:$0xff]
    %v127 = vld [vmem:[#allocation8 + $0x8] sm:$0xf]
    %v128 = vld [vmem:[#allocation10] sm:$0xff]
    %v129 = vld [vmem:[#allocation10 + $0x8] sm:$0xf]
    %v130 = vld [vmem:[#allocation10 + $0xc] sm:$0xff]
    %v131 = vld [vmem:[#allocation10 + $0x14] sm:$0xf]
    %v132 = vld [vmem:[#allocation10 + $0x18] sm:$0xff]
    %v133 = vld [vmem:[#allocation10 + $0x20] sm:$0xf]
    %v134 = vld [vmem:[#allocation10 + $0x24] sm:$0xff]
    %v135 = vld [vmem:[#allocation10 + $0x2c] sm:$0xf]
    %v136 = vld [vmem:[#allocation10 + $0x30] sm:$0xff]
    %v137 = vld [vmem:[#allocation10 + $0x38] sm:$0xf]
    %v138 = vld [vmem:[#allocation10 + $0x3c] sm:$0xff]
    %v139 = vld [vmem:[#allocation10 + $0x44] sm:$0xf]
    %v140 = vld [vmem:[#allocation10 + $0x48] sm:$0xff]
    %v141 = vld [vmem:[#allocation10 + $0x50] sm:$0xf]
    %v142 = vld [vmem:[#allocation10 + $0x54] sm:$0xff]
    %v143 = vld [vmem:[#allocation10 + $0x5c] sm:$0xf]
    %v144 = vld [vmem:[#allocation10 + $0x60] sm:$0xff]
    %v145 = vld [vmem:[#allocation10 + $0x68] sm:$0xf]
    %v146 = vld [vmem:[#allocation10 + $0x6c] sm:$0xff]
    %v147 = vld [vmem:[#allocation10 + $0x74] sm:$0xf]
    %v148 = vld [vmem:[#allocation10 + $0x78] sm:$0xff]
    %v149 = vld [vmem:[#allocation10 + $0x80] sm:$0xf]
    %v150 = vld [vmem:[#allocation10 + $0x84] sm:$0xff]
    %v151 = vld [vmem:[#allocation10 + $0x8c] sm:$0xf]
    %v152 = vld [vmem:[#allocation10 + $0x90] sm:$0xff]
    %v153 = vld [vmem:[#allocation10 + $0x98] sm:$0xf]
    %v154 = vld [vmem:[#allocation10 + $0x9c] sm:$0xff]
    %v155 = vld [vmem:[#allocation10 + $0xa4] sm:$0xf]
    %v156 = vld [vmem:[#allocation10 + $0xa8] sm:$0xff]
    %v157 = vld [vmem:[#allocation10 + $0xb0] sm:$0xf]
    %v158 = vld [vmem:[#allocation10 + $0xb4] sm:$0xff]
    %v159 = vld [vmem:[#allocation10 + $0xbc] sm:$0xf]
    %v160 = vld [vmem:[%s3] sm:$0x7]
    %v161 = vld [vmem:[%s4] sm:$0x1]
    %v162 = vld [vmem:[#allocation5] sm:$0xff]
    %v163 = vld [vmem:[#allocation5 + $0x8] sm:$0xff]
    %v164 = vld [vmem:[#allocation5 + $0x10] sm:$0xff]
    %v165 = vld [vmem:[#allocation5 + $0x18] sm:$0xff]
    %v166 = vld [vmem:[#allocation5 + $0x20] sm:$0xff]
    %v167 = vld [vmem:[#allocation5 + $0x28] sm:$0xff]
    %v168 = vld [vmem:[#allocation5 + $0x30] sm:$0xff]
    %v169 = vld [vmem:[#allocation5 + $0x38] sm:$0xff]
    %v170 = vpack.c.bf16 %v163, %v162
    %v171 = vpack.c.bf16 %v165, %v164
    %v172 = vpack.c.bf16 %v167, %v166
    %v173 = vpack.c.bf16 %v169, %v168
    %v175 = vlaneseq
    %v176 = vshrl.u32 %v175, 7
    %v177 = vsub.s32 0, %v176
    %v178 = vrot.slane %v160, %v177
    %v179 = vlaneseq
    %v180 = vshrl.u32 %v179, 7
    %v181 = vsub.s32 1, %v180
    %v182 = vrot.slane %v160, %v181
    %v183 = vlaneseq
    %v184 = vshrl.u32 %v183, 7
    %v185 = vsub.s32 2, %v184
    %v186 = vrot.slane %v160, %v185
    %v192 = vunpack.c.l.b16 %v126
    %v193 = vunpack.c.h.b16 %v126
    %v194 = vunpack.c.l.b16 %v127
    %v195 = vpack.c.b16 %v192, %v192
    %v196 = vpack.c.b16 %v193, %v193
    %v197 = vpack.c.b16 %v194, %v194
    %vm198 = vcmask 64512
    %v200 = vsel %vm198, %v170, 0
    %v203 = vsel %vm198, %v171, 0
    %v206 = vsel %vm198, %v172, 0
    %v209 = vsel %vm198, %v173, 0
    %vm211 = vcmask 1043456
    %v213 = vsel %vm211, %v195, 0
    %v216 = vsel %vm211, %v196, 0
    %v219 = vsel %vm211, %v197, 0
    %221 = vmatprep.subr.bf16.mxu0 %v216
    %222 = vmatpush1.bf16.msra.mxu0 %v213
    %223 = vmatprep.subr.bf16.mxu0 0
    %224 = vmatpush1.bf16.msra.mxu0 0
    %225 = vmatprep.subr.bf16.mxu0 0
    %226 = vmatpush1.bf16.msra.mxu0 0
    %227 = vmatprep.subr.bf16.mxu0 0
    %228 = vmatpush1.bf16.msra.mxu0 0
    %229 = vmatprep.subr.bf16.mxu0 0
    %230 = vmatpush1.bf16.msra.mxu0 0
    %231 = vmatprep.subr.bf16.mxu0 0
    %232 = vmatpush1.bf16.msra.mxu0 0
    %233 = vmatprep.subr.bf16.mxu0 0
    %234 = vmatpush1.bf16.msra.mxu0 0
    %235 = vmatprep.subr.bf16.mxu0 0
    %236 = vmatpush1.bf16.msra.mxu0 0
    %237 = vmatprep.subr.bf16.mxu0 0
    %238 = vmatpush1.bf16.msra.mxu0 0
    %239 = vmatprep.subr.bf16.mxu0 0
    %240 = vmatpush1.bf16.msra.mxu0 0
    %241 = vmatprep.subr.bf16.mxu0 0
    %242 = vmatpush1.bf16.msra.mxu0 0
    %243 = vmatprep.subr.bf16.mxu0 0
    %244 = vmatpush1.bf16.msra.mxu0 0
    %245 = vmatprep.subr.bf16.mxu0 0
    %246 = vmatpush1.bf16.msra.mxu0 0
    %247 = vmatprep.subr.bf16.mxu0 0
    %248 = vmatpush1.bf16.msra.mxu0 0
    %249 = vmatprep.subr.bf16.mxu0 0
    %250 = vmatpush1.bf16.msra.mxu0 0
    %251 = vmatprep.subr.bf16.mxu0 0
    %252 = vmatpush1.bf16.msra.mxu0 0
    %253 = vmatprep.mubr.bf16.mxu0 0
    %254 = vmatmul.mubr.bf16.gmra.mrb[0].mxu0 %v200
    %v255 = vpop.f32.mrb[0].mxu0
    %v256 = vadd.f32 %v178, %v255
    %v257 = vpop.f32.mrb[0].mxu0
    %v258 = vadd.f32 %v182, %v257
    %v259 = vpop.f32.mrb[0].mxu0
    %v260 = vadd.f32 %v178, %v259
    %v261 = vpop.f32.mrb[0].mxu0
    %v262 = vadd.f32 %v182, %v261
    %263 = vmatprep.mubr.bf16.mxu0 0
    %264 = vmatmul.mubr.bf16.gmra.mrb[0].mxu0 %v203
    %v265 = vpop.f32.mrb[0].mxu0
    %v266 = vadd.f32 %v178, %v265
    %v267 = vpop.f32.mrb[0].mxu0
    %v268 = vadd.f32 %v182, %v267
    %v269 = vpop.f32.mrb[0].mxu0
    %v270 = vadd.f32 %v178, %v269
    %v271 = vpop.f32.mrb[0].mxu0
    %v272 = vadd.f32 %v182, %v271
    %273 = vmatprep.mubr.bf16.mxu0 0
    %274 = vmatmul.mubr.bf16.gmra.mrb[0].mxu0 %v206
    %v275 = vpop.f32.mrb[0].mxu0
    %v276 = vadd.f32 %v178, %v275
    %v277 = vpop.f32.mrb[0].mxu0
    %v278 = vadd.f32 %v182, %v277
    %v279 = vpop.f32.mrb[0].mxu0
    %v280 = vadd.f32 %v178, %v279
    %v281 = vpop.f32.mrb[0].mxu0
    %v282 = vadd.f32 %v182, %v281
    %283 = vmatprep.mubr.bf16.mxu0 0
    %284 = vmatmul.mubr.bf16.gmra.mrb[0].mxu0 %v209
    %v285 = vpop.f32.mrb[0].mxu0
    %v286 = vadd.f32 %v178, %v285
    %v287 = vpop.f32.mrb[0].mxu0
    %v288 = vadd.f32 %v182, %v287
    %v289 = vpop.f32.mrb[0].mxu0
    %v290 = vadd.f32 %v178, %v289
    %v291 = vpop.f32.mrb[0].mxu0
    %v292 = vadd.f32 %v182, %v291
    %293 = vdwg.mxu0
    %294 = vmatprep.subr.bf16.mxu0 0
    %295 = vmatpush1.bf16.msra.mxu0 %v219
    %296 = vmatprep.subr.bf16.mxu0 0
    %297 = vmatpush1.bf16.msra.mxu0 0
    %298 = vmatprep.subr.bf16.mxu0 0
    %299 = vmatpush1.bf16.msra.mxu0 0
    %300 = vmatprep.subr.bf16.mxu0 0
    %301 = vmatpush1.bf16.msra.mxu0 0
    %302 = vmatprep.subr.bf16.mxu0 0
    %303 = vmatpush1.bf16.msra.mxu0 0
    %304 = vmatprep.subr.bf16.mxu0 0
    %305 = vmatpush1.bf16.msra.mxu0 0
    %306 = vmatprep.subr.bf16.mxu0 0
    %307 = vmatpush1.bf16.msra.mxu0 0
    %308 = vmatprep.subr.bf16.mxu0 0
    %309 = vmatpush1.bf16.msra.mxu0 0
    %310 = vmatprep.subr.bf16.mxu0 0
    %311 = vmatpush1.bf16.msra.mxu0 0
    %312 = vmatprep.subr.bf16.mxu0 0
    %313 = vmatpush1.bf16.msra.mxu0 0
    %314 = vmatprep.subr.bf16.mxu0 0
    %315 = vmatpush1.bf16.msra.mxu0 0
    %316 = vmatprep.subr.bf16.mxu0 0
    %317 = vmatpush1.bf16.msra.mxu0 0
    %318 = vmatprep.subr.bf16.mxu0 0
    %319 = vmatpush1.bf16.msra.mxu0 0
    %320 = vmatprep.subr.bf16.mxu0 0
    %321 = vmatpush1.bf16.msra.mxu0 0
    %322 = vmatprep.subr.bf16.mxu0 0
    %323 = vmatpush1.bf16.msra.mxu0 0
    %324 = vmatprep.subr.bf16.mxu0 0
    %325 = vmatpush1.bf16.msra.mxu0 0
    %326 = vmatprep.mubr.bf16.mxu0 0
    %327 = vmatmul.mubr.bf16.gmra.mrb[0].mxu0 %v200
    %v328 = vpop.f32.mrb[0].mxu0
    %v329 = vadd.f32 %v186, %v328
    %v330 = vpop.f32.mrb[0].mxu0
    %v331 = vpop.f32.mrb[0].mxu0
    %v332 = vadd.f32 %v186, %v331
    %v333 = vpop.f32.mrb[0].mxu0
    %334 = vmatprep.mubr.bf16.mxu0 0
    %335 = vmatmul.mubr.bf16.gmra.mrb[0].mxu0 %v203
    %v336 = vpop.f32.mrb[0].mxu0
    %v337 = vadd.f32 %v186, %v336
    %v338 = vpop.f32.mrb[0].mxu0
    %v339 = vpop.f32.mrb[0].mxu0
    %v340 = vadd.f32 %v186, %v339
    %v341 = vpop.f32.mrb[0].mxu0
    %342 = vmatprep.mubr.bf16.mxu0 0
    %343 = vmatmul.mubr.bf16.gmra.mrb[0].mxu0 %v206
    %v344 = vpop.f32.mrb[0].mxu0
    %v345 = vadd.f32 %v186, %v344
    %v346 = vpop.f32.mrb[0].mxu0
    %v347 = vpop.f32.mrb[0].mxu0
    %v348 = vadd.f32 %v186, %v347
    %v349 = vpop.f32.mrb[0].mxu0
    %350 = vmatprep.mubr.bf16.mxu0 0
    %351 = vmatmul.mubr.bf16.gmra.mrb[0].mxu0 %v209
    %v352 = vpop.f32.mrb[0].mxu0
    %v353 = vadd.f32 %v186, %v352
    %v354 = vpop.f32.mrb[0].mxu0
    %v355 = vpop.f32.mrb[0].mxu0
    %v356 = vadd.f32 %v186, %v355
    %v357 = vpop.f32.mrb[0].mxu0
    %358 = vdwg.mxu0
    %359 = vst [vmem:[#allocation4] sm:$0xff] %v256
    %360 = vst [vmem:[#allocation4 + $0x8] sm:$0xff] %v258
    %361 = vst [vmem:[#allocation4 + $0x10] sm:$0xff] %v329
    %362 = vst [vmem:[#allocation4 + $0x18] sm:$0xff] %v260
    %363 = vst [vmem:[#allocation4 + $0x20] sm:$0xff] %v262
    %364 = vst [vmem:[#allocation4 + $0x28] sm:$0xff] %v332
    %365 = vst [vmem:[#allocation4 + $0x30] sm:$0xff] %v266
    %366 = vst [vmem:[#allocation4 + $0x38] sm:$0xff] %v268
    %367 = vst [vmem:[#allocation4 + $0x40] sm:$0xff] %v337
    %368 = vst [vmem:[#allocation4 + $0x48] sm:$0xff] %v270
    %369 = vst [vmem:[#allocation4 + $0x50] sm:$0xff] %v272
    %370 = vst [vmem:[#allocation4 + $0x58] sm:$0xff] %v340
    %371 = vst [vmem:[#allocation4 + $0x60] sm:$0xff] %v276
    %372 = vst [vmem:[#allocation4 + $0x68] sm:$0xff] %v278
    %373 = vst [vmem:[#allocation4 + $0x70] sm:$0xff] %v345
    %374 = vst [vmem:[#allocation4 + $0x78] sm:$0xff] %v280
    %375 = vst [vmem:[#allocation4 + $0x80] sm:$0xff] %v282
    %376 = vst [vmem:[#allocation4 + $0x88] sm:$0xff] %v348
    %377 = vst [vmem:[#allocation4 + $0x90] sm:$0xff] %v286
    %378 = vst [vmem:[#allocation4 + $0x98] sm:$0xff] %v288
    %379 = vst [vmem:[#allocation4 + $0xa0] sm:$0xff] %v353
    %380 = vst [vmem:[#allocation4 + $0xa8] sm:$0xff] %v290
    %381 = vst [vmem:[#allocation4 + $0xb0] sm:$0xff] %v292
    %382 = vst [vmem:[#allocation4 + $0xb8] sm:$0xff] %v356
    %v383 = vld [vmem:[#allocation2] sm:$0xff]
    %v384 = vld [vmem:[#allocation4] sm:$0xff]
    %v385 = vld [vmem:[#allocation4 + $0x8] sm:$0xff]
    %v386 = vld [vmem:[#allocation4 + $0x10] sm:$0xff]
    %v387 = vpack.c.bf16 %v383, %v383
    %v420 = vunpack.c.l.b16 %v128
    %v421 = vunpack.c.h.b16 %v128
    %v422 = vunpack.c.l.b16 %v129
    %v423 = vunpack.c.l.b16 %v130
    %v424 = vunpack.c.h.b16 %v130
    %v425 = vunpack.c.l.b16 %v131
    %v426 = vunpack.c.l.b16 %v132
    %v427 = vunpack.c.h.b16 %v132
    %v428 = vunpack.c.l.b16 %v133
    %v429 = vunpack.c.l.b16 %v134
    %v430 = vunpack.c.h.b16 %v134
    %v431 = vunpack.c.l.b16 %v135
    %v432 = vunpack.c.l.b16 %v136
    %v433 = vunpack.c.h.b16 %v136
    %v434 = vunpack.c.l.b16 %v137
    %v435 = vunpack.c.l.b16 %v138
    %v436 = vunpack.c.h.b16 %v138
    %v437 = vunpack.c.l.b16 %v139
    %v438 = vunpack.c.l.b16 %v140
    %v439 = vunpack.c.h.b16 %v140
    %v440 = vunpack.c.l.b16 %v141
    %v441 = vunpack.c.l.b16 %v142
    %v442 = vunpack.c.h.b16 %v142
    %v443 = vunpack.c.l.b16 %v143
    %v444 = vunpack.c.l.b16 %v144
    %v445 = vunpack.c.h.b16 %v144
    %v446 = vunpack.c.l.b16 %v145
    %v447 = vunpack.c.l.b16 %v146
    %v448 = vunpack.c.h.b16 %v146
    %v449 = vunpack.c.l.b16 %v147
    %v450 = vunpack.c.l.b16 %v148
    %v451 = vunpack.c.h.b16 %v148
    %v452 = vunpack.c.l.b16 %v149
    %v453 = vunpack.c.l.b16 %v150
    %v454 = vunpack.c.h.b16 %v150
    %v455 = vunpack.c.l.b16 %v151
    %v456 = vunpack.c.l.b16 %v152
    %v457 = vunpack.c.h.b16 %v152
    %v458 = vunpack.c.l.b16 %v153
    %v459 = vunpack.c.l.b16 %v154
    %v460 = vunpack.c.h.b16 %v154
    %v461 = vunpack.c.l.b16 %v155
    %v462 = vunpack.c.l.b16 %v156
    %v463 = vunpack.c.h.b16 %v156
    %v464 = vunpack.c.l.b16 %v157
    %v465 = vunpack.c.l.b16 %v158
    %v466 = vunpack.c.h.b16 %v158
    %v467 = vunpack.c.l.b16 %v159
    %v468 = vpack.c.b16 %v423, %v420
    %v469 = vpack.c.b16 %v424, %v421
    %v470 = vpack.c.b16 %v425, %v422
    %v471 = vpack.c.b16 %v429, %v426
    %v472 = vpack.c.b16 %v430, %v427
    %v473 = vpack.c.b16 %v431, %v428
    %v474 = vpack.c.b16 %v435, %v432
    %v475 = vpack.c.b16 %v436, %v433
    %v476 = vpack.c.b16 %v437, %v434
    %v477 = vpack.c.b16 %v441, %v438
    %v478 = vpack.c.b16 %v442, %v439
    %v479 = vpack.c.b16 %v443, %v440
    %v480 = vpack.c.b16 %v447, %v444
    %v481 = vpack.c.b16 %v448, %v445
    %v482 = vpack.c.b16 %v449, %v446
    %v483 = vpack.c.b16 %v453, %v450
    %v484 = vpack.c.b16 %v454, %v451
    %v485 = vpack.c.b16 %v455, %v452
    %v486 = vpack.c.b16 %v459, %v456
    %v487 = vpack.c.b16 %v460, %v457
    %v488 = vpack.c.b16 %v461, %v458
    %v489 = vpack.c.b16 %v465, %v462
    %v490 = vpack.c.b16 %v466, %v463
    %v491 = vpack.c.b16 %v467, %v464
    %516 = vmatprep.subr.bf16.mxu0 %v469
    %517 = vmatpush1.bf16.msra.mxu0 %v468
    %518 = vmatprep.subr.bf16.mxu0 %v472
    %519 = vmatpush1.bf16.msra.mxu0 %v471
    %520 = vmatprep.subr.bf16.mxu0 %v475
    %521 = vmatpush1.bf16.msra.mxu0 %v474
    %522 = vmatprep.subr.bf16.mxu0 %v478
    %523 = vmatpush1.bf16.msra.mxu0 %v477
    %524 = vmatprep.subr.bf16.mxu0 %v481
    %525 = vmatpush1.bf16.msra.mxu0 %v480
    %526 = vmatprep.subr.bf16.mxu0 %v484
    %527 = vmatpush1.bf16.msra.mxu0 %v483
    %528 = vmatprep.subr.bf16.mxu0 %v487
    %529 = vmatpush1.bf16.msra.mxu0 %v486
    %530 = vmatprep.subr.bf16.mxu0 %v490
    %531 = vmatpush1.bf16.msra.mxu0 %v489
    %532 = vmatprep.subr.bf16.mxu0 0
    %533 = vmatpush1.bf16.msra.mxu0 0
    %534 = vmatprep.subr.bf16.mxu0 0
    %535 = vmatpush1.bf16.msra.mxu0 0
    %536 = vmatprep.subr.bf16.mxu0 0
    %537 = vmatpush1.bf16.msra.mxu0 0
    %538 = vmatprep.subr.bf16.mxu0 0
    %539 = vmatpush1.bf16.msra.mxu0 0
    %540 = vmatprep.subr.bf16.mxu0 0
    %541 = vmatpush1.bf16.msra.mxu0 0
    %542 = vmatprep.subr.bf16.mxu0 0
    %543 = vmatpush1.bf16.msra.mxu0 0
    %544 = vmatprep.subr.bf16.mxu0 0
    %545 = vmatpush1.bf16.msra.mxu0 0
    %546 = vmatprep.subr.bf16.mxu0 0
    %547 = vmatpush1.bf16.msra.mxu0 0
    %548 = vmatprep.mubr.bf16.mxu0 0
    %549 = vmatmul.mubr.bf16.gmra.mrb[0].mxu0 %v387
    %v550 = vpop.f32.mrb[0].mxu0
    %v551 = vadd.f32 0.0, %v550
    %v552 = vpop.f32.mrb[0].mxu0
    %v553 = vadd.f32 0.0, %v552
    %v554 = vpop.f32.mrb[0].mxu0
    %v555 = vpop.f32.mrb[0].mxu0
    %556 = vdwg.mxu0
    %557 = vmatprep.subr.bf16.mxu0 0
    %558 = vmatpush1.bf16.msra.mxu0 %v470
    %559 = vmatprep.subr.bf16.mxu0 0
    %560 = vmatpush1.bf16.msra.mxu0 %v473
    %561 = vmatprep.subr.bf16.mxu0 0
    %562 = vmatpush1.bf16.msra.mxu0 %v476
    %563 = vmatprep.subr.bf16.mxu0 0
    %564 = vmatpush1.bf16.msra.mxu0 %v479
    %565 = vmatprep.subr.bf16.mxu0 0
    %566 = vmatpush1.bf16.msra.mxu0 %v482
    %567 = vmatprep.subr.bf16.mxu0 0
    %568 = vmatpush1.bf16.msra.mxu0 %v485
    %569 = vmatprep.subr.bf16.mxu0 0
    %570 = vmatpush1.bf16.msra.mxu0 %v488
    %571 = vmatprep.subr.bf16.mxu0 0
    %572 = vmatpush1.bf16.msra.mxu0 %v491
    %573 = vmatprep.subr.bf16.mxu0 0
    %574 = vmatpush1.bf16.msra.mxu0 0
    %575 = vmatprep.subr.bf16.mxu0 0
    %576 = vmatpush1.bf16.msra.mxu0 0
    %577 = vmatprep.subr.bf16.mxu0 0
    %578 = vmatpush1.bf16.msra.mxu0 0
    %579 = vmatprep.subr.bf16.mxu0 0
    %580 = vmatpush1.bf16.msra.mxu0 0
    %581 = vmatprep.subr.bf16.mxu0 0
    %582 = vmatpush1.bf16.msra.mxu0 0
    %583 = vmatprep.subr.bf16.mxu0 0
    %584 = vmatpush1.bf16.msra.mxu0 0
    %585 = vmatprep.subr.bf16.mxu0 0
    %586 = vmatpush1.bf16.msra.mxu0 0
    %587 = vmatprep.subr.bf16.mxu0 0
    %588 = vmatpush1.bf16.msra.mxu0 0
    %589 = vmatprep.mubr.bf16.mxu0 0
    %590 = vmatmul.mubr.bf16.gmra.mrb[0].mxu0 %v387
    %v591 = vpop.f32.mrb[0].mxu0
    %v592 = vadd.f32 0.0, %v591
    %v593 = vpop.f32.mrb[0].mxu0
    %v594 = vpop.f32.mrb[0].mxu0
    %v595 = vpop.f32.mrb[0].mxu0
    %596 = vdwg.mxu0
    %v597 = vadd.f32 %v384, %v551
    %v598 = vadd.f32 %v385, %v553
    %v599 = vxor.u32 %v597, 2147483648
    %v600 = vxor.u32 %v598, 2147483648
    %v601 = vmul.f32 %v599, 1.442695
    %v602 = vpow.pop %v601
    %v603 = vmul.f32 %v600, 1.442695
    %v604 = vpow.pop %v603
    %v605 = vadd.f32 %v602, 1.0
    %v606 = vadd.f32 %v604, 1.0
    %v607 = vrcp.pop %v605
    %v608 = vmul.f32 1.0, %v607
    %v609 = vrcp.pop %v606
    %v610 = vmul.f32 1.0, %v609
    %v612 = vlaneseq
    %v613 = vshrl.u32 %v612, 7
    %v614 = vsub.s32 0, %v613
    %v615 = vrot.slane %v161, %v614
    %v617 = vadd.f32 %v592, %v615
    %v618 = vmul.f32 %v608, %v617
    %v619 = vadd.f32 %v386, %v618
    %v620 = vtanh.pop %v619
    %v621 = vsub.f32 1.0, %v610
    %v622 = vmul.f32 %v621, %v620
    %v623 = vmul.f32 %v610, %v383
    %v624 = vadd.f32 %v622, %v623
    %625 = vst [vmem:[#allocation3] sm:$0xff] %v624
    %s626 = scalar_lea.vmem [#allocation4], 24
    %v627 = vld [vmem:[%s626] sm:$0xff]
    %v628 = vld [vmem:[%s626 + $0x8] sm:$0xff]
    %v629 = vld [vmem:[%s626 + $0x10] sm:$0xff]
    %v630 = vpack.c.bf16 %v624, %v624
    %631 = vmatprep.subr.bf16.mxu0 %v469
    %632 = vmatpush1.bf16.msra.mxu0 %v468
    %633 = vmatprep.subr.bf16.mxu0 %v472
    %634 = vmatpush1.bf16.msra.mxu0 %v471
    %635 = vmatprep.subr.bf16.mxu0 %v475
    %636 = vmatpush1.bf16.msra.mxu0 %v474
    %637 = vmatprep.subr.bf16.mxu0 %v478
    %638 = vmatpush1.bf16.msra.mxu0 %v477
    %639 = vmatprep.subr.bf16.mxu0 %v481
    %640 = vmatpush1.bf16.msra.mxu0 %v480
    %641 = vmatprep.subr.bf16.mxu0 %v484
    %642 = vmatpush1.bf16.msra.mxu0 %v483
    %643 = vmatprep.subr.bf16.mxu0 %v487
    %644 = vmatpush1.bf16.msra.mxu0 %v486
    %645 = vmatprep.subr.bf16.mxu0 %v490
    %646 = vmatpush1.bf16.msra.mxu0 %v489
    %647 = vmatprep.subr.bf16.mxu0 0
    %648 = vmatpush1.bf16.msra.mxu0 0
    %649 = vmatprep.subr.bf16.mxu0 0
    %650 = vmatpush1.bf16.msra.mxu0 0
    %651 = vmatprep.subr.bf16.mxu0 0
    %652 = vmatpush1.bf16.msra.mxu0 0
    %653 = vmatprep.subr.bf16.mxu0 0
    %654 = vmatpush1.bf16.msra.mxu0 0
    %655 = vmatprep.subr.bf16.mxu0 0
    %656 = vmatpush1.bf16.msra.mxu0 0
    %657 = vmatprep.subr.bf16.mxu0 0
    %658 = vmatpush1.bf16.msra.mxu0 0
    %659 = vmatprep.subr.bf16.mxu0 0
    %660 = vmatpush1.bf16.msra.mxu0 0
    %661 = vmatprep.subr.bf16.mxu0 0
    %662 = vmatpush1.bf16.msra.mxu0 0
    %663 = vmatprep.mubr.bf16.mxu0 0
    %664 = vmatmul.mubr.bf16.gmra.mrb[0].mxu0 %v630
    %v665 = vpop.f32.mrb[0].mxu0
    %v666 = vadd.f32 0.0, %v665
    %v667 = vpop.f32.mrb[0].mxu0
    %v668 = vadd.f32 0.0, %v667
    %v669 = vpop.f32.mrb[0].mxu0
    %v670 = vpop.f32.mrb[0].mxu0
    %671 = vdwg.mxu0
    %672 = vmatprep.subr.bf16.mxu0 0
    %673 = vmatpush1.bf16.msra.mxu0 %v470
    %674 = vmatprep.subr.bf16.mxu0 0
    %675 = vmatpush1.bf16.msra.mxu0 %v473
    %676 = vmatprep.subr.bf16.mxu0 0
    %677 = vmatpush1.bf16.msra.mxu0 %v476
    %678 = vmatprep.subr.bf16.mxu0 0
    %679 = vmatpush1.bf16.msra.mxu0 %v479
    %680 = vmatprep.subr.bf16.mxu0 0
    %681 = vmatpush1.bf16.msra.mxu0 %v482
    %682 = vmatprep.subr.bf16.mxu0 0
    %683 = vmatpush1.bf16.msra.mxu0 %v485
    %684 = vmatprep.subr.bf16.mxu0 0
    %685 = vmatpush1.bf16.msra.mxu0 %v488
    %686 = vmatprep.subr.bf16.mxu0 0
    %687 = vmatpush1.bf16.msra.mxu0 %v491
    %688 = vmatprep.subr.bf16.mxu0 0
    %689 = vmatpush1.bf16.msra.mxu0 0
    %690 = vmatprep.subr.bf16.mxu0 0
    %691 = vmatpush1.bf16.msra.mxu0 0
    %692 = vmatprep.subr.bf16.mxu0 0
    %693 = vmatpush1.bf16.msra.mxu0 0
    %694 = vmatprep.subr.bf16.mxu0 0
    %695 = vmatpush1.bf16.msra.mxu0 0
    %696 = vmatprep.subr.bf16.mxu0 0
    %697 = vmatpush1.bf16.msra.mxu0 0
    %698 = vmatprep.subr.bf16.mxu0 0
    %699 = vmatpush1.bf16.msra.mxu0 0
    %700 = vmatprep.subr.bf16.mxu0 0
    %701 = vmatpush1.bf16.msra.mxu0 0
    %702 = vmatprep.subr.bf16.mxu0 0
    %703 = vmatpush1.bf16.msra.mxu0 0
    %704 = vmatprep.mubr.bf16.mxu0 0
    %705 = vmatmul.mubr.bf16.gmra.mrb[0].mxu0 %v630
    %v706 = vpop.f32.mrb[0].mxu0
    %v707 = vadd.f32 0.0, %v706
    %v708 = vpop.f32.mrb[0].mxu0
    %v709 = vpop.f32.mrb[0].mxu0
    %v710 = vpop.f32.mrb[0].mxu0
    %711 = vdwg.mxu0
    %v712 = vadd.f32 %v627, %v666
    %v713 = vadd.f32 %v628, %v668
    %v714 = vxor.u32 %v712, 2147483648
    %v715 = vxor.u32 %v713, 2147483648
    %v716 = vmul.f32 %v714, 1.442695
    %v717 = vpow.pop %v716
    %v718 = vmul.f32 %v715, 1.442695
    %v719 = vpow.pop %v718
    %v720 = vadd.f32 %v717, 1.0
    %v721 = vadd.f32 %v719, 1.0
    %v722 = vrcp.pop %v720
    %v723 = vmul.f32 1.0, %v722
    %v724 = vrcp.pop %v721
    %v725 = vmul.f32 1.0, %v724
    %v726 = vadd.f32 %v707, %v615
    %v727 = vmul.f32 %v723, %v726
    %v728 = vadd.f32 %v629, %v727
    %v729 = vtanh.pop %v728
    %v730 = vsub.f32 1.0, %v725
    %v731 = vmul.f32 %v730, %v729
    %v732 = vmul.f32 %v725, %v624
    %v733 = vadd.f32 %v731, %v732
    %s734 = scalar_lea.vmem [#allocation3], 8
    %735 = vst [vmem:[%s734] sm:$0xff] %v733
    %s736 = scalar_lea.vmem [#allocation4], 48
    %v737 = vld [vmem:[%s736] sm:$0xff]
    %v738 = vld [vmem:[%s736 + $0x8] sm:$0xff]
    %v739 = vld [vmem:[%s736 + $0x10] sm:$0xff]
    %v740 = vpack.c.bf16 %v733, %v733
    %741 = vmatprep.subr.bf16.mxu0 %v469
    %742 = vmatpush1.bf16.msra.mxu0 %v468
    %743 = vmatprep.subr.bf16.mxu0 %v472
    %744 = vmatpush1.bf16.msra.mxu0 %v471
    %745 = vmatprep.subr.bf16.mxu0 %v475
    %746 = vmatpush1.bf16.msra.mxu0 %v474
    %747 = vmatprep.subr.bf16.mxu0 %v478
    %748 = vmatpush1.bf16.msra.mxu0 %v477
    %749 = vmatprep.subr.bf16.mxu0 %v481
    %750 = vmatpush1.bf16.msra.mxu0 %v480
    %751 = vmatprep.subr.bf16.mxu0 %v484
    %752 = vmatpush1.bf16.msra.mxu0 %v483
    %753 = vmatprep.subr.bf16.mxu0 %v487
    %754 = vmatpush1.bf16.msra.mxu0 %v486
    %755 = vmatprep.subr.bf16.mxu0 %v490
    %756 = vmatpush1.bf16.msra.mxu0 %v489
    %757 = vmatprep.subr.bf16.mxu0 0
    %758 = vmatpush1.bf16.msra.mxu0 0
    %759 = vmatprep.subr.bf16.mxu0 0
    %760 = vmatpush1.bf16.msra.mxu0 0
    %761 = vmatprep.subr.bf16.mxu0 0
    %762 = vmatpush1.bf16.msra.mxu0 0
    %763 = vmatprep.subr.bf16.mxu0 0
    %764 = vmatpush1.bf16.msra.mxu0 0
    %765 = vmatprep.subr.bf16.mxu0 0
    %766 = vmatpush1.bf16.msra.mxu0 0
    %767 = vmatprep.subr.bf16.mxu0 0
    %768 = vmatpush1.bf16.msra.mxu0 0
    %769 = vmatprep.subr.bf16.mxu0 0
    %770 = vmatpush1.bf16.msra.mxu0 0
    %771 = vmatprep.subr.bf16.mxu0 0
    %772 = vmatpush1.bf16.msra.mxu0 0
    %773 = vmatprep.mubr.bf16.mxu0 0
    %774 = vmatmul.mubr.bf16.gmra.mrb[0].mxu0 %v740
    %v775 = vpop.f32.mrb[0].mxu0
    %v776 = vadd.f32 0.0, %v775
    %v777 = vpop.f32.mrb[0].mxu0
    %v778 = vadd.f32 0.0, %v777
    %v779 = vpop.f32.mrb[0].mxu0
    %v780 = vpop.f32.mrb[0].mxu0
    %781 = vdwg.mxu0
    %782 = vmatprep.subr.bf16.mxu0 0
    %783 = vmatpush1.bf16.msra.mxu0 %v470
    %784 = vmatprep.subr.bf16.mxu0 0
    %785 = vmatpush1.bf16.msra.mxu0 %v473
    %786 = vmatprep.subr.bf16.mxu0 0
    %787 = vmatpush1.bf16.msra.mxu0 %v476
    %788 = vmatprep.subr.bf16.mxu0 0
    %789 = vmatpush1.bf16.msra.mxu0 %v479
    %790 = vmatprep.subr.bf16.mxu0 0
    %791 = vmatpush1.bf16.msra.mxu0 %v482
    %792 = vmatprep.subr.bf16.mxu0 0
    %793 = vmatpush1.bf16.msra.mxu0 %v485
    %794 = vmatprep.subr.bf16.mxu0 0
    %795 = vmatpush1.bf16.msra.mxu0 %v488
    %796 = vmatprep.subr.bf16.mxu0 0
    %797 = vmatpush1.bf16.msra.mxu0 %v491
    %798 = vmatprep.subr.bf16.mxu0 0
    %799 = vmatpush1.bf16.msra.mxu0 0
    %800 = vmatprep.subr.bf16.mxu0 0
    %801 = vmatpush1.bf16.msra.mxu0 0
    %802 = vmatprep.subr.bf16.mxu0 0
    %803 = vmatpush1.bf16.msra.mxu0 0
    %804 = vmatprep.subr.bf16.mxu0 0
    %805 = vmatpush1.bf16.msra.mxu0 0
    %806 = vmatprep.subr.bf16.mxu0 0
    %807 = vmatpush1.bf16.msra.mxu0 0
    %808 = vmatprep.subr.bf16.mxu0 0
    %809 = vmatpush1.bf16.msra.mxu0 0
    %810 = vmatprep.subr.bf16.mxu0 0
    %811 = vmatpush1.bf16.msra.mxu0 0
    %812 = vmatprep.subr.bf16.mxu0 0
    %813 = vmatpush1.bf16.msra.mxu0 0
    %814 = vmatprep.mubr.bf16.mxu0 0
    %815 = vmatmul.mubr.bf16.gmra.mrb[0].mxu0 %v740
    %v816 = vpop.f32.mrb[0].mxu0
    %v817 = vadd.f32 0.0, %v816
    %v818 = vpop.f32.mrb[0].mxu0
    %v819 = vpop.f32.mrb[0].mxu0
    %v820 = vpop.f32.mrb[0].mxu0
    %821 = vdwg.mxu0
    %v822 = vadd.f32 %v737, %v776
    %v823 = vadd.f32 %v738, %v778
    %v824 = vxor.u32 %v822, 2147483648
    %v825 = vxor.u32 %v823, 2147483648
    %v826 = vmul.f32 %v824, 1.442695
    %v827 = vpow.pop %v826
    %v828 = vmul.f32 %v825, 1.442695
    %v829 = vpow.pop %v828
    %v830 = vadd.f32 %v827, 1.0
    %v831 = vadd.f32 %v829, 1.0
    %v832 = vrcp.pop %v830
    %v833 = vmul.f32 1.0, %v832
    %v834 = vrcp.pop %v831
    %v835 = vmul.f32 1.0, %v834
    %v836 = vadd.f32 %v817, %v615
    %v837 = vmul.f32 %v833, %v836
    %v838 = vadd.f32 %v739, %v837
    %v839 = vtanh.pop %v838
    %v840 = vsub.f32 1.0, %v835
    %v841 = vmul.f32 %v840, %v839
    %v842 = vmul.f32 %v835, %v733
    %v843 = vadd.f32 %v841, %v842
    %s844 = scalar_lea.vmem [#allocation3], 16
    %845 = vst [vmem:[%s844] sm:$0xff] %v843
    %s846 = scalar_lea.vmem [#allocation4], 72
    %v847 = vld [vmem:[%s846] sm:$0xff]
    %v848 = vld [vmem:[%s846 + $0x8] sm:$0xff]
    %v849 = vld [vmem:[%s846 + $0x10] sm:$0xff]
    %v850 = vpack.c.bf16 %v843, %v843
    %851 = vmatprep.subr.bf16.mxu0 %v469
    %852 = vmatpush1.bf16.msra.mxu0 %v468
    %853 = vmatprep.subr.bf16.mxu0 %v472
    %854 = vmatpush1.bf16.msra.mxu0 %v471
    %855 = vmatprep.subr.bf16.mxu0 %v475
    %856 = vmatpush1.bf16.msra.mxu0 %v474
    %857 = vmatprep.subr.bf16.mxu0 %v478
    %858 = vmatpush1.bf16.msra.mxu0 %v477
    %859 = vmatprep.subr.bf16.mxu0 %v481
    %860 = vmatpush1.bf16.msra.mxu0 %v480
    %861 = vmatprep.subr.bf16.mxu0 %v484
    %862 = vmatpush1.bf16.msra.mxu0 %v483
    %863 = vmatprep.subr.bf16.mxu0 %v487
    %864 = vmatpush1.bf16.msra.mxu0 %v486
    %865 = vmatprep.subr.bf16.mxu0 %v490
    %866 = vmatpush1.bf16.msra.mxu0 %v489
    %867 = vmatprep.subr.bf16.mxu0 0
    %868 = vmatpush1.bf16.msra.mxu0 0
    %869 = vmatprep.subr.bf16.mxu0 0
    %870 = vmatpush1.bf16.msra.mxu0 0
    %871 = vmatprep.subr.bf16.mxu0 0
    %872 = vmatpush1.bf16.msra.mxu0 0
    %873 = vmatprep.subr.bf16.mxu0 0
    %874 = vmatpush1.bf16.msra.mxu0 0
    %875 = vmatprep.subr.bf16.mxu0 0
    %876 = vmatpush1.bf16.msra.mxu0 0
    %877 = vmatprep.subr.bf16.mxu0 0
    %878 = vmatpush1.bf16.msra.mxu0 0
    %879 = vmatprep.subr.bf16.mxu0 0
    %880 = vmatpush1.bf16.msra.mxu0 0
    %881 = vmatprep.subr.bf16.mxu0 0
    %882 = vmatpush1.bf16.msra.mxu0 0
    %883 = vmatprep.mubr.bf16.mxu0 0
    %884 = vmatmul.mubr.bf16.gmra.mrb[0].mxu0 %v850
    %v885 = vpop.f32.mrb[0].mxu0
    %v886 = vadd.f32 0.0, %v885
    %v887 = vpop.f32.mrb[0].mxu0
    %v888 = vadd.f32 0.0, %v887
    %v889 = vpop.f32.mrb[0].mxu0
    %v890 = vpop.f32.mrb[0].mxu0
    %891 = vdwg.mxu0
    %892 = vmatprep.subr.bf16.mxu0 0
    %893 = vmatpush1.bf16.msra.mxu0 %v470
    %894 = vmatprep.subr.bf16.mxu0 0
    %895 = vmatpush1.bf16.msra.mxu0 %v473
    %896 = vmatprep.subr.bf16.mxu0 0
    %897 = vmatpush1.bf16.msra.mxu0 %v476
    %898 = vmatprep.subr.bf16.mxu0 0
    %899 = vmatpush1.bf16.msra.mxu0 %v479
    %900 = vmatprep.subr.bf16.mxu0 0
    %901 = vmatpush1.bf16.msra.mxu0 %v482
    %902 = vmatprep.subr.bf16.mxu0 0
    %903 = vmatpush1.bf16.msra.mxu0 %v485
    %904 = vmatprep.subr.bf16.mxu0 0
    %905 = vmatpush1.bf16.msra.mxu0 %v488
    %906 = vmatprep.subr.bf16.mxu0 0
    %907 = vmatpush1.bf16.msra.mxu0 %v491
    %908 = vmatprep.subr.bf16.mxu0 0
    %909 = vmatpush1.bf16.msra.mxu0 0
    %910 = vmatprep.subr.bf16.mxu0 0
    %911 = vmatpush1.bf16.msra.mxu0 0
    %912 = vmatprep.subr.bf16.mxu0 0
    %913 = vmatpush1.bf16.msra.mxu0 0
    %914 = vmatprep.subr.bf16.mxu0 0
    %915 = vmatpush1.bf16.msra.mxu0 0
    %916 = vmatprep.subr.bf16.mxu0 0
    %917 = vmatpush1.bf16.msra.mxu0 0
    %918 = vmatprep.subr.bf16.mxu0 0
    %919 = vmatpush1.bf16.msra.mxu0 0
    %920 = vmatprep.subr.bf16.mxu0 0
    %921 = vmatpush1.bf16.msra.mxu0 0
    %922 = vmatprep.subr.bf16.mxu0 0
    %923 = vmatpush1.bf16.msra.mxu0 0
    %924 = vmatprep.mubr.bf16.mxu0 0
    %925 = vmatmul.mubr.bf16.gmra.mrb[0].mxu0 %v850
    %v926 = vpop.f32.mrb[0].mxu0
    %v927 = vadd.f32 0.0, %v926
    %v928 = vpop.f32.mrb[0].mxu0
    %v929 = vpop.f32.mrb[0].mxu0
    %v930 = vpop.f32.mrb[0].mxu0
    %931 = vdwg.mxu0
    %v932 = vadd.f32 %v847, %v886
    %v933 = vadd.f32 %v848, %v888
    %v934 = vxor.u32 %v932, 2147483648
    %v935 = vxor.u32 %v933, 2147483648
    %v936 = vmul.f32 %v934, 1.442695
    %v937 = vpow.pop %v936
    %v938 = vmul.f32 %v935, 1.442695
    %v939 = vpow.pop %v938
    %v940 = vadd.f32 %v937, 1.0
    %v941 = vadd.f32 %v939, 1.0
    %v942 = vrcp.pop %v940
    %v943 = vmul.f32 1.0, %v942
    %v944 = vrcp.pop %v941
    %v945 = vmul.f32 1.0, %v944
    %v946 = vadd.f32 %v927, %v615
    %v947 = vmul.f32 %v943, %v946
    %v948 = vadd.f32 %v849, %v947
    %v949 = vtanh.pop %v948
    %v950 = vsub.f32 1.0, %v945
    %v951 = vmul.f32 %v950, %v949
    %v952 = vmul.f32 %v945, %v843
    %v953 = vadd.f32 %v951, %v952
    %s954 = scalar_lea.vmem [#allocation3], 24
    %955 = vst [vmem:[%s954] sm:$0xff] %v953
    %s956 = scalar_lea.vmem [#allocation4], 96
    %v957 = vld [vmem:[%s956] sm:$0xff]
    %v958 = vld [vmem:[%s956 + $0x8] sm:$0xff]
    %v959 = vld [vmem:[%s956 + $0x10] sm:$0xff]
    %v960 = vpack.c.bf16 %v953, %v953
    %961 = vmatprep.subr.bf16.mxu0 %v469
    %962 = vmatpush1.bf16.msra.mxu0 %v468
    %963 = vmatprep.subr.bf16.mxu0 %v472
    %964 = vmatpush1.bf16.msra.mxu0 %v471
    %965 = vmatprep.subr.bf16.mxu0 %v475
    %966 = vmatpush1.bf16.msra.mxu0 %v474
    %967 = vmatprep.subr.bf16.mxu0 %v478
    %968 = vmatpush1.bf16.msra.mxu0 %v477
    %969 = vmatprep.subr.bf16.mxu0 %v481
    %970 = vmatpush1.bf16.msra.mxu0 %v480
    %971 = vmatprep.subr.bf16.mxu0 %v484
    %972 = vmatpush1.bf16.msra.mxu0 %v483
    %973 = vmatprep.subr.bf16.mxu0 %v487
    %974 = vmatpush1.bf16.msra.mxu0 %v486
    %975 = vmatprep.subr.bf16.mxu0 %v490
    %976 = vmatpush1.bf16.msra.mxu0 %v489
    %977 = vmatprep.subr.bf16.mxu0 0
    %978 = vmatpush1.bf16.msra.mxu0 0
    %979 = vmatprep.subr.bf16.mxu0 0
    %980 = vmatpush1.bf16.msra.mxu0 0
    %981 = vmatprep.subr.bf16.mxu0 0
    %982 = vmatpush1.bf16.msra.mxu0 0
    %983 = vmatprep.subr.bf16.mxu0 0
    %984 = vmatpush1.bf16.msra.mxu0 0
    %985 = vmatprep.subr.bf16.mxu0 0
    %986 = vmatpush1.bf16.msra.mxu0 0
    %987 = vmatprep.subr.bf16.mxu0 0
    %988 = vmatpush1.bf16.msra.mxu0 0
    %989 = vmatprep.subr.bf16.mxu0 0
    %990 = vmatpush1.bf16.msra.mxu0 0
    %991 = vmatprep.subr.bf16.mxu0 0
    %992 = vmatpush1.bf16.msra.mxu0 0
    %993 = vmatprep.mubr.bf16.mxu0 0
    %994 = vmatmul.mubr.bf16.gmra.mrb[0].mxu0 %v960
    %v995 = vpop.f32.mrb[0].mxu0
    %v996 = vadd.f32 0.0, %v995
    %v997 = vpop.f32.mrb[0].mxu0
    %v998 = vadd.f32 0.0, %v997
    %v999 = vpop.f32.mrb[0].mxu0
    %v1000 = vpop.f32.mrb[0].mxu0
    %1001 = vdwg.mxu0
    %1002 = vmatprep.subr.bf16.mxu0 0
    %1003 = vmatpush1.bf16.msra.mxu0 %v470
    %1004 = vmatprep.subr.bf16.mxu0 0
    %1005 = vmatpush1.bf16.msra.mxu0 %v473
    %1006 = vmatprep.subr.bf16.mxu0 0
    %1007 = vmatpush1.bf16.msra.mxu0 %v476
    %1008 = vmatprep.subr.bf16.mxu0 0
    %1009 = vmatpush1.bf16.msra.mxu0 %v479
    %1010 = vmatprep.subr.bf16.mxu0 0
    %1011 = vmatpush1.bf16.msra.mxu0 %v482
    %1012 = vmatprep.subr.bf16.mxu0 0
    %1013 = vmatpush1.bf16.msra.mxu0 %v485
    %1014 = vmatprep.subr.bf16.mxu0 0
    %1015 = vmatpush1.bf16.msra.mxu0 %v488
    %1016 = vmatprep.subr.bf16.mxu0 0
    %1017 = vmatpush1.bf16.msra.mxu0 %v491
    %1018 = vmatprep.subr.bf16.mxu0 0
    %1019 = vmatpush1.bf16.msra.mxu0 0
    %1020 = vmatprep.subr.bf16.mxu0 0
    %1021 = vmatpush1.bf16.msra.mxu0 0
    %1022 = vmatprep.subr.bf16.mxu0 0
    %1023 = vmatpush1.bf16.msra.mxu0 0
    %1024 = vmatprep.subr.bf16.mxu0 0
    %1025 = vmatpush1.bf16.msra.mxu0 0
    %1026 = vmatprep.subr.bf16.mxu0 0
    %1027 = vmatpush1.bf16.msra.mxu0 0
    %1028 = vmatprep.subr.bf16.mxu0 0
    %1029 = vmatpush1.bf16.msra.mxu0 0
    %1030 = vmatprep.subr.bf16.mxu0 0
    %1031 = vmatpush1.bf16.msra.mxu0 0
    %1032 = vmatprep.subr.bf16.mxu0 0
    %1033 = vmatpush1.bf16.msra.mxu0 0
    %1034 = vmatprep.mubr.bf16.mxu0 0
    %1035 = vmatmul.mubr.bf16.gmra.mrb[0].mxu0 %v960
    %v1036 = vpop.f32.mrb[0].mxu0
    %v1037 = vadd.f32 0.0, %v1036
    %v1038 = vpop.f32.mrb[0].mxu0
    %v1039 = vpop.f32.mrb[0].mxu0
    %v1040 = vpop.f32.mrb[0].mxu0
    %1041 = vdwg.mxu0
    %v1042 = vadd.f32 %v957, %v996
    %v1043 = vadd.f32 %v958, %v998
    %v1044 = vxor.u32 %v1042, 2147483648
    %v1045 = vxor.u32 %v1043, 2147483648
    %v1046 = vmul.f32 %v1044, 1.442695
    %v1047 = vpow.pop %v1046
    %v1048 = vmul.f32 %v1045, 1.442695
    %v1049 = vpow.pop %v1048
    %v1050 = vadd.f32 %v1047, 1.0
    %v1051 = vadd.f32 %v1049, 1.0
    %v1052 = vrcp.pop %v1050
    %v1053 = vmul.f32 1.0, %v1052
    %v1054 = vrcp.pop %v1051
    %v1055 = vmul.f32 1.0, %v1054
    %v1056 = vadd.f32 %v1037, %v615
    %v1057 = vmul.f32 %v1053, %v1056
    %v1058 = vadd.f32 %v959, %v1057
    %v1059 = vtanh.pop %v1058
    %v1060 = vsub.f32 1.0, %v1055
    %v1061 = vmul.f32 %v1060, %v1059
    %v1062 = vmul.f32 %v1055, %v953
    %v1063 = vadd.f32 %v1061, %v1062
    %s1064 = scalar_lea.vmem [#allocation3], 32
    %1065 = vst [vmem:[%s1064] sm:$0xff] %v1063
    %s1066 = scalar_lea.vmem [#allocation4], 120
    %v1067 = vld [vmem:[%s1066] sm:$0xff]
    %v1068 = vld [vmem:[%s1066 + $0x8] sm:$0xff]
    %v1069 = vld [vmem:[%s1066 + $0x10] sm:$0xff]
    %v1070 = vpack.c.bf16 %v1063, %v1063
    %1071 = vmatprep.subr.bf16.mxu0 %v469
    %1072 = vmatpush1.bf16.msra.mxu0 %v468
    %1073 = vmatprep.subr.bf16.mxu0 %v472
    %1074 = vmatpush1.bf16.msra.mxu0 %v471
    %1075 = vmatprep.subr.bf16.mxu0 %v475
    %1076 = vmatpush1.bf16.msra.mxu0 %v474
    %1077 = vmatprep.subr.bf16.mxu0 %v478
    %1078 = vmatpush1.bf16.msra.mxu0 %v477
    %1079 = vmatprep.subr.bf16.mxu0 %v481
    %1080 = vmatpush1.bf16.msra.mxu0 %v480
    %1081 = vmatprep.subr.bf16.mxu0 %v484
    %1082 = vmatpush1.bf16.msra.mxu0 %v483
    %1083 = vmatprep.subr.bf16.mxu0 %v487
    %1084 = vmatpush1.bf16.msra.mxu0 %v486
    %1085 = vmatprep.subr.bf16.mxu0 %v490
    %1086 = vmatpush1.bf16.msra.mxu0 %v489
    %1087 = vmatprep.subr.bf16.mxu0 0
    %1088 = vmatpush1.bf16.msra.mxu0 0
    %1089 = vmatprep.subr.bf16.mxu0 0
    %1090 = vmatpush1.bf16.msra.mxu0 0
    %1091 = vmatprep.subr.bf16.mxu0 0
    %1092 = vmatpush1.bf16.msra.mxu0 0
    %1093 = vmatprep.subr.bf16.mxu0 0
    %1094 = vmatpush1.bf16.msra.mxu0 0
    %1095 = vmatprep.subr.bf16.mxu0 0
    %1096 = vmatpush1.bf16.msra.mxu0 0
    %1097 = vmatprep.subr.bf16.mxu0 0
    %1098 = vmatpush1.bf16.msra.mxu0 0
    %1099 = vmatprep.subr.bf16.mxu0 0
    %1100 = vmatpush1.bf16.msra.mxu0 0
    %1101 = vmatprep.subr.bf16.mxu0 0
    %1102 = vmatpush1.bf16.msra.mxu0 0
    %1103 = vmatprep.mubr.bf16.mxu0 0
    %1104 = vmatmul.mubr.bf16.gmra.mrb[0].mxu0 %v1070
    %v1105 = vpop.f32.mrb[0].mxu0
    %v1106 = vadd.f32 0.0, %v1105
    %v1107 = vpop.f32.mrb[0].mxu0
    %v1108 = vadd.f32 0.0, %v1107
    %v1109 = vpop.f32.mrb[0].mxu0
    %v1110 = vpop.f32.mrb[0].mxu0
    %1111 = vdwg.mxu0
    %1112 = vmatprep.subr.bf16.mxu0 0
    %1113 = vmatpush1.bf16.msra.mxu0 %v470
    %1114 = vmatprep.subr.bf16.mxu0 0
    %1115 = vmatpush1.bf16.msra.mxu0 %v473
    %1116 = vmatprep.subr.bf16.mxu0 0
    %1117 = vmatpush1.bf16.msra.mxu0 %v476
    %1118 = vmatprep.subr.bf16.mxu0 0
    %1119 = vmatpush1.bf16.msra.mxu0 %v479
    %1120 = vmatprep.subr.bf16.mxu0 0
    %1121 = vmatpush1.bf16.msra.mxu0 %v482
    %1122 = vmatprep.subr.bf16.mxu0 0
    %1123 = vmatpush1.bf16.msra.mxu0 %v485
    %1124 = vmatprep.subr.bf16.mxu0 0
    %1125 = vmatpush1.bf16.msra.mxu0 %v488
    %1126 = vmatprep.subr.bf16.mxu0 0
    %1127 = vmatpush1.bf16.msra.mxu0 %v491
    %1128 = vmatprep.subr.bf16.mxu0 0
    %1129 = vmatpush1.bf16.msra.mxu0 0
    %1130 = vmatprep.subr.bf16.mxu0 0
    %1131 = vmatpush1.bf16.msra.mxu0 0
    %1132 = vmatprep.subr.bf16.mxu0 0
    %1133 = vmatpush1.bf16.msra.mxu0 0
    %1134 = vmatprep.subr.bf16.mxu0 0
    %1135 = vmatpush1.bf16.msra.mxu0 0
    %1136 = vmatprep.subr.bf16.mxu0 0
    %1137 = vmatpush1.bf16.msra.mxu0 0
    %1138 = vmatprep.subr.bf16.mxu0 0
    %1139 = vmatpush1.bf16.msra.mxu0 0
    %1140 = vmatprep.subr.bf16.mxu0 0
    %1141 = vmatpush1.bf16.msra.mxu0 0
    %1142 = vmatprep.subr.bf16.mxu0 0
    %1143 = vmatpush1.bf16.msra.mxu0 0
    %1144 = vmatprep.mubr.bf16.mxu0 0
    %1145 = vmatmul.mubr.bf16.gmra.mrb[0].mxu0 %v1070
    %v1146 = vpop.f32.mrb[0].mxu0
    %v1147 = vadd.f32 0.0, %v1146
    %v1148 = vpop.f32.mrb[0].mxu0
    %v1149 = vpop.f32.mrb[0].mxu0
    %v1150 = vpop.f32.mrb[0].mxu0
    %1151 = vdwg.mxu0
    %v1152 = vadd.f32 %v1067, %v1106
    %v1153 = vadd.f32 %v1068, %v1108
    %v1154 = vxor.u32 %v1152, 2147483648
    %v1155 = vxor.u32 %v1153, 2147483648
    %v1156 = vmul.f32 %v1154, 1.442695
    %v1157 = vpow.pop %v1156
    %v1158 = vmul.f32 %v1155, 1.442695
    %v1159 = vpow.pop %v1158
    %v1160 = vadd.f32 %v1157, 1.0
    %v1161 = vadd.f32 %v1159, 1.0
    %v1162 = vrcp.pop %v1160
    %v1163 = vmul.f32 1.0, %v1162
    %v1164 = vrcp.pop %v1161
    %v1165 = vmul.f32 1.0, %v1164
    %v1166 = vadd.f32 %v1147, %v615
    %v1167 = vmul.f32 %v1163, %v1166
    %v1168 = vadd.f32 %v1069, %v1167
    %v1169 = vtanh.pop %v1168
    %v1170 = vsub.f32 1.0, %v1165
    %v1171 = vmul.f32 %v1170, %v1169
    %v1172 = vmul.f32 %v1165, %v1063
    %v1173 = vadd.f32 %v1171, %v1172
    %s1174 = scalar_lea.vmem [#allocation3], 40
    %1175 = vst [vmem:[%s1174] sm:$0xff] %v1173
    %s1176 = scalar_lea.vmem [#allocation4], 144
    %v1177 = vld [vmem:[%s1176] sm:$0xff]
    %v1178 = vld [vmem:[%s1176 + $0x8] sm:$0xff]
    %v1179 = vld [vmem:[%s1176 + $0x10] sm:$0xff]
    %v1180 = vpack.c.bf16 %v1173, %v1173
    %1181 = vmatprep.subr.bf16.mxu0 %v469
    %1182 = vmatpush1.bf16.msra.mxu0 %v468
    %1183 = vmatprep.subr.bf16.mxu0 %v472
    %1184 = vmatpush1.bf16.msra.mxu0 %v471
    %1185 = vmatprep.subr.bf16.mxu0 %v475
    %1186 = vmatpush1.bf16.msra.mxu0 %v474
    %1187 = vmatprep.subr.bf16.mxu0 %v478
    %1188 = vmatpush1.bf16.msra.mxu0 %v477
    %1189 = vmatprep.subr.bf16.mxu0 %v481
    %1190 = vmatpush1.bf16.msra.mxu0 %v480
    %1191 = vmatprep.subr.bf16.mxu0 %v484
    %1192 = vmatpush1.bf16.msra.mxu0 %v483
    %1193 = vmatprep.subr.bf16.mxu0 %v487
    %1194 = vmatpush1.bf16.msra.mxu0 %v486
    %1195 = vmatprep.subr.bf16.mxu0 %v490
    %1196 = vmatpush1.bf16.msra.mxu0 %v489
    %1197 = vmatprep.subr.bf16.mxu0 0
    %1198 = vmatpush1.bf16.msra.mxu0 0
    %1199 = vmatprep.subr.bf16.mxu0 0
    %1200 = vmatpush1.bf16.msra.mxu0 0
    %1201 = vmatprep.subr.bf16.mxu0 0
    %1202 = vmatpush1.bf16.msra.mxu0 0
    %1203 = vmatprep.subr.bf16.mxu0 0
    %1204 = vmatpush1.bf16.msra.mxu0 0
    %1205 = vmatprep.subr.bf16.mxu0 0
    %1206 = vmatpush1.bf16.msra.mxu0 0
    %1207 = vmatprep.subr.bf16.mxu0 0
    %1208 = vmatpush1.bf16.msra.mxu0 0
    %1209 = vmatprep.subr.bf16.mxu0 0
    %1210 = vmatpush1.bf16.msra.mxu0 0
    %1211 = vmatprep.subr.bf16.mxu0 0
    %1212 = vmatpush1.bf16.msra.mxu0 0
    %1213 = vmatprep.mubr.bf16.mxu0 0
    %1214 = vmatmul.mubr.bf16.gmra.mrb[0].mxu0 %v1180
    %v1215 = vpop.f32.mrb[0].mxu0
    %v1216 = vadd.f32 0.0, %v1215
    %v1217 = vpop.f32.mrb[0].mxu0
    %v1218 = vadd.f32 0.0, %v1217
    %v1219 = vpop.f32.mrb[0].mxu0
    %v1220 = vpop.f32.mrb[0].mxu0
    %1221 = vdwg.mxu0
    %1222 = vmatprep.subr.bf16.mxu0 0
    %1223 = vmatpush1.bf16.msra.mxu0 %v470
    %1224 = vmatprep.subr.bf16.mxu0 0
    %1225 = vmatpush1.bf16.msra.mxu0 %v473
    %1226 = vmatprep.subr.bf16.mxu0 0
    %1227 = vmatpush1.bf16.msra.mxu0 %v476
    %1228 = vmatprep.subr.bf16.mxu0 0
    %1229 = vmatpush1.bf16.msra.mxu0 %v479
    %1230 = vmatprep.subr.bf16.mxu0 0
    %1231 = vmatpush1.bf16.msra.mxu0 %v482
    %1232 = vmatprep.subr.bf16.mxu0 0
    %1233 = vmatpush1.bf16.msra.mxu0 %v485
    %1234 = vmatprep.subr.bf16.mxu0 0
    %1235 = vmatpush1.bf16.msra.mxu0 %v488
    %1236 = vmatprep.subr.bf16.mxu0 0
    %1237 = vmatpush1.bf16.msra.mxu0 %v491
    %1238 = vmatprep.subr.bf16.mxu0 0
    %1239 = vmatpush1.bf16.msra.mxu0 0
    %1240 = vmatprep.subr.bf16.mxu0 0
    %1241 = vmatpush1.bf16.msra.mxu0 0
    %1242 = vmatprep.subr.bf16.mxu0 0
    %1243 = vmatpush1.bf16.msra.mxu0 0
    %1244 = vmatprep.subr.bf16.mxu0 0
    %1245 = vmatpush1.bf16.msra.mxu0 0
    %1246 = vmatprep.subr.bf16.mxu0 0
    %1247 = vmatpush1.bf16.msra.mxu0 0
    %1248 = vmatprep.subr.bf16.mxu0 0
    %1249 = vmatpush1.bf16.msra.mxu0 0
    %1250 = vmatprep.subr.bf16.mxu0 0
    %1251 = vmatpush1.bf16.msra.mxu0 0
    %1252 = vmatprep.subr.bf16.mxu0 0
    %1253 = vmatpush1.bf16.msra.mxu0 0
    %1254 = vmatprep.mubr.bf16.mxu0 0
    %1255 = vmatmul.mubr.bf16.gmra.mrb[0].mxu0 %v1180
    %v1256 = vpop.f32.mrb[0].mxu0
    %v1257 = vadd.f32 0.0, %v1256
    %v1258 = vpop.f32.mrb[0].mxu0
    %v1259 = vpop.f32.mrb[0].mxu0
    %v1260 = vpop.f32.mrb[0].mxu0
    %1261 = vdwg.mxu0
    %v1262 = vadd.f32 %v1177, %v1216
    %v1263 = vadd.f32 %v1178, %v1218
    %v1264 = vxor.u32 %v1262, 2147483648
    %v1265 = vxor.u32 %v1263, 2147483648
    %v1266 = vmul.f32 %v1264, 1.442695
    %v1267 = vpow.pop %v1266
    %v1268 = vmul.f32 %v1265, 1.442695
    %v1269 = vpow.pop %v1268
    %v1270 = vadd.f32 %v1267, 1.0
    %v1271 = vadd.f32 %v1269, 1.0
    %v1272 = vrcp.pop %v1270
    %v1273 = vmul.f32 1.0, %v1272
    %v1274 = vrcp.pop %v1271
    %v1275 = vmul.f32 1.0, %v1274
    %v1276 = vadd.f32 %v1257, %v615
    %v1277 = vmul.f32 %v1273, %v1276
    %v1278 = vadd.f32 %v1179, %v1277
    %v1279 = vtanh.pop %v1278
    %v1280 = vsub.f32 1.0, %v1275
    %v1281 = vmul.f32 %v1280, %v1279
    %v1282 = vmul.f32 %v1275, %v1173
    %v1283 = vadd.f32 %v1281, %v1282
    %s1284 = scalar_lea.vmem [#allocation3], 48
    %1285 = vst [vmem:[%s1284] sm:$0xff] %v1283
    %s1286 = scalar_lea.vmem [#allocation4], 168
    %v1287 = vld [vmem:[%s1286] sm:$0xff]
    %v1288 = vld [vmem:[%s1286 + $0x8] sm:$0xff]
    %v1289 = vld [vmem:[%s1286 + $0x10] sm:$0xff]
    %v1290 = vpack.c.bf16 %v1283, %v1283
    %1291 = vmatprep.subr.bf16.mxu0 %v469
    %1292 = vmatpush1.bf16.msra.mxu0 %v468
    %1293 = vmatprep.subr.bf16.mxu0 %v472
    %1294 = vmatpush1.bf16.msra.mxu0 %v471
    %1295 = vmatprep.subr.bf16.mxu0 %v475
    %1296 = vmatpush1.bf16.msra.mxu0 %v474
    %1297 = vmatprep.subr.bf16.mxu0 %v478
    %1298 = vmatpush1.bf16.msra.mxu0 %v477
    %1299 = vmatprep.subr.bf16.mxu0 %v481
    %1300 = vmatpush1.bf16.msra.mxu0 %v480
    %1301 = vmatprep.subr.bf16.mxu0 %v484
    %1302 = vmatpush1.bf16.msra.mxu0 %v483
    %1303 = vmatprep.subr.bf16.mxu0 %v487
    %1304 = vmatpush1.bf16.msra.mxu0 %v486
    %1305 = vmatprep.subr.bf16.mxu0 %v490
    %1306 = vmatpush1.bf16.msra.mxu0 %v489
    %1307 = vmatprep.subr.bf16.mxu0 0
    %1308 = vmatpush1.bf16.msra.mxu0 0
    %1309 = vmatprep.subr.bf16.mxu0 0
    %1310 = vmatpush1.bf16.msra.mxu0 0
    %1311 = vmatprep.subr.bf16.mxu0 0
    %1312 = vmatpush1.bf16.msra.mxu0 0
    %1313 = vmatprep.subr.bf16.mxu0 0
    %1314 = vmatpush1.bf16.msra.mxu0 0
    %1315 = vmatprep.subr.bf16.mxu0 0
    %1316 = vmatpush1.bf16.msra.mxu0 0
    %1317 = vmatprep.subr.bf16.mxu0 0
    %1318 = vmatpush1.bf16.msra.mxu0 0
    %1319 = vmatprep.subr.bf16.mxu0 0
    %1320 = vmatpush1.bf16.msra.mxu0 0
    %1321 = vmatprep.subr.bf16.mxu0 0
    %1322 = vmatpush1.bf16.msra.mxu0 0
    %1323 = vmatprep.mubr.bf16.mxu0 0
    %1324 = vmatmul.mubr.bf16.gmra.mrb[0].mxu0 %v1290
    %v1325 = vpop.f32.mrb[0].mxu0
    %v1326 = vadd.f32 0.0, %v1325
    %v1327 = vpop.f32.mrb[0].mxu0
    %v1328 = vadd.f32 0.0, %v1327
    %v1329 = vpop.f32.mrb[0].mxu0
    %v1330 = vpop.f32.mrb[0].mxu0
    %1331 = vdwg.mxu0
    %1332 = vmatprep.subr.bf16.mxu0 0
    %1333 = vmatpush1.bf16.msra.mxu0 %v470
    %1334 = vmatprep.subr.bf16.mxu0 0
    %1335 = vmatpush1.bf16.msra.mxu0 %v473
    %1336 = vmatprep.subr.bf16.mxu0 0
    %1337 = vmatpush1.bf16.msra.mxu0 %v476
    %1338 = vmatprep.subr.bf16.mxu0 0
    %1339 = vmatpush1.bf16.msra.mxu0 %v479
    %1340 = vmatprep.subr.bf16.mxu0 0
    %1341 = vmatpush1.bf16.msra.mxu0 %v482
    %1342 = vmatprep.subr.bf16.mxu0 0
    %1343 = vmatpush1.bf16.msra.mxu0 %v485
    %1344 = vmatprep.subr.bf16.mxu0 0
    %1345 = vmatpush1.bf16.msra.mxu0 %v488
    %1346 = vmatprep.subr.bf16.mxu0 0
    %1347 = vmatpush1.bf16.msra.mxu0 %v491
    %1348 = vmatprep.subr.bf16.mxu0 0
    %1349 = vmatpush1.bf16.msra.mxu0 0
    %1350 = vmatprep.subr.bf16.mxu0 0
    %1351 = vmatpush1.bf16.msra.mxu0 0
    %1352 = vmatprep.subr.bf16.mxu0 0
    %1353 = vmatpush1.bf16.msra.mxu0 0
    %1354 = vmatprep.subr.bf16.mxu0 0
    %1355 = vmatpush1.bf16.msra.mxu0 0
    %1356 = vmatprep.subr.bf16.mxu0 0
    %1357 = vmatpush1.bf16.msra.mxu0 0
    %1358 = vmatprep.subr.bf16.mxu0 0
    %1359 = vmatpush1.bf16.msra.mxu0 0
    %1360 = vmatprep.subr.bf16.mxu0 0
    %1361 = vmatpush1.bf16.msra.mxu0 0
    %1362 = vmatprep.subr.bf16.mxu0 0
    %1363 = vmatpush1.bf16.msra.mxu0 0
    %1364 = vmatprep.mubr.bf16.mxu0 0
    %1365 = vmatmul.mubr.bf16.gmra.mrb[0].mxu0 %v1290
    %v1366 = vpop.f32.mrb[0].mxu0
    %v1367 = vadd.f32 0.0, %v1366
    %v1368 = vpop.f32.mrb[0].mxu0
    %v1369 = vpop.f32.mrb[0].mxu0
    %v1370 = vpop.f32.mrb[0].mxu0
    %1371 = vdwg.mxu0
    %v1372 = vadd.f32 %v1287, %v1326
    %v1373 = vadd.f32 %v1288, %v1328
    %v1374 = vxor.u32 %v1372, 2147483648
    %v1375 = vxor.u32 %v1373, 2147483648
    %v1376 = vmul.f32 %v1374, 1.442695
    %v1377 = vpow.pop %v1376
    %v1378 = vmul.f32 %v1375, 1.442695
    %v1379 = vpow.pop %v1378
    %v1380 = vadd.f32 %v1377, 1.0
    %v1381 = vadd.f32 %v1379, 1.0
    %v1382 = vrcp.pop %v1380
    %v1383 = vmul.f32 1.0, %v1382
    %v1384 = vrcp.pop %v1381
    %v1385 = vmul.f32 1.0, %v1384
    %v1386 = vadd.f32 %v1367, %v615
    %v1387 = vmul.f32 %v1383, %v1386
    %v1388 = vadd.f32 %v1289, %v1387
    %v1389 = vtanh.pop %v1388
    %v1390 = vsub.f32 1.0, %v1385
    %v1391 = vmul.f32 %v1390, %v1389
    %v1392 = vmul.f32 %v1385, %v1283
    %v1393 = vadd.f32 %v1391, %v1392
    %s1394 = scalar_lea.vmem [#allocation3], 56
    %1395 = vst [vmem:[%s1394] sm:$0xff] %v1393
    %1396 = vst [vmem:[#allocation2] sm:$0xff] %v1393
    %v1397 = vld [vmem:[#allocation11] sm:$0xff]
    %v1398 = vld [vmem:[#allocation11 + $0x8] sm:$0xf]
    %v1399 = vld [vmem:[#allocation11 + $0xc] sm:$0xff]
    %v1400 = vld [vmem:[#allocation11 + $0x14] sm:$0xf]
    %v1401 = vld [vmem:[#allocation11 + $0x18] sm:$0xff]
    %v1402 = vld [vmem:[#allocation11 + $0x20] sm:$0xf]
    %v1403 = vld [vmem:[#allocation11 + $0x24] sm:$0xff]
    %v1404 = vld [vmem:[#allocation11 + $0x2c] sm:$0xf]
    %v1405 = vld [vmem:[#allocation11 + $0x30] sm:$0xff]
    %v1406 = vld [vmem:[#allocation11 + $0x38] sm:$0xf]
    %v1407 = vld [vmem:[#allocation11 + $0x3c] sm:$0xff]
    %v1408 = vld [vmem:[#allocation11 + $0x44] sm:$0xf]
    %v1409 = vld [vmem:[#allocation11 + $0x48] sm:$0xff]
    %v1410 = vld [vmem:[#allocation11 + $0x50] sm:$0xf]
    %v1411 = vld [vmem:[#allocation11 + $0x54] sm:$0xff]
    %v1412 = vld [vmem:[#allocation11 + $0x5c] sm:$0xf]
    %v1413 = vld [vmem:[#allocation11 + $0x60] sm:$0xff]
    %v1414 = vld [vmem:[#allocation11 + $0x68] sm:$0xf]
    %v1415 = vld [vmem:[#allocation11 + $0x6c] sm:$0xff]
    %v1416 = vld [vmem:[#allocation11 + $0x74] sm:$0xf]
    %v1417 = vld [vmem:[#allocation11 + $0x78] sm:$0xff]
    %v1418 = vld [vmem:[#allocation11 + $0x80] sm:$0xf]
    %v1419 = vld [vmem:[#allocation11 + $0x84] sm:$0xff]
    %v1420 = vld [vmem:[#allocation11 + $0x8c] sm:$0xf]
    %v1421 = vld [vmem:[#allocation11 + $0x90] sm:$0xff]
    %v1422 = vld [vmem:[#allocation11 + $0x98] sm:$0xf]
    %v1423 = vld [vmem:[#allocation11 + $0x9c] sm:$0xff]
    %v1424 = vld [vmem:[#allocation11 + $0xa4] sm:$0xf]
    %v1425 = vld [vmem:[#allocation11 + $0xa8] sm:$0xff]
    %v1426 = vld [vmem:[#allocation11 + $0xb0] sm:$0xf]
    %v1427 = vld [vmem:[#allocation11 + $0xb4] sm:$0xff]
    %v1428 = vld [vmem:[#allocation11 + $0xbc] sm:$0xf]
    %v1429 = vld [vmem:[#allocation13] sm:$0xff]
    %v1430 = vld [vmem:[#allocation13 + $0x8] sm:$0xf]
    %v1431 = vld [vmem:[#allocation13 + $0xc] sm:$0xff]
    %v1432 = vld [vmem:[#allocation13 + $0x14] sm:$0xf]
    %v1433 = vld [vmem:[#allocation13 + $0x18] sm:$0xff]
    %v1434 = vld [vmem:[#allocation13 + $0x20] sm:$0xf]
    %v1435 = vld [vmem:[#allocation13 + $0x24] sm:$0xff]
    %v1436 = vld [vmem:[#allocation13 + $0x2c] sm:$0xf]
    %v1437 = vld [vmem:[#allocation13 + $0x30] sm:$0xff]
    %v1438 = vld [vmem:[#allocation13 + $0x38] sm:$0xf]
    %v1439 = vld [vmem:[#allocation13 + $0x3c] sm:$0xff]
    %v1440 = vld [vmem:[#allocation13 + $0x44] sm:$0xf]
    %v1441 = vld [vmem:[#allocation13 + $0x48] sm:$0xff]
    %v1442 = vld [vmem:[#allocation13 + $0x50] sm:$0xf]
    %v1443 = vld [vmem:[#allocation13 + $0x54] sm:$0xff]
    %v1444 = vld [vmem:[#allocation13 + $0x5c] sm:$0xf]
    %v1445 = vld [vmem:[#allocation13 + $0x60] sm:$0xff]
    %v1446 = vld [vmem:[#allocation13 + $0x68] sm:$0xf]
    %v1447 = vld [vmem:[#allocation13 + $0x6c] sm:$0xff]
    %v1448 = vld [vmem:[#allocation13 + $0x74] sm:$0xf]
    %v1449 = vld [vmem:[#allocation13 + $0x78] sm:$0xff]
    %v1450 = vld [vmem:[#allocation13 + $0x80] sm:$0xf]
    %v1451 = vld [vmem:[#allocation13 + $0x84] sm:$0xff]
    %v1452 = vld [vmem:[#allocation13 + $0x8c] sm:$0xf]
    %v1453 = vld [vmem:[#allocation13 + $0x90] sm:$0xff]
    %v1454 = vld [vmem:[#allocation13 + $0x98] sm:$0xf]
    %v1455 = vld [vmem:[#allocation13 + $0x9c] sm:$0xff]
    %v1456 = vld [vmem:[#allocation13 + $0xa4] sm:$0xf]
    %v1457 = vld [vmem:[#allocation13 + $0xa8] sm:$0xff]
    %v1458 = vld [vmem:[#allocation13 + $0xb0] sm:$0xf]
    %v1459 = vld [vmem:[#allocation13 + $0xb4] sm:$0xff]
    %v1460 = vld [vmem:[#allocation13 + $0xbc] sm:$0xf]
    %v1461 = vld [vmem:[%s7] sm:$0x7]
    %v1462 = vld [vmem:[%s8] sm:$0x1]
    %v1463 = vld [vmem:[#allocation3] sm:$0xff]
    %v1464 = vld [vmem:[#allocation3 + $0x8] sm:$0xff]
    %v1465 = vld [vmem:[#allocation3 + $0x10] sm:$0xff]
    %v1466 = vld [vmem:[#allocation3 + $0x18] sm:$0xff]
    %v1467 = vld [vmem:[#allocation3 + $0x20] sm:$0xff]
    %v1468 = vld [vmem:[#allocation3 + $0x28] sm:$0xff]
    %v1469 = vld [vmem:[#allocation3 + $0x30] sm:$0xff]
    %v1470 = vld [vmem:[#allocation3 + $0x38] sm:$0xff]
    %v1471 = vpack.c.bf16 %v1464, %v1463
    %v1472 = vpack.c.bf16 %v1466, %v1465
    %v1473 = vpack.c.bf16 %v1468, %v1467
    %v1474 = vpack.c.bf16 %v1470, %v1469
    %v1476 = vlaneseq
    %v1477 = vshrl.u32 %v1476, 7
    %v1478 = vsub.s32 0, %v1477
    %v1479 = vrot.slane %v1461, %v1478
    %v1480 = vlaneseq
    %v1481 = vshrl.u32 %v1480, 7
    %v1482 = vsub.s32 1, %v1481
    %v1483 = vrot.slane %v1461, %v1482
    %v1484 = vlaneseq
    %v1485 = vshrl.u32 %v1484, 7
    %v1486 = vsub.s32 2, %v1485
    %v1487 = vrot.slane %v1461, %v1486
    %v1523 = vunpack.c.l.b16 %v1397
    %v1524 = vunpack.c.h.b16 %v1397
    %v1525 = vunpack.c.l.b16 %v1398
    %v1526 = vunpack.c.l.b16 %v1399
    %v1527 = vunpack.c.h.b16 %v1399
    %v1528 = vunpack.c.l.b16 %v1400
    %v1529 = vunpack.c.l.b16 %v1401
    %v1530 = vunpack.c.h.b16 %v1401
    %v1531 = vunpack.c.l.b16 %v1402
    %v1532 = vunpack.c.l.b16 %v1403
    %v1533 = vunpack.c.h.b16 %v1403
    %v1534 = vunpack.c.l.b16 %v1404
    %v1535 = vunpack.c.l.b16 %v1405
    %v1536 = vunpack.c.h.b16 %v1405
    %v1537 = vunpack.c.l.b16 %v1406
    %v1538 = vunpack.c.l.b16 %v1407
    %v1539 = vunpack.c.h.b16 %v1407
    %v1540 = vunpack.c.l.b16 %v1408
    %v1541 = vunpack.c.l.b16 %v1409
    %v1542 = vunpack.c.h.b16 %v1409
    %v1543 = vunpack.c.l.b16 %v1410
    %v1544 = vunpack.c.l.b16 %v1411
    %v1545 = vunpack.c.h.b16 %v1411
    %v1546 = vunpack.c.l.b16 %v1412
    %v1547 = vunpack.c.l.b16 %v1413
    %v1548 = vunpack.c.h.b16 %v1413
    %v1549 = vunpack.c.l.b16 %v1414
    %v1550 = vunpack.c.l.b16 %v1415
    %v1551 = vunpack.c.h.b16 %v1415
    %v1552 = vunpack.c.l.b16 %v1416
    %v1553 = vunpack.c.l.b16 %v1417
    %v1554 = vunpack.c.h.b16 %v1417
    %v1555 = vunpack.c.l.b16 %v1418
    %v1556 = vunpack.c.l.b16 %v1419
    %v1557 = vunpack.c.h.b16 %v1419
    %v1558 = vunpack.c.l.b16 %v1420
    %v1559 = vunpack.c.l.b16 %v1421
    %v1560 = vunpack.c.h.b16 %v1421
    %v1561 = vunpack.c.l.b16 %v1422
    %v1562 = vunpack.c.l.b16 %v1423
    %v1563 = vunpack.c.h.b16 %v1423
    %v1564 = vunpack.c.l.b16 %v1424
    %v1565 = vunpack.c.l.b16 %v1425
    %v1566 = vunpack.c.h.b16 %v1425
    %v1567 = vunpack.c.l.b16 %v1426
    %v1568 = vunpack.c.l.b16 %v1427
    %v1569 = vunpack.c.h.b16 %v1427
    %v1570 = vunpack.c.l.b16 %v1428
    %v1571 = vpack.c.b16 %v1526, %v1523
    %v1572 = vpack.c.b16 %v1527, %v1524
    %v1573 = vpack.c.b16 %v1528, %v1525
    %v1574 = vpack.c.b16 %v1532, %v1529
    %v1575 = vpack.c.b16 %v1533, %v1530
    %v1576 = vpack.c.b16 %v1534, %v1531
    %v1577 = vpack.c.b16 %v1538, %v1535
    %v1578 = vpack.c.b16 %v1539, %v1536
    %v1579 = vpack.c.b16 %v1540, %v1537
    %v1580 = vpack.c.b16 %v1544, %v1541
    %v1581 = vpack.c.b16 %v1545, %v1542
    %v1582 = vpack.c.b16 %v1546, %v1543
    %v1583 = vpack.c.b16 %v1550, %v1547
    %v1584 = vpack.c.b16 %v1551, %v1548
    %v1585 = vpack.c.b16 %v1552, %v1549
    %v1586 = vpack.c.b16 %v1556, %v1553
    %v1587 = vpack.c.b16 %v1557, %v1554
    %v1588 = vpack.c.b16 %v1558, %v1555
    %v1589 = vpack.c.b16 %v1562, %v1559
    %v1590 = vpack.c.b16 %v1563, %v1560
    %v1591 = vpack.c.b16 %v1564, %v1561
    %v1592 = vpack.c.b16 %v1568, %v1565
    %v1593 = vpack.c.b16 %v1569, %v1566
    %v1594 = vpack.c.b16 %v1570, %v1567
    %1619 = vmatprep.subr.bf16.mxu0 %v1572
    %1620 = vmatpush1.bf16.msra.mxu0 %v1571
    %1621 = vmatprep.subr.bf16.mxu0 %v1575
    %1622 = vmatpush1.bf16.msra.mxu0 %v1574
    %1623 = vmatprep.subr.bf16.mxu0 %v1578
    %1624 = vmatpush1.bf16.msra.mxu0 %v1577
    %1625 = vmatprep.subr.bf16.mxu0 %v1581
    %1626 = vmatpush1.bf16.msra.mxu0 %v1580
    %1627 = vmatprep.subr.bf16.mxu0 %v1584
    %1628 = vmatpush1.bf16.msra.mxu0 %v1583
    %1629 = vmatprep.subr.bf16.mxu0 %v1587
    %1630 = vmatpush1.bf16.msra.mxu0 %v1586
    %1631 = vmatprep.subr.bf16.mxu0 %v1590
    %1632 = vmatpush1.bf16.msra.mxu0 %v1589
    %1633 = vmatprep.subr.bf16.mxu0 %v1593
    %1634 = vmatpush1.bf16.msra.mxu0 %v1592
    %1635 = vmatprep.subr.bf16.mxu0 0
    %1636 = vmatpush1.bf16.msra.mxu0 0
    %1637 = vmatprep.subr.bf16.mxu0 0
    %1638 = vmatpush1.bf16.msra.mxu0 0
    %1639 = vmatprep.subr.bf16.mxu0 0
    %1640 = vmatpush1.bf16.msra.mxu0 0
    %1641 = vmatprep.subr.bf16.mxu0 0
    %1642 = vmatpush1.bf16.msra.mxu0 0
    %1643 = vmatprep.subr.bf16.mxu0 0
    %1644 = vmatpush1.bf16.msra.mxu0 0
    %1645 = vmatprep.subr.bf16.mxu0 0
    %1646 = vmatpush1.bf16.msra.mxu0 0
    %1647 = vmatprep.subr.bf16.mxu0 0
    %1648 = vmatpush1.bf16.msra.mxu0 0
    %1649 = vmatprep.subr.bf16.mxu0 0
    %1650 = vmatpush1.bf16.msra.mxu0 0
    %1651 = vmatprep.mubr.bf16.mxu0 0
    %1652 = vmatmul.mubr.bf16.gmra.mrb[0].mxu0 %v1471
    %v1653 = vpop.f32.mrb[0].mxu0
    %v1654 = vadd.f32 %v1479, %v1653
    %v1655 = vpop.f32.mrb[0].mxu0
    %v1656 = vadd.f32 %v1483, %v1655
    %v1657 = vpop.f32.mrb[0].mxu0
    %v1658 = vadd.f32 %v1479, %v1657
    %v1659 = vpop.f32.mrb[0].mxu0
    %v1660 = vadd.f32 %v1483, %v1659
    %1661 = vmatprep.mubr.bf16.mxu0 0
    %1662 = vmatmul.mubr.bf16.gmra.mrb[0].mxu0 %v1472
    %v1663 = vpop.f32.mrb[0].mxu0
    %v1664 = vadd.f32 %v1479, %v1663
    %v1665 = vpop.f32.mrb[0].mxu0
    %v1666 = vadd.f32 %v1483, %v1665
    %v1667 = vpop.f32.mrb[0].mxu0
    %v1668 = vadd.f32 %v1479, %v1667
    %v1669 = vpop.f32.mrb[0].mxu0
    %v1670 = vadd.f32 %v1483, %v1669
    %1671 = vmatprep.mubr.bf16.mxu0 0
    %1672 = vmatmul.mubr.bf16.gmra.mrb[0].mxu0 %v1473
    %v1673 = vpop.f32.mrb[0].mxu0
    %v1674 = vadd.f32 %v1479, %v1673
    %v1675 = vpop.f32.mrb[0].mxu0
    %v1676 = vadd.f32 %v1483, %v1675
    %v1677 = vpop.f32.mrb[0].mxu0
    %v1678 = vadd.f32 %v1479, %v1677
    %v1679 = vpop.f32.mrb[0].mxu0
    %v1680 = vadd.f32 %v1483, %v1679
    %1681 = vmatprep.mubr.bf16.mxu0 0
    %1682 = vmatmul.mubr.bf16.gmra.mrb[0].mxu0 %v1474
    %v1683 = vpop.f32.mrb[0].mxu0
    %v1684 = vadd.f32 %v1479, %v1683
    %v1685 = vpop.f32.mrb[0].mxu0
    %v1686 = vadd.f32 %v1483, %v1685
    %v1687 = vpop.f32.mrb[0].mxu0
    %v1688 = vadd.f32 %v1479, %v1687
    %v1689 = vpop.f32.mrb[0].mxu0
    %v1690 = vadd.f32 %v1483, %v1689
    %1691 = vdwg.mxu0
    %1692 = vmatprep.subr.bf16.mxu0 0
    %1693 = vmatpush1.bf16.msra.mxu0 %v1573
    %1694 = vmatprep.subr.bf16.mxu0 0
    %1695 = vmatpush1.bf16.msra.mxu0 %v1576
    %1696 = vmatprep.subr.bf16.mxu0 0
    %1697 = vmatpush1.bf16.msra.mxu0 %v1579
    %1698 = vmatprep.subr.bf16.mxu0 0
    %1699 = vmatpush1.bf16.msra.mxu0 %v1582
    %1700 = vmatprep.subr.bf16.mxu0 0
    %1701 = vmatpush1.bf16.msra.mxu0 %v1585
    %1702 = vmatprep.subr.bf16.mxu0 0
    %1703 = vmatpush1.bf16.msra.mxu0 %v1588
    %1704 = vmatprep.subr.bf16.mxu0 0
    %1705 = vmatpush1.bf16.msra.mxu0 %v1591
    %1706 = vmatprep.subr.bf16.mxu0 0
    %1707 = vmatpush1.bf16.msra.mxu0 %v1594
    %1708 = vmatprep.subr.bf16.mxu0 0
    %1709 = vmatpush1.bf16.msra.mxu0 0
    %1710 = vmatprep.subr.bf16.mxu0 0
    %1711 = vmatpush1.bf16.msra.mxu0 0
    %1712 = vmatprep.subr.bf16.mxu0 0
    %1713 = vmatpush1.bf16.msra.mxu0 0
    %1714 = vmatprep.subr.bf16.mxu0 0
    %1715 = vmatpush1.bf16.msra.mxu0 0
    %1716 = vmatprep.subr.bf16.mxu0 0
    %1717 = vmatpush1.bf16.msra.mxu0 0
    %1718 = vmatprep.subr.bf16.mxu0 0
    %1719 = vmatpush1.bf16.msra.mxu0 0
    %1720 = vmatprep.subr.bf16.mxu0 0
    %1721 = vmatpush1.bf16.msra.mxu0 0
    %1722 = vmatprep.subr.bf16.mxu0 0
    %1723 = vmatpush1.bf16.msra.mxu0 0
    %1724 = vmatprep.mubr.bf16.mxu0 0
    %1725 = vmatmul.mubr.bf16.gmra.mrb[0].mxu0 %v1471
    %v1726 = vpop.f32.mrb[0].mxu0
    %v1727 = vadd.f32 %v1487, %v1726
    %v1728 = vpop.f32.mrb[0].mxu0
    %v1729 = vpop.f32.mrb[0].mxu0
    %v1730 = vadd.f32 %v1487, %v1729
    %v1731 = vpop.f32.mrb[0].mxu0
    %1732 = vmatprep.mubr.bf16.mxu0 0
    %1733 = vmatmul.mubr.bf16.gmra.mrb[0].mxu0 %v1472
    %v1734 = vpop.f32.mrb[0].mxu0
    %v1735 = vadd.f32 %v1487, %v1734
    %v1736 = vpop.f32.mrb[0].mxu0
    %v1737 = vpop.f32.mrb[0].mxu0
    %v1738 = vadd.f32 %v1487, %v1737
    %v1739 = vpop.f32.mrb[0].mxu0
    %1740 = vmatprep.mubr.bf16.mxu0 0
    %1741 = vmatmul.mubr.bf16.gmra.mrb[0].mxu0 %v1473
    %v1742 = vpop.f32.mrb[0].mxu0
    %v1743 = vadd.f32 %v1487, %v1742
    %v1744 = vpop.f32.mrb[0].mxu0
    %v1745 = vpop.f32.mrb[0].mxu0
    %v1746 = vadd.f32 %v1487, %v1745
    %v1747 = vpop.f32.mrb[0].mxu0
    %1748 = vmatprep.mubr.bf16.mxu0 0
    %1749 = vmatmul.mubr.bf16.gmra.mrb[0].mxu0 %v1474
    %v1750 = vpop.f32.mrb[0].mxu0
    %v1751 = vadd.f32 %v1487, %v1750
    %v1752 = vpop.f32.mrb[0].mxu0
    %v1753 = vpop.f32.mrb[0].mxu0
    %v1754 = vadd.f32 %v1487, %v1753
    %v1755 = vpop.f32.mrb[0].mxu0
    %1756 = vdwg.mxu0
    %1757 = vst [vmem:[#allocation4] sm:$0xff] %v1654
    %1758 = vst [vmem:[#allocation4 + $0x8] sm:$0xff] %v1656
    %1759 = vst [vmem:[#allocation4 + $0x10] sm:$0xff] %v1727
    %1760 = vst [vmem:[#allocation4 + $0x18] sm:$0xff] %v1658
    %1761 = vst [vmem:[#allocation4 + $0x20] sm:$0xff] %v1660
    %1762 = vst [vmem:[#allocation4 + $0x28] sm:$0xff] %v1730
    %1763 = vst [vmem:[#allocation4 + $0x30] sm:$0xff] %v1664
    %1764 = vst [vmem:[#allocation4 + $0x38] sm:$0xff] %v1666
    %1765 = vst [vmem:[#allocation4 + $0x40] sm:$0xff] %v1735
    %1766 = vst [vmem:[#allocation4 + $0x48] sm:$0xff] %v1668
    %1767 = vst [vmem:[#allocation4 + $0x50] sm:$0xff] %v1670
    %1768 = vst [vmem:[#allocation4 + $0x58] sm:$0xff] %v1738
    %1769 = vst [vmem:[#allocation4 + $0x60] sm:$0xff] %v1674
    %1770 = vst [vmem:[#allocation4 + $0x68] sm:$0xff] %v1676
    %1771 = vst [vmem:[#allocation4 + $0x70] sm:$0xff] %v1743
    %1772 = vst [vmem:[#allocation4 + $0x78] sm:$0xff] %v1678
    %1773 = vst [vmem:[#allocation4 + $0x80] sm:$0xff] %v1680
    %1774 = vst [vmem:[#allocation4 + $0x88] sm:$0xff] %v1746
    %1775 = vst [vmem:[#allocation4 + $0x90] sm:$0xff] %v1684
    %1776 = vst [vmem:[#allocation4 + $0x98] sm:$0xff] %v1686
    %1777 = vst [vmem:[#allocation4 + $0xa0] sm:$0xff] %v1751
    %1778 = vst [vmem:[#allocation4 + $0xa8] sm:$0xff] %v1688
    %1779 = vst [vmem:[#allocation4 + $0xb0] sm:$0xff] %v1690
    %1780 = vst [vmem:[#allocation4 + $0xb8] sm:$0xff] %v1754
    %s1781 = scalar_lea.vmem [#allocation2], 8
    %v1782 = vld [vmem:[%s1781] sm:$0xff]
    %v1783 = vld [vmem:[#allocation4] sm:$0xff]
    %v1784 = vld [vmem:[#allocation4 + $0x8] sm:$0xff]
    %v1785 = vld [vmem:[#allocation4 + $0x10] sm:$0xff]
    %v1786 = vpack.c.bf16 %v1782, %v1782
    %v1819 = vunpack.c.l.b16 %v1429
    %v1820 = vunpack.c.h.b16 %v1429
    %v1821 = vunpack.c.l.b16 %v1430
    %v1822 = vunpack.c.l.b16 %v1431
    %v1823 = vunpack.c.h.b16 %v1431
    %v1824 = vunpack.c.l.b16 %v1432
    %v1825 = vunpack.c.l.b16 %v1433
    %v1826 = vunpack.c.h.b16 %v1433
    %v1827 = vunpack.c.l.b16 %v1434
    %v1828 = vunpack.c.l.b16 %v1435
    %v1829 = vunpack.c.h.b16 %v1435
    %v1830 = vunpack.c.l.b16 %v1436
    %v1831 = vunpack.c.l.b16 %v1437
    %v1832 = vunpack.c.h.b16 %v1437
    %v1833 = vunpack.c.l.b16 %v1438
    %v1834 = vunpack.c.l.b16 %v1439
    %v1835 = vunpack.c.h.b16 %v1439
    %v1836 = vunpack.c.l.b16 %v1440
    %v1837 = vunpack.c.l.b16 %v1441
    %v1838 = vunpack.c.h.b16 %v1441
    %v1839 = vunpack.c.l.b16 %v1442
    %v1840 = vunpack.c.l.b16 %v1443
    %v1841 = vunpack.c.h.b16 %v1443
    %v1842 = vunpack.c.l.b16 %v1444
    %v1843 = vunpack.c.l.b16 %v1445
    %v1844 = vunpack.c.h.b16 %v1445
    %v1845 = vunpack.c.l.b16 %v1446
    %v1846 = vunpack.c.l.b16 %v1447
    %v1847 = vunpack.c.h.b16 %v1447
    %v1848 = vunpack.c.l.b16 %v1448
    %v1849 = vunpack.c.l.b16 %v1449
    %v1850 = vunpack.c.h.b16 %v1449
    %v1851 = vunpack.c.l.b16 %v1450
    %v1852 = vunpack.c.l.b16 %v1451
    %v1853 = vunpack.c.h.b16 %v1451
    %v1854 = vunpack.c.l.b16 %v1452
    %v1855 = vunpack.c.l.b16 %v1453
    %v1856 = vunpack.c.h.b16 %v1453
    %v1857 = vunpack.c.l.b16 %v1454
    %v1858 = vunpack.c.l.b16 %v1455
    %v1859 = vunpack.c.h.b16 %v1455
    %v1860 = vunpack.c.l.b16 %v1456
    %v1861 = vunpack.c.l.b16 %v1457
    %v1862 = vunpack.c.h.b16 %v1457
    %v1863 = vunpack.c.l.b16 %v1458
    %v1864 = vunpack.c.l.b16 %v1459
    %v1865 = vunpack.c.h.b16 %v1459
    %v1866 = vunpack.c.l.b16 %v1460
    %v1867 = vpack.c.b16 %v1822, %v1819
    %v1868 = vpack.c.b16 %v1823, %v1820
    %v1869 = vpack.c.b16 %v1824, %v1821
    %v1870 = vpack.c.b16 %v1828, %v1825
    %v1871 = vpack.c.b16 %v1829, %v1826
    %v1872 = vpack.c.b16 %v1830, %v1827
    %v1873 = vpack.c.b16 %v1834, %v1831
    %v1874 = vpack.c.b16 %v1835, %v1832
    %v1875 = vpack.c.b16 %v1836, %v1833
    %v1876 = vpack.c.b16 %v1840, %v1837
    %v1877 = vpack.c.b16 %v1841, %v1838
    %v1878 = vpack.c.b16 %v1842, %v1839
    %v1879 = vpack.c.b16 %v1846, %v1843
    %v1880 = vpack.c.b16 %v1847, %v1844
    %v1881 = vpack.c.b16 %v1848, %v1845
    %v1882 = vpack.c.b16 %v1852, %v1849
    %v1883 = vpack.c.b16 %v1853, %v1850
    %v1884 = vpack.c.b16 %v1854, %v1851
    %v1885 = vpack.c.b16 %v1858, %v1855
    %v1886 = vpack.c.b16 %v1859, %v1856
    %v1887 = vpack.c.b16 %v1860, %v1857
    %v1888 = vpack.c.b16 %v1864, %v1861
    %v1889 = vpack.c.b16 %v1865, %v1862
    %v1890 = vpack.c.b16 %v1866, %v1863
    %1915 = vmatprep.subr.bf16.mxu0 %v1868
    %1916 = vmatpush1.bf16.msra.mxu0 %v1867
    %1917 = vmatprep.subr.bf16.mxu0 %v1871
    %1918 = vmatpush1.bf16.msra.mxu0 %v1870
    %1919 = vmatprep.subr.bf16.mxu0 %v1874
    %1920 = vmatpush1.bf16.msra.mxu0 %v1873
    %1921 = vmatprep.subr.bf16.mxu0 %v1877
    %1922 = vmatpush1.bf16.msra.mxu0 %v1876
    %1923 = vmatprep.subr.bf16.mxu0 %v1880
    %1924 = vmatpush1.bf16.msra.mxu0 %v1879
    %1925 = vmatprep.subr.bf16.mxu0 %v1883
    %1926 = vmatpush1.bf16.msra.mxu0 %v1882
    %1927 = vmatprep.subr.bf16.mxu0 %v1886
    %1928 = vmatpush1.bf16.msra.mxu0 %v1885
    %1929 = vmatprep.subr.bf16.mxu0 %v1889
    %1930 = vmatpush1.bf16.msra.mxu0 %v1888
    %1931 = vmatprep.subr.bf16.mxu0 0
    %1932 = vmatpush1.bf16.msra.mxu0 0
    %1933 = vmatprep.subr.bf16.mxu0 0
    %1934 = vmatpush1.bf16.msra.mxu0 0
    %1935 = vmatprep.subr.bf16.mxu0 0
    %1936 = vmatpush1.bf16.msra.mxu0 0
    %1937 = vmatprep.subr.bf16.mxu0 0
    %1938 = vmatpush1.bf16.msra.mxu0 0
    %1939 = vmatprep.subr.bf16.mxu0 0
    %1940 = vmatpush1.bf16.msra.mxu0 0
    %1941 = vmatprep.subr.bf16.mxu0 0
    %1942 = vmatpush1.bf16.msra.mxu0 0
    %1943 = vmatprep.subr.bf16.mxu0 0
    %1944 = vmatpush1.bf16.msra.mxu0 0
    %1945 = vmatprep.subr.bf16.mxu0 0
    %1946 = vmatpush1.bf16.msra.mxu0 0
    %1947 = vmatprep.mubr.bf16.mxu0 0
    %1948 = vmatmul.mubr.bf16.gmra.mrb[0].mxu0 %v1786
    %v1949 = vpop.f32.mrb[0].mxu0
    %v1950 = vadd.f32 0.0, %v1949
    %v1951 = vpop.f32.mrb[0].mxu0
    %v1952 = vadd.f32 0.0, %v1951
    %v1953 = vpop.f32.mrb[0].mxu0
    %v1954 = vpop.f32.mrb[0].mxu0
    %1955 = vdwg.mxu0
    %1956 = vmatprep.subr.bf16.mxu0 0
    %1957 = vmatpush1.bf16.msra.mxu0 %v1869
    %1958 = vmatprep.subr.bf16.mxu0 0
    %1959 = vmatpush1.bf16.msra.mxu0 %v1872
    %1960 = vmatprep.subr.bf16.mxu0 0
    %1961 = vmatpush1.bf16.msra.mxu0 %v1875
    %1962 = vmatprep.subr.bf16.mxu0 0
    %1963 = vmatpush1.bf16.msra.mxu0 %v1878
    %1964 = vmatprep.subr.bf16.mxu0 0
    %1965 = vmatpush1.bf16.msra.mxu0 %v1881
    %1966 = vmatprep.subr.bf16.mxu0 0
    %1967 = vmatpush1.bf16.msra.mxu0 %v1884
    %1968 = vmatprep.subr.bf16.mxu0 0
    %1969 = vmatpush1.bf16.msra.mxu0 %v1887
    %1970 = vmatprep.subr.bf16.mxu0 0
    %1971 = vmatpush1.bf16.msra.mxu0 %v1890
    %1972 = vmatprep.subr.bf16.mxu0 0
    %1973 = vmatpush1.bf16.msra.mxu0 0
    %1974 = vmatprep.subr.bf16.mxu0 0
    %1975 = vmatpush1.bf16.msra.mxu0 0
    %1976 = vmatprep.subr.bf16.mxu0 0
    %1977 = vmatpush1.bf16.msra.mxu0 0
    %1978 = vmatprep.subr.bf16.mxu0 0
    %1979 = vmatpush1.bf16.msra.mxu0 0
    %1980 = vmatprep.subr.bf16.mxu0 0
    %1981 = vmatpush1.bf16.msra.mxu0 0
    %1982 = vmatprep.subr.bf16.mxu0 0
    %1983 = vmatpush1.bf16.msra.mxu0 0
    %1984 = vmatprep.subr.bf16.mxu0 0
    %1985 = vmatpush1.bf16.msra.mxu0 0
    %1986 = vmatprep.subr.bf16.mxu0 0
    %1987 = vmatpush1.bf16.msra.mxu0 0
    %1988 = vmatprep.mubr.bf16.mxu0 0
    %1989 = vmatmul.mubr.bf16.gmra.mrb[0].mxu0 %v1786
    %v1990 = vpop.f32.mrb[0].mxu0
    %v1991 = vadd.f32 0.0, %v1990
    %v1992 = vpop.f32.mrb[0].mxu0
    %v1993 = vpop.f32.mrb[0].mxu0
    %v1994 = vpop.f32.mrb[0].mxu0
    %1995 = vdwg.mxu0
    %v1996 = vadd.f32 %v1783, %v1950
    %v1997 = vadd.f32 %v1784, %v1952
    %v1998 = vxor.u32 %v1996, 2147483648
    %v1999 = vxor.u32 %v1997, 2147483648
    %v2000 = vmul.f32 %v1998, 1.442695
    %v2001 = vpow.pop %v2000
    %v2002 = vmul.f32 %v1999, 1.442695
    %v2003 = vpow.pop %v2002
    %v2004 = vadd.f32 %v2001, 1.0
    %v2005 = vadd.f32 %v2003, 1.0
    %v2006 = vrcp.pop %v2004
    %v2007 = vmul.f32 1.0, %v2006
    %v2008 = vrcp.pop %v2005
    %v2009 = vmul.f32 1.0, %v2008
    %v2011 = vlaneseq
    %v2012 = vshrl.u32 %v2011, 7
    %v2013 = vsub.s32 0, %v2012
    %v2014 = vrot.slane %v1462, %v2013
    %v2016 = vadd.f32 %v1991, %v2014
    %v2017 = vmul.f32 %v2007, %v2016
    %v2018 = vadd.f32 %v1785, %v2017
    %v2019 = vtanh.pop %v2018
    %v2020 = vsub.f32 1.0, %v2009
    %v2021 = vmul.f32 %v2020, %v2019
    %v2022 = vmul.f32 %v2009, %v1782
    %v2023 = vadd.f32 %v2021, %v2022
    %2024 = vst [vmem:[#allocation3] sm:$0xff] %v2023
    %v2025 = vld [vmem:[%s626] sm:$0xff]
    %v2026 = vld [vmem:[%s626 + $0x8] sm:$0xff]
    %v2027 = vld [vmem:[%s626 + $0x10] sm:$0xff]
    %v2028 = vpack.c.bf16 %v2023, %v2023
    %2029 = vmatprep.subr.bf16.mxu0 %v1868
    %2030 = vmatpush1.bf16.msra.mxu0 %v1867
    %2031 = vmatprep.subr.bf16.mxu0 %v1871
    %2032 = vmatpush1.bf16.msra.mxu0 %v1870
    %2033 = vmatprep.subr.bf16.mxu0 %v1874
    %2034 = vmatpush1.bf16.msra.mxu0 %v1873
    %2035 = vmatprep.subr.bf16.mxu0 %v1877
    %2036 = vmatpush1.bf16.msra.mxu0 %v1876
    %2037 = vmatprep.subr.bf16.mxu0 %v1880
    %2038 = vmatpush1.bf16.msra.mxu0 %v1879
    %2039 = vmatprep.subr.bf16.mxu0 %v1883
    %2040 = vmatpush1.bf16.msra.mxu0 %v1882
    %2041 = vmatprep.subr.bf16.mxu0 %v1886
    %2042 = vmatpush1.bf16.msra.mxu0 %v1885
    %2043 = vmatprep.subr.bf16.mxu0 %v1889
    %2044 = vmatpush1.bf16.msra.mxu0 %v1888
    %2045 = vmatprep.subr.bf16.mxu0 0
    %2046 = vmatpush1.bf16.msra.mxu0 0
    %2047 = vmatprep.subr.bf16.mxu0 0
    %2048 = vmatpush1.bf16.msra.mxu0 0
    %2049 = vmatprep.subr.bf16.mxu0 0
    %2050 = vmatpush1.bf16.msra.mxu0 0
    %2051 = vmatprep.subr.bf16.mxu0 0
    %2052 = vmatpush1.bf16.msra.mxu0 0
    %2053 = vmatprep.subr.bf16.mxu0 0
    %2054 = vmatpush1.bf16.msra.mxu0 0
    %2055 = vmatprep.subr.bf16.mxu0 0
    %2056 = vmatpush1.bf16.msra.mxu0 0
    %2057 = vmatprep.subr.bf16.mxu0 0
    %2058 = vmatpush1.bf16.msra.mxu0 0
    %2059 = vmatprep.subr.bf16.mxu0 0
    %2060 = vmatpush1.bf16.msra.mxu0 0
    %2061 = vmatprep.mubr.bf16.mxu0 0
    %2062 = vmatmul.mubr.bf16.gmra.mrb[0].mxu0 %v2028
    %v2063 = vpop.f32.mrb[0].mxu0
    %v2064 = vadd.f32 0.0, %v2063
    %v2065 = vpop.f32.mrb[0].mxu0
    %v2066 = vadd.f32 0.0, %v2065
    %v2067 = vpop.f32.mrb[0].mxu0
    %v2068 = vpop.f32.mrb[0].mxu0
    %2069 = vdwg.mxu0
    %2070 = vmatprep.subr.bf16.mxu0 0
    %2071 = vmatpush1.bf16.msra.mxu0 %v1869
    %2072 = vmatprep.subr.bf16.mxu0 0
    %2073 = vmatpush1.bf16.msra.mxu0 %v1872
    %2074 = vmatprep.subr.bf16.mxu0 0
    %2075 = vmatpush1.bf16.msra.mxu0 %v1875
    %2076 = vmatprep.subr.bf16.mxu0 0
    %2077 = vmatpush1.bf16.msra.mxu0 %v1878
    %2078 = vmatprep.subr.bf16.mxu0 0
    %2079 = vmatpush1.bf16.msra.mxu0 %v1881
    %2080 = vmatprep.subr.bf16.mxu0 0
    %2081 = vmatpush1.bf16.msra.mxu0 %v1884
    %2082 = vmatprep.subr.bf16.mxu0 0
    %2083 = vmatpush1.bf16.msra.mxu0 %v1887
    %2084 = vmatprep.subr.bf16.mxu0 0
    %2085 = vmatpush1.bf16.msra.mxu0 %v1890
    %2086 = vmatprep.subr.bf16.mxu0 0
    %2087 = vmatpush1.bf16.msra.mxu0 0
    %2088 = vmatprep.subr.bf16.mxu0 0
    %2089 = vmatpush1.bf16.msra.mxu0 0
    %2090 = vmatprep.subr.bf16.mxu0 0
    %2091 = vmatpush1.bf16.msra.mxu0 0
    %2092 = vmatprep.subr.bf16.mxu0 0
    %2093 = vmatpush1.bf16.msra.mxu0 0
    %2094 = vmatprep.subr.bf16.mxu0 0
    %2095 = vmatpush1.bf16.msra.mxu0 0
    %2096 = vmatprep.subr.bf16.mxu0 0
    %2097 = vmatpush1.bf16.msra.mxu0 0
    %2098 = vmatprep.subr.bf16.mxu0 0
    %2099 = vmatpush1.bf16.msra.mxu0 0
    %2100 = vmatprep.subr.bf16.mxu0 0
    %2101 = vmatpush1.bf16.msra.mxu0 0
    %2102 = vmatprep.mubr.bf16.mxu0 0
    %2103 = vmatmul.mubr.bf16.gmra.mrb[0].mxu0 %v2028
    %v2104 = vpop.f32.mrb[0].mxu0
    %v2105 = vadd.f32 0.0, %v2104
    %v2106 = vpop.f32.mrb[0].mxu0
    %v2107 = vpop.f32.mrb[0].mxu0
    %v2108 = vpop.f32.mrb[0].mxu0
    %2109 = vdwg.mxu0
    %v2110 = vadd.f32 %v2025, %v2064
    %v2111 = vadd.f32 %v2026, %v2066
    %v2112 = vxor.u32 %v2110, 2147483648
    %v2113 = vxor.u32 %v2111, 2147483648
    %v2114 = vmul.f32 %v2112, 1.442695
    %v2115 = vpow.pop %v2114
    %v2116 = vmul.f32 %v2113, 1.442695
    %v2117 = vpow.pop %v2116
    %v2118 = vadd.f32 %v2115, 1.0
    %v2119 = vadd.f32 %v2117, 1.0
    %v2120 = vrcp.pop %v2118
    %v2121 = vmul.f32 1.0, %v2120
    %v2122 = vrcp.pop %v2119
    %v2123 = vmul.f32 1.0, %v2122
    %v2124 = vadd.f32 %v2105, %v2014
    %v2125 = vmul.f32 %v2121, %v2124
    %v2126 = vadd.f32 %v2027, %v2125
    %v2127 = vtanh.pop %v2126
    %v2128 = vsub.f32 1.0, %v2123
    %v2129 = vmul.f32 %v2128, %v2127
    %v2130 = vmul.f32 %v2123, %v2023
    %v2131 = vadd.f32 %v2129, %v2130
    %2132 = vst [vmem:[%s734] sm:$0xff] %v2131
    %v2133 = vld [vmem:[%s736] sm:$0xff]
    %v2134 = vld [vmem:[%s736 + $0x8] sm:$0xff]
    %v2135 = vld [vmem:[%s736 + $0x10] sm:$0xff]
    %v2136 = vpack.c.bf16 %v2131, %v2131
    %2137 = vmatprep.subr.bf16.mxu0 %v1868
    %2138 = vmatpush1.bf16.msra.mxu0 %v1867
    %2139 = vmatprep.subr.bf16.mxu0 %v1871
    %2140 = vmatpush1.bf16.msra.mxu0 %v1870
    %2141 = vmatprep.subr.bf16.mxu0 %v1874
    %2142 = vmatpush1.bf16.msra.mxu0 %v1873
    %2143 = vmatprep.subr.bf16.mxu0 %v1877
    %2144 = vmatpush1.bf16.msra.mxu0 %v1876
    %2145 = vmatprep.subr.bf16.mxu0 %v1880
    %2146 = vmatpush1.bf16.msra.mxu0 %v1879
    %2147 = vmatprep.subr.bf16.mxu0 %v1883
    %2148 = vmatpush1.bf16.msra.mxu0 %v1882
    %2149 = vmatprep.subr.bf16.mxu0 %v1886
    %2150 = vmatpush1.bf16.msra.mxu0 %v1885
    %2151 = vmatprep.subr.bf16.mxu0 %v1889
    %2152 = vmatpush1.bf16.msra.mxu0 %v1888
    %2153 = vmatprep.subr.bf16.mxu0 0
    %2154 = vmatpush1.bf16.msra.mxu0 0
    %2155 = vmatprep.subr.bf16.mxu0 0
    %2156 = vmatpush1.bf16.msra.mxu0 0
    %2157 = vmatprep.subr.bf16.mxu0 0
    %2158 = vmatpush1.bf16.msra.mxu0 0
    %2159 = vmatprep.subr.bf16.mxu0 0
    %2160 = vmatpush1.bf16.msra.mxu0 0
    %2161 = vmatprep.subr.bf16.mxu0 0
    %2162 = vmatpush1.bf16.msra.mxu0 0
    %2163 = vmatprep.subr.bf16.mxu0 0
    %2164 = vmatpush1.bf16.msra.mxu0 0
    %2165 = vmatprep.subr.bf16.mxu0 0
    %2166 = vmatpush1.bf16.msra.mxu0 0
    %2167 = vmatprep.subr.bf16.mxu0 0
    %2168 = vmatpush1.bf16.msra.mxu0 0
    %2169 = vmatprep.mubr.bf16.mxu0 0
    %2170 = vmatmul.mubr.bf16.gmra.mrb[0].mxu0 %v2136
    %v2171 = vpop.f32.mrb[0].mxu0
    %v2172 = vadd.f32 0.0, %v2171
    %v2173 = vpop.f32.mrb[0].mxu0
    %v2174 = vadd.f32 0.0, %v2173
    %v2175 = vpop.f32.mrb[0].mxu0
    %v2176 = vpop.f32.mrb[0].mxu0
    %2177 = vdwg.mxu0
    %2178 = vmatprep.subr.bf16.mxu0 0
    %2179 = vmatpush1.bf16.msra.mxu0 %v1869
    %2180 = vmatprep.subr.bf16.mxu0 0
    %2181 = vmatpush1.bf16.msra.mxu0 %v1872
    %2182 = vmatprep.subr.bf16.mxu0 0
    %2183 = vmatpush1.bf16.msra.mxu0 %v1875
    %2184 = vmatprep.subr.bf16.mxu0 0
    %2185 = vmatpush1.bf16.msra.mxu0 %v1878
    %2186 = vmatprep.subr.bf16.mxu0 0
    %2187 = vmatpush1.bf16.msra.mxu0 %v1881
    %2188 = vmatprep.subr.bf16.mxu0 0
    %2189 = vmatpush1.bf16.msra.mxu0 %v1884
    %2190 = vmatprep.subr.bf16.mxu0 0
    %2191 = vmatpush1.bf16.msra.mxu0 %v1887
    %2192 = vmatprep.subr.bf16.mxu0 0
    %2193 = vmatpush1.bf16.msra.mxu0 %v1890
    %2194 = vmatprep.subr.bf16.mxu0 0
    %2195 = vmatpush1.bf16.msra.mxu0 0
    %2196 = vmatprep.subr.bf16.mxu0 0
    %2197 = vmatpush1.bf16.msra.mxu0 0
    %2198 = vmatprep.subr.bf16.mxu0 0
    %2199 = vmatpush1.bf16.msra.mxu0 0
    %2200 = vmatprep.subr.bf16.mxu0 0
    %2201 = vmatpush1.bf16.msra.mxu0 0
    %2202 = vmatprep.subr.bf16.mxu0 0
    %2203 = vmatpush1.bf16.msra.mxu0 0
    %2204 = vmatprep.subr.bf16.mxu0 0
    %2205 = vmatpush1.bf16.msra.mxu0 0
    %2206 = vmatprep.subr.bf16.mxu0 0
    %2207 = vmatpush1.bf16.msra.mxu0 0
    %2208 = vmatprep.subr.bf16.mxu0 0
    %2209 = vmatpush1.bf16.msra.mxu0 0
    %2210 = vmatprep.mubr.bf16.mxu0 0
    %2211 = vmatmul.mubr.bf16.gmra.mrb[0].mxu0 %v2136
    %v2212 = vpop.f32.mrb[0].mxu0
    %v2213 = vadd.f32 0.0, %v2212
    %v2214 = vpop.f32.mrb[0].mxu0
    %v2215 = vpop.f32.mrb[0].mxu0
    %v2216 = vpop.f32.mrb[0].mxu0
    %2217 = vdwg.mxu0
    %v2218 = vadd.f32 %v2133, %v2172
    %v2219 = vadd.f32 %v2134, %v2174
    %v2220 = vxor.u32 %v2218, 2147483648
    %v2221 = vxor.u32 %v2219, 2147483648
    %v2222 = vmul.f32 %v2220, 1.442695
    %v2223 = vpow.pop %v2222
    %v2224 = vmul.f32 %v2221, 1.442695
    %v2225 = vpow.pop %v2224
    %v2226 = vadd.f32 %v2223, 1.0
    %v2227 = vadd.f32 %v2225, 1.0
    %v2228 = vrcp.pop %v2226
    %v2229 = vmul.f32 1.0, %v2228
    %v2230 = vrcp.pop %v2227
    %v2231 = vmul.f32 1.0, %v2230
    %v2232 = vadd.f32 %v2213, %v2014
    %v2233 = vmul.f32 %v2229, %v2232
    %v2234 = vadd.f32 %v2135, %v2233
    %v2235 = vtanh.pop %v2234
    %v2236 = vsub.f32 1.0, %v2231
    %v2237 = vmul.f32 %v2236, %v2235
    %v2238 = vmul.f32 %v2231, %v2131
    %v2239 = vadd.f32 %v2237, %v2238
    %2240 = vst [vmem:[%s844] sm:$0xff] %v2239
    %v2241 = vld [vmem:[%s846] sm:$0xff]
    %v2242 = vld [vmem:[%s846 + $0x8] sm:$0xff]
    %v2243 = vld [vmem:[%s846 + $0x10] sm:$0xff]
    %v2244 = vpack.c.bf16 %v2239, %v2239
    %2245 = vmatprep.subr.bf16.mxu0 %v1868
    %2246 = vmatpush1.bf16.msra.mxu0 %v1867
    %2247 = vmatprep.subr.bf16.mxu0 %v1871
    %2248 = vmatpush1.bf16.msra.mxu0 %v1870
    %2249 = vmatprep.subr.bf16.mxu0 %v1874
    %2250 = vmatpush1.bf16.msra.mxu0 %v1873
    %2251 = vmatprep.subr.bf16.mxu0 %v1877
    %2252 = vmatpush1.bf16.msra.mxu0 %v1876
    %2253 = vmatprep.subr.bf16.mxu0 %v1880
    %2254 = vmatpush1.bf16.msra.mxu0 %v1879
    %2255 = vmatprep.subr.bf16.mxu0 %v1883
    %2256 = vmatpush1.bf16.msra.mxu0 %v1882
    %2257 = vmatprep.subr.bf16.mxu0 %v1886
    %2258 = vmatpush1.bf16.msra.mxu0 %v1885
    %2259 = vmatprep.subr.bf16.mxu0 %v1889
    %2260 = vmatpush1.bf16.msra.mxu0 %v1888
    %2261 = vmatprep.subr.bf16.mxu0 0
    %2262 = vmatpush1.bf16.msra.mxu0 0
    %2263 = vmatprep.subr.bf16.mxu0 0
    %2264 = vmatpush1.bf16.msra.mxu0 0
    %2265 = vmatprep.subr.bf16.mxu0 0
    %2266 = vmatpush1.bf16.msra.mxu0 0
    %2267 = vmatprep.subr.bf16.mxu0 0
    %2268 = vmatpush1.bf16.msra.mxu0 0
    %2269 = vmatprep.subr.bf16.mxu0 0
    %2270 = vmatpush1.bf16.msra.mxu0 0
    %2271 = vmatprep.subr.bf16.mxu0 0
    %2272 = vmatpush1.bf16.msra.mxu0 0
    %2273 = vmatprep.subr.bf16.mxu0 0
    %2274 = vmatpush1.bf16.msra.mxu0 0
    %2275 = vmatprep.subr.bf16.mxu0 0
    %2276 = vmatpush1.bf16.msra.mxu0 0
    %2277 = vmatprep.mubr.bf16.mxu0 0
    %2278 = vmatmul.mubr.bf16.gmra.mrb[0].mxu0 %v2244
    %v2279 = vpop.f32.mrb[0].mxu0
    %v2280 = vadd.f32 0.0, %v2279
    %v2281 = vpop.f32.mrb[0].mxu0
    %v2282 = vadd.f32 0.0, %v2281
    %v2283 = vpop.f32.mrb[0].mxu0
    %v2284 = vpop.f32.mrb[0].mxu0
    %2285 = vdwg.mxu0
    %2286 = vmatprep.subr.bf16.mxu0 0
    %2287 = vmatpush1.bf16.msra.mxu0 %v1869
    %2288 = vmatprep.subr.bf16.mxu0 0
    %2289 = vmatpush1.bf16.msra.mxu0 %v1872
    %2290 = vmatprep.subr.bf16.mxu0 0
    %2291 = vmatpush1.bf16.msra.mxu0 %v1875
    %2292 = vmatprep.subr.bf16.mxu0 0
    %2293 = vmatpush1.bf16.msra.mxu0 %v1878
    %2294 = vmatprep.subr.bf16.mxu0 0
    %2295 = vmatpush1.bf16.msra.mxu0 %v1881
    %2296 = vmatprep.subr.bf16.mxu0 0
    %2297 = vmatpush1.bf16.msra.mxu0 %v1884
    %2298 = vmatprep.subr.bf16.mxu0 0
    %2299 = vmatpush1.bf16.msra.mxu0 %v1887
    %2300 = vmatprep.subr.bf16.mxu0 0
    %2301 = vmatpush1.bf16.msra.mxu0 %v1890
    %2302 = vmatprep.subr.bf16.mxu0 0
    %2303 = vmatpush1.bf16.msra.mxu0 0
    %2304 = vmatprep.subr.bf16.mxu0 0
    %2305 = vmatpush1.bf16.msra.mxu0 0
    %2306 = vmatprep.subr.bf16.mxu0 0
    %2307 = vmatpush1.bf16.msra.mxu0 0
    %2308 = vmatprep.subr.bf16.mxu0 0
    %2309 = vmatpush1.bf16.msra.mxu0 0
    %2310 = vmatprep.subr.bf16.mxu0 0
    %2311 = vmatpush1.bf16.msra.mxu0 0
    %2312 = vmatprep.subr.bf16.mxu0 0
    %2313 = vmatpush1.bf16.msra.mxu0 0
    %2314 = vmatprep.subr.bf16.mxu0 0
    %2315 = vmatpush1.bf16.msra.mxu0 0
    %2316 = vmatprep.subr.bf16.mxu0 0
    %2317 = vmatpush1.bf16.msra.mxu0 0
    %2318 = vmatprep.mubr.bf16.mxu0 0
    %2319 = vmatmul.mubr.bf16.gmra.mrb[0].mxu0 %v2244
    %v2320 = vpop.f32.mrb[0].mxu0
    %v2321 = vadd.f32 0.0, %v2320
    %v2322 = vpop.f32.mrb[0].mxu0
    %v2323 = vpop.f32.mrb[0].mxu0
    %v2324 = vpop.f32.mrb[0].mxu0
    %2325 = vdwg.mxu0
    %v2326 = vadd.f32 %v2241, %v2280
    %v2327 = vadd.f32 %v2242, %v2282
    %v2328 = vxor.u32 %v2326, 2147483648
    %v2329 = vxor.u32 %v2327, 2147483648
    %v2330 = vmul.f32 %v2328, 1.442695
    %v2331 = vpow.pop %v2330
    %v2332 = vmul.f32 %v2329, 1.442695
    %v2333 = vpow.pop %v2332
    %v2334 = vadd.f32 %v2331, 1.0
    %v2335 = vadd.f32 %v2333, 1.0
    %v2336 = vrcp.pop %v2334
    %v2337 = vmul.f32 1.0, %v2336
    %v2338 = vrcp.pop %v2335
    %v2339 = vmul.f32 1.0, %v2338
    %v2340 = vadd.f32 %v2321, %v2014
    %v2341 = vmul.f32 %v2337, %v2340
    %v2342 = vadd.f32 %v2243, %v2341
    %v2343 = vtanh.pop %v2342
    %v2344 = vsub.f32 1.0, %v2339
    %v2345 = vmul.f32 %v2344, %v2343
    %v2346 = vmul.f32 %v2339, %v2239
    %v2347 = vadd.f32 %v2345, %v2346
    %2348 = vst [vmem:[%s954] sm:$0xff] %v2347
    %v2349 = vld [vmem:[%s956] sm:$0xff]
    %v2350 = vld [vmem:[%s956 + $0x8] sm:$0xff]
    %v2351 = vld [vmem:[%s956 + $0x10] sm:$0xff]
    %v2352 = vpack.c.bf16 %v2347, %v2347
    %2353 = vmatprep.subr.bf16.mxu0 %v1868
    %2354 = vmatpush1.bf16.msra.mxu0 %v1867
    %2355 = vmatprep.subr.bf16.mxu0 %v1871
    %2356 = vmatpush1.bf16.msra.mxu0 %v1870
    %2357 = vmatprep.subr.bf16.mxu0 %v1874
    %2358 = vmatpush1.bf16.msra.mxu0 %v1873
    %2359 = vmatprep.subr.bf16.mxu0 %v1877
    %2360 = vmatpush1.bf16.msra.mxu0 %v1876
    %2361 = vmatprep.subr.bf16.mxu0 %v1880
    %2362 = vmatpush1.bf16.msra.mxu0 %v1879
    %2363 = vmatprep.subr.bf16.mxu0 %v1883
    %2364 = vmatpush1.bf16.msra.mxu0 %v1882
    %2365 = vmatprep.subr.bf16.mxu0 %v1886
    %2366 = vmatpush1.bf16.msra.mxu0 %v1885
    %2367 = vmatprep.subr.bf16.mxu0 %v1889
    %2368 = vmatpush1.bf16.msra.mxu0 %v1888
    %2369 = vmatprep.subr.bf16.mxu0 0
    %2370 = vmatpush1.bf16.msra.mxu0 0
    %2371 = vmatprep.subr.bf16.mxu0 0
    %2372 = vmatpush1.bf16.msra.mxu0 0
    %2373 = vmatprep.subr.bf16.mxu0 0
    %2374 = vmatpush1.bf16.msra.mxu0 0
    %2375 = vmatprep.subr.bf16.mxu0 0
    %2376 = vmatpush1.bf16.msra.mxu0 0
    %2377 = vmatprep.subr.bf16.mxu0 0
    %2378 = vmatpush1.bf16.msra.mxu0 0
    %2379 = vmatprep.subr.bf16.mxu0 0
    %2380 = vmatpush1.bf16.msra.mxu0 0
    %2381 = vmatprep.subr.bf16.mxu0 0
    %2382 = vmatpush1.bf16.msra.mxu0 0
    %2383 = vmatprep.subr.bf16.mxu0 0
    %2384 = vmatpush1.bf16.msra.mxu0 0
    %2385 = vmatprep.mubr.bf16.mxu0 0
    %2386 = vmatmul.mubr.bf16.gmra.mrb[0].mxu0 %v2352
    %v2387 = vpop.f32.mrb[0].mxu0
    %v2388 = vadd.f32 0.0, %v2387
    %v2389 = vpop.f32.mrb[0].mxu0
    %v2390 = vadd.f32 0.0, %v2389
    %v2391 = vpop.f32.mrb[0].mxu0
    %v2392 = vpop.f32.mrb[0].mxu0
    %2393 = vdwg.mxu0
    %2394 = vmatprep.subr.bf16.mxu0 0
    %2395 = vmatpush1.bf16.msra.mxu0 %v1869
    %2396 = vmatprep.subr.bf16.mxu0 0
    %2397 = vmatpush1.bf16.msra.mxu0 %v1872
    %2398 = vmatprep.subr.bf16.mxu0 0
    %2399 = vmatpush1.bf16.msra.mxu0 %v1875
    %2400 = vmatprep.subr.bf16.mxu0 0
    %2401 = vmatpush1.bf16.msra.mxu0 %v1878
    %2402 = vmatprep.subr.bf16.mxu0 0
    %2403 = vmatpush1.bf16.msra.mxu0 %v1881
    %2404 = vmatprep.subr.bf16.mxu0 0
    %2405 = vmatpush1.bf16.msra.mxu0 %v1884
    %2406 = vmatprep.subr.bf16.mxu0 0
    %2407 = vmatpush1.bf16.msra.mxu0 %v1887
    %2408 = vmatprep.subr.bf16.mxu0 0
    %2409 = vmatpush1.bf16.msra.mxu0 %v1890
    %2410 = vmatprep.subr.bf16.mxu0 0
    %2411 = vmatpush1.bf16.msra.mxu0 0
    %2412 = vmatprep.subr.bf16.mxu0 0
    %2413 = vmatpush1.bf16.msra.mxu0 0
    %2414 = vmatprep.subr.bf16.mxu0 0
    %2415 = vmatpush1.bf16.msra.mxu0 0
    %2416 = vmatprep.subr.bf16.mxu0 0
    %2417 = vmatpush1.bf16.msra.mxu0 0
    %2418 = vmatprep.subr.bf16.mxu0 0
    %2419 = vmatpush1.bf16.msra.mxu0 0
    %2420 = vmatprep.subr.bf16.mxu0 0
    %2421 = vmatpush1.bf16.msra.mxu0 0
    %2422 = vmatprep.subr.bf16.mxu0 0
    %2423 = vmatpush1.bf16.msra.mxu0 0
    %2424 = vmatprep.subr.bf16.mxu0 0
    %2425 = vmatpush1.bf16.msra.mxu0 0
    %2426 = vmatprep.mubr.bf16.mxu0 0
    %2427 = vmatmul.mubr.bf16.gmra.mrb[0].mxu0 %v2352
    %v2428 = vpop.f32.mrb[0].mxu0
    %v2429 = vadd.f32 0.0, %v2428
    %v2430 = vpop.f32.mrb[0].mxu0
    %v2431 = vpop.f32.mrb[0].mxu0
    %v2432 = vpop.f32.mrb[0].mxu0
    %2433 = vdwg.mxu0
    %v2434 = vadd.f32 %v2349, %v2388
    %v2435 = vadd.f32 %v2350, %v2390
    %v2436 = vxor.u32 %v2434, 2147483648
    %v2437 = vxor.u32 %v2435, 2147483648
    %v2438 = vmul.f32 %v2436, 1.442695
    %v2439 = vpow.pop %v2438
    %v2440 = vmul.f32 %v2437, 1.442695
    %v2441 = vpow.pop %v2440
    %v2442 = vadd.f32 %v2439, 1.0
    %v2443 = vadd.f32 %v2441, 1.0
    %v2444 = vrcp.pop %v2442
    %v2445 = vmul.f32 1.0, %v2444
    %v2446 = vrcp.pop %v2443
    %v2447 = vmul.f32 1.0, %v2446
    %v2448 = vadd.f32 %v2429, %v2014
    %v2449 = vmul.f32 %v2445, %v2448
    %v2450 = vadd.f32 %v2351, %v2449
    %v2451 = vtanh.pop %v2450
    %v2452 = vsub.f32 1.0, %v2447
    %v2453 = vmul.f32 %v2452, %v2451
    %v2454 = vmul.f32 %v2447, %v2347
    %v2455 = vadd.f32 %v2453, %v2454
    %2456 = vst [vmem:[%s1064] sm:$0xff] %v2455
    %v2457 = vld [vmem:[%s1066] sm:$0xff]
    %v2458 = vld [vmem:[%s1066 + $0x8] sm:$0xff]
    %v2459 = vld [vmem:[%s1066 + $0x10] sm:$0xff]
    %v2460 = vpack.c.bf16 %v2455, %v2455
    %2461 = vmatprep.subr.bf16.mxu0 %v1868
    %2462 = vmatpush1.bf16.msra.mxu0 %v1867
    %2463 = vmatprep.subr.bf16.mxu0 %v1871
    %2464 = vmatpush1.bf16.msra.mxu0 %v1870
    %2465 = vmatprep.subr.bf16.mxu0 %v1874
    %2466 = vmatpush1.bf16.msra.mxu0 %v1873
    %2467 = vmatprep.subr.bf16.mxu0 %v1877
    %2468 = vmatpush1.bf16.msra.mxu0 %v1876
    %2469 = vmatprep.subr.bf16.mxu0 %v1880
    %2470 = vmatpush1.bf16.msra.mxu0 %v1879
    %2471 = vmatprep.subr.bf16.mxu0 %v1883
    %2472 = vmatpush1.bf16.msra.mxu0 %v1882
    %2473 = vmatprep.subr.bf16.mxu0 %v1886
    %2474 = vmatpush1.bf16.msra.mxu0 %v1885
    %2475 = vmatprep.subr.bf16.mxu0 %v1889
    %2476 = vmatpush1.bf16.msra.mxu0 %v1888
    %2477 = vmatprep.subr.bf16.mxu0 0
    %2478 = vmatpush1.bf16.msra.mxu0 0
    %2479 = vmatprep.subr.bf16.mxu0 0
    %2480 = vmatpush1.bf16.msra.mxu0 0
    %2481 = vmatprep.subr.bf16.mxu0 0
    %2482 = vmatpush1.bf16.msra.mxu0 0
    %2483 = vmatprep.subr.bf16.mxu0 0
    %2484 = vmatpush1.bf16.msra.mxu0 0
    %2485 = vmatprep.subr.bf16.mxu0 0
    %2486 = vmatpush1.bf16.msra.mxu0 0
    %2487 = vmatprep.subr.bf16.mxu0 0
    %2488 = vmatpush1.bf16.msra.mxu0 0
    %2489 = vmatprep.subr.bf16.mxu0 0
    %2490 = vmatpush1.bf16.msra.mxu0 0
    %2491 = vmatprep.subr.bf16.mxu0 0
    %2492 = vmatpush1.bf16.msra.mxu0 0
    %2493 = vmatprep.mubr.bf16.mxu0 0
    %2494 = vmatmul.mubr.bf16.gmra.mrb[0].mxu0 %v2460
    %v2495 = vpop.f32.mrb[0].mxu0
    %v2496 = vadd.f32 0.0, %v2495
    %v2497 = vpop.f32.mrb[0].mxu0
    %v2498 = vadd.f32 0.0, %v2497
    %v2499 = vpop.f32.mrb[0].mxu0
    %v2500 = vpop.f32.mrb[0].mxu0
    %2501 = vdwg.mxu0
    %2502 = vmatprep.subr.bf16.mxu0 0
    %2503 = vmatpush1.bf16.msra.mxu0 %v1869
    %2504 = vmatprep.subr.bf16.mxu0 0
    %2505 = vmatpush1.bf16.msra.mxu0 %v1872
    %2506 = vmatprep.subr.bf16.mxu0 0
    %2507 = vmatpush1.bf16.msra.mxu0 %v1875
    %2508 = vmatprep.subr.bf16.mxu0 0
    %2509 = vmatpush1.bf16.msra.mxu0 %v1878
    %2510 = vmatprep.subr.bf16.mxu0 0
    %2511 = vmatpush1.bf16.msra.mxu0 %v1881
    %2512 = vmatprep.subr.bf16.mxu0 0
    %2513 = vmatpush1.bf16.msra.mxu0 %v1884
    %2514 = vmatprep.subr.bf16.mxu0 0
    %2515 = vmatpush1.bf16.msra.mxu0 %v1887
    %2516 = vmatprep.subr.bf16.mxu0 0
    %2517 = vmatpush1.bf16.msra.mxu0 %v1890
    %2518 = vmatprep.subr.bf16.mxu0 0
    %2519 = vmatpush1.bf16.msra.mxu0 0
    %2520 = vmatprep.subr.bf16.mxu0 0
    %2521 = vmatpush1.bf16.msra.mxu0 0
    %2522 = vmatprep.subr.bf16.mxu0 0
    %2523 = vmatpush1.bf16.msra.mxu0 0
    %2524 = vmatprep.subr.bf16.mxu0 0
    %2525 = vmatpush1.bf16.msra.mxu0 0
    %2526 = vmatprep.subr.bf16.mxu0 0
    %2527 = vmatpush1.bf16.msra.mxu0 0
    %2528 = vmatprep.subr.bf16.mxu0 0
    %2529 = vmatpush1.bf16.msra.mxu0 0
    %2530 = vmatprep.subr.bf16.mxu0 0
    %2531 = vmatpush1.bf16.msra.mxu0 0
    %2532 = vmatprep.subr.bf16.mxu0 0
    %2533 = vmatpush1.bf16.msra.mxu0 0
    %2534 = vmatprep.mubr.bf16.mxu0 0
    %2535 = vmatmul.mubr.bf16.gmra.mrb[0].mxu0 %v2460
    %v2536 = vpop.f32.mrb[0].mxu0
    %v2537 = vadd.f32 0.0, %v2536
    %v2538 = vpop.f32.mrb[0].mxu0
    %v2539 = vpop.f32.mrb[0].mxu0
    %v2540 = vpop.f32.mrb[0].mxu0
    %2541 = vdwg.mxu0
    %v2542 = vadd.f32 %v2457, %v2496
    %v2543 = vadd.f32 %v2458, %v2498
    %v2544 = vxor.u32 %v2542, 2147483648
    %v2545 = vxor.u32 %v2543, 2147483648
    %v2546 = vmul.f32 %v2544, 1.442695
    %v2547 = vpow.pop %v2546
    %v2548 = vmul.f32 %v2545, 1.442695
    %v2549 = vpow.pop %v2548
    %v2550 = vadd.f32 %v2547, 1.0
    %v2551 = vadd.f32 %v2549, 1.0
    %v2552 = vrcp.pop %v2550
    %v2553 = vmul.f32 1.0, %v2552
    %v2554 = vrcp.pop %v2551
    %v2555 = vmul.f32 1.0, %v2554
    %v2556 = vadd.f32 %v2537, %v2014
    %v2557 = vmul.f32 %v2553, %v2556
    %v2558 = vadd.f32 %v2459, %v2557
    %v2559 = vtanh.pop %v2558
    %v2560 = vsub.f32 1.0, %v2555
    %v2561 = vmul.f32 %v2560, %v2559
    %v2562 = vmul.f32 %v2555, %v2455
    %v2563 = vadd.f32 %v2561, %v2562
    %2564 = vst [vmem:[%s1174] sm:$0xff] %v2563
    %v2565 = vld [vmem:[%s1176] sm:$0xff]
    %v2566 = vld [vmem:[%s1176 + $0x8] sm:$0xff]
    %v2567 = vld [vmem:[%s1176 + $0x10] sm:$0xff]
    %v2568 = vpack.c.bf16 %v2563, %v2563
    %2569 = vmatprep.subr.bf16.mxu0 %v1868
    %2570 = vmatpush1.bf16.msra.mxu0 %v1867
    %2571 = vmatprep.subr.bf16.mxu0 %v1871
    %2572 = vmatpush1.bf16.msra.mxu0 %v1870
    %2573 = vmatprep.subr.bf16.mxu0 %v1874
    %2574 = vmatpush1.bf16.msra.mxu0 %v1873
    %2575 = vmatprep.subr.bf16.mxu0 %v1877
    %2576 = vmatpush1.bf16.msra.mxu0 %v1876
    %2577 = vmatprep.subr.bf16.mxu0 %v1880
    %2578 = vmatpush1.bf16.msra.mxu0 %v1879
    %2579 = vmatprep.subr.bf16.mxu0 %v1883
    %2580 = vmatpush1.bf16.msra.mxu0 %v1882
    %2581 = vmatprep.subr.bf16.mxu0 %v1886
    %2582 = vmatpush1.bf16.msra.mxu0 %v1885
    %2583 = vmatprep.subr.bf16.mxu0 %v1889
    %2584 = vmatpush1.bf16.msra.mxu0 %v1888
    %2585 = vmatprep.subr.bf16.mxu0 0
    %2586 = vmatpush1.bf16.msra.mxu0 0
    %2587 = vmatprep.subr.bf16.mxu0 0
    %2588 = vmatpush1.bf16.msra.mxu0 0
    %2589 = vmatprep.subr.bf16.mxu0 0
    %2590 = vmatpush1.bf16.msra.mxu0 0
    %2591 = vmatprep.subr.bf16.mxu0 0
    %2592 = vmatpush1.bf16.msra.mxu0 0
    %2593 = vmatprep.subr.bf16.mxu0 0
    %2594 = vmatpush1.bf16.msra.mxu0 0
    %2595 = vmatprep.subr.bf16.mxu0 0
    %2596 = vmatpush1.bf16.msra.mxu0 0
    %2597 = vmatprep.subr.bf16.mxu0 0
    %2598 = vmatpush1.bf16.msra.mxu0 0
    %2599 = vmatprep.subr.bf16.mxu0 0
    %2600 = vmatpush1.bf16.msra.mxu0 0
    %2601 = vmatprep.mubr.bf16.mxu0 0
    %2602 = vmatmul.mubr.bf16.gmra.mrb[0].mxu0 %v2568
    %v2603 = vpop.f32.mrb[0].mxu0
    %v2604 = vadd.f32 0.0, %v2603
    %v2605 = vpop.f32.mrb[0].mxu0
    %v2606 = vadd.f32 0.0, %v2605
    %v2607 = vpop.f32.mrb[0].mxu0
    %v2608 = vpop.f32.mrb[0].mxu0
    %2609 = vdwg.mxu0
    %2610 = vmatprep.subr.bf16.mxu0 0
    %2611 = vmatpush1.bf16.msra.mxu0 %v1869
    %2612 = vmatprep.subr.bf16.mxu0 0
    %2613 = vmatpush1.bf16.msra.mxu0 %v1872
    %2614 = vmatprep.subr.bf16.mxu0 0
    %2615 = vmatpush1.bf16.msra.mxu0 %v1875
    %2616 = vmatprep.subr.bf16.mxu0 0
    %2617 = vmatpush1.bf16.msra.mxu0 %v1878
    %2618 = vmatprep.subr.bf16.mxu0 0
    %2619 = vmatpush1.bf16.msra.mxu0 %v1881
    %2620 = vmatprep.subr.bf16.mxu0 0
    %2621 = vmatpush1.bf16.msra.mxu0 %v1884
    %2622 = vmatprep.subr.bf16.mxu0 0
    %2623 = vmatpush1.bf16.msra.mxu0 %v1887
    %2624 = vmatprep.subr.bf16.mxu0 0
    %2625 = vmatpush1.bf16.msra.mxu0 %v1890
    %2626 = vmatprep.subr.bf16.mxu0 0
    %2627 = vmatpush1.bf16.msra.mxu0 0
    %2628 = vmatprep.subr.bf16.mxu0 0
    %2629 = vmatpush1.bf16.msra.mxu0 0
    %2630 = vmatprep.subr.bf16.mxu0 0
    %2631 = vmatpush1.bf16.msra.mxu0 0
    %2632 = vmatprep.subr.bf16.mxu0 0
    %2633 = vmatpush1.bf16.msra.mxu0 0
    %2634 = vmatprep.subr.bf16.mxu0 0
    %2635 = vmatpush1.bf16.msra.mxu0 0
    %2636 = vmatprep.subr.bf16.mxu0 0
    %2637 = vmatpush1.bf16.msra.mxu0 0
    %2638 = vmatprep.subr.bf16.mxu0 0
    %2639 = vmatpush1.bf16.msra.mxu0 0
    %2640 = vmatprep.subr.bf16.mxu0 0
    %2641 = vmatpush1.bf16.msra.mxu0 0
    %2642 = vmatprep.mubr.bf16.mxu0 0
    %2643 = vmatmul.mubr.bf16.gmra.mrb[0].mxu0 %v2568
    %v2644 = vpop.f32.mrb[0].mxu0
    %v2645 = vadd.f32 0.0, %v2644
    %v2646 = vpop.f32.mrb[0].mxu0
    %v2647 = vpop.f32.mrb[0].mxu0
    %v2648 = vpop.f32.mrb[0].mxu0
    %2649 = vdwg.mxu0
    %v2650 = vadd.f32 %v2565, %v2604
    %v2651 = vadd.f32 %v2566, %v2606
    %v2652 = vxor.u32 %v2650, 2147483648
    %v2653 = vxor.u32 %v2651, 2147483648
    %v2654 = vmul.f32 %v2652, 1.442695
    %v2655 = vpow.pop %v2654
    %v2656 = vmul.f32 %v2653, 1.442695
    %v2657 = vpow.pop %v2656
    %v2658 = vadd.f32 %v2655, 1.0
    %v2659 = vadd.f32 %v2657, 1.0
    %v2660 = vrcp.pop %v2658
    %v2661 = vmul.f32 1.0, %v2660
    %v2662 = vrcp.pop %v2659
    %v2663 = vmul.f32 1.0, %v2662
    %v2664 = vadd.f32 %v2645, %v2014
    %v2665 = vmul.f32 %v2661, %v2664
    %v2666 = vadd.f32 %v2567, %v2665
    %v2667 = vtanh.pop %v2666
    %v2668 = vsub.f32 1.0, %v2663
    %v2669 = vmul.f32 %v2668, %v2667
    %v2670 = vmul.f32 %v2663, %v2563
    %v2671 = vadd.f32 %v2669, %v2670
    %2672 = vst [vmem:[%s1284] sm:$0xff] %v2671
    %v2673 = vld [vmem:[%s1286] sm:$0xff]
    %v2674 = vld [vmem:[%s1286 + $0x8] sm:$0xff]
    %v2675 = vld [vmem:[%s1286 + $0x10] sm:$0xff]
    %v2676 = vpack.c.bf16 %v2671, %v2671
    %2677 = vmatprep.subr.bf16.mxu0 %v1868
    %2678 = vmatpush1.bf16.msra.mxu0 %v1867
    %2679 = vmatprep.subr.bf16.mxu0 %v1871
    %2680 = vmatpush1.bf16.msra.mxu0 %v1870
    %2681 = vmatprep.subr.bf16.mxu0 %v1874
    %2682 = vmatpush1.bf16.msra.mxu0 %v1873
    %2683 = vmatprep.subr.bf16.mxu0 %v1877
    %2684 = vmatpush1.bf16.msra.mxu0 %v1876
    %2685 = vmatprep.subr.bf16.mxu0 %v1880
    %2686 = vmatpush1.bf16.msra.mxu0 %v1879
    %2687 = vmatprep.subr.bf16.mxu0 %v1883
    %2688 = vmatpush1.bf16.msra.mxu0 %v1882
    %2689 = vmatprep.subr.bf16.mxu0 %v1886
    %2690 = vmatpush1.bf16.msra.mxu0 %v1885
    %2691 = vmatprep.subr.bf16.mxu0 %v1889
    %2692 = vmatpush1.bf16.msra.mxu0 %v1888
    %2693 = vmatprep.subr.bf16.mxu0 0
    %2694 = vmatpush1.bf16.msra.mxu0 0
    %2695 = vmatprep.subr.bf16.mxu0 0
    %2696 = vmatpush1.bf16.msra.mxu0 0
    %2697 = vmatprep.subr.bf16.mxu0 0
    %2698 = vmatpush1.bf16.msra.mxu0 0
    %2699 = vmatprep.subr.bf16.mxu0 0
    %2700 = vmatpush1.bf16.msra.mxu0 0
    %2701 = vmatprep.subr.bf16.mxu0 0
    %2702 = vmatpush1.bf16.msra.mxu0 0
    %2703 = vmatprep.subr.bf16.mxu0 0
    %2704 = vmatpush1.bf16.msra.mxu0 0
    %2705 = vmatprep.subr.bf16.mxu0 0
    %2706 = vmatpush1.bf16.msra.mxu0 0
    %2707 = vmatprep.subr.bf16.mxu0 0
    %2708 = vmatpush1.bf16.msra.mxu0 0
    %2709 = vmatprep.mubr.bf16.mxu0 0
    %2710 = vmatmul.mubr.bf16.gmra.mrb[0].mxu0 %v2676
    %v2711 = vpop.f32.mrb[0].mxu0
    %v2712 = vadd.f32 0.0, %v2711
    %v2713 = vpop.f32.mrb[0].mxu0
    %v2714 = vadd.f32 0.0, %v2713
    %v2715 = vpop.f32.mrb[0].mxu0
    %v2716 = vpop.f32.mrb[0].mxu0
    %2717 = vdwg.mxu0
    %2718 = vmatprep.subr.bf16.mxu0 0
    %2719 = vmatpush1.bf16.msra.mxu0 %v1869
    %2720 = vmatprep.subr.bf16.mxu0 0
    %2721 = vmatpush1.bf16.msra.mxu0 %v1872
    %2722 = vmatprep.subr.bf16.mxu0 0
    %2723 = vmatpush1.bf16.msra.mxu0 %v1875
    %2724 = vmatprep.subr.bf16.mxu0 0
    %2725 = vmatpush1.bf16.msra.mxu0 %v1878
    %2726 = vmatprep.subr.bf16.mxu0 0
    %2727 = vmatpush1.bf16.msra.mxu0 %v1881
    %2728 = vmatprep.subr.bf16.mxu0 0
    %2729 = vmatpush1.bf16.msra.mxu0 %v1884
    %2730 = vmatprep.subr.bf16.mxu0 0
    %2731 = vmatpush1.bf16.msra.mxu0 %v1887
    %2732 = vmatprep.subr.bf16.mxu0 0
    %2733 = vmatpush1.bf16.msra.mxu0 %v1890
    %2734 = vmatprep.subr.bf16.mxu0 0
    %2735 = vmatpush1.bf16.msra.mxu0 0
    %2736 = vmatprep.subr.bf16.mxu0 0
    %2737 = vmatpush1.bf16.msra.mxu0 0
    %2738 = vmatprep.subr.bf16.mxu0 0
    %2739 = vmatpush1.bf16.msra.mxu0 0
    %2740 = vmatprep.subr.bf16.mxu0 0
    %2741 = vmatpush1.bf16.msra.mxu0 0
    %2742 = vmatprep.subr.bf16.mxu0 0
    %2743 = vmatpush1.bf16.msra.mxu0 0
    %2744 = vmatprep.subr.bf16.mxu0 0
    %2745 = vmatpush1.bf16.msra.mxu0 0
    %2746 = vmatprep.subr.bf16.mxu0 0
    %2747 = vmatpush1.bf16.msra.mxu0 0
    %2748 = vmatprep.subr.bf16.mxu0 0
    %2749 = vmatpush1.bf16.msra.mxu0 0
    %2750 = vmatprep.mubr.bf16.mxu0 0
    %2751 = vmatmul.mubr.bf16.gmra.mrb[0].mxu0 %v2676
    %v2752 = vpop.f32.mrb[0].mxu0
    %v2753 = vadd.f32 0.0, %v2752
    %v2754 = vpop.f32.mrb[0].mxu0
    %v2755 = vpop.f32.mrb[0].mxu0
    %v2756 = vpop.f32.mrb[0].mxu0
    %2757 = vdwg.mxu0
    %v2758 = vadd.f32 %v2673, %v2712
    %v2759 = vadd.f32 %v2674, %v2714
    %v2760 = vxor.u32 %v2758, 2147483648
    %v2761 = vxor.u32 %v2759, 2147483648
    %v2762 = vmul.f32 %v2760, 1.442695
    %v2763 = vpow.pop %v2762
    %v2764 = vmul.f32 %v2761, 1.442695
    %v2765 = vpow.pop %v2764
    %v2766 = vadd.f32 %v2763, 1.0
    %v2767 = vadd.f32 %v2765, 1.0
    %v2768 = vrcp.pop %v2766
    %v2769 = vmul.f32 1.0, %v2768
    %v2770 = vrcp.pop %v2767
    %v2771 = vmul.f32 1.0, %v2770
    %v2772 = vadd.f32 %v2753, %v2014
    %v2773 = vmul.f32 %v2769, %v2772
    %v2774 = vadd.f32 %v2675, %v2773
    %v2775 = vtanh.pop %v2774
    %v2776 = vsub.f32 1.0, %v2771
    %v2777 = vmul.f32 %v2776, %v2775
    %v2778 = vmul.f32 %v2771, %v2671
    %v2779 = vadd.f32 %v2777, %v2778
    %2780 = vst [vmem:[%s1394] sm:$0xff] %v2779
    %2781 = vst [vmem:[%s1781] sm:$0xff] %v2779
    %v2782 = vld [vmem:[#allocation14] sm:$0xf]
    %v2783 = vld [vmem:[#allocation14 + $0x4] sm:$0xf]
    %v2784 = vld [vmem:[#allocation14 + $0x8] sm:$0xf]
    %v2785 = vld [vmem:[#allocation14 + $0xc] sm:$0xf]
    %v2786 = vld [vmem:[#allocation14 + $0x10] sm:$0xf]
    %v2787 = vld [vmem:[#allocation14 + $0x14] sm:$0xf]
    %v2788 = vld [vmem:[#allocation14 + $0x18] sm:$0xf]
    %v2789 = vld [vmem:[#allocation14 + $0x1c] sm:$0xf]
    %v2790 = vld [vmem:[#allocation14 + $0x20] sm:$0xf]
    %v2791 = vld [vmem:[#allocation14 + $0x24] sm:$0xf]
    %v2792 = vld [vmem:[#allocation14 + $0x28] sm:$0xf]
    %v2793 = vld [vmem:[#allocation14 + $0x2c] sm:$0xf]
    %v2794 = vld [vmem:[#allocation14 + $0x30] sm:$0xf]
    %v2795 = vld [vmem:[#allocation14 + $0x34] sm:$0xf]
    %v2796 = vld [vmem:[#allocation14 + $0x38] sm:$0xf]
    %v2797 = vld [vmem:[#allocation14 + $0x3c] sm:$0xf]
    %v2798 = vld [vmem:[%s10] sm:$0x1]
    %v2799 = vld [vmem:[#allocation3] sm:$0xff]
    %v2800 = vld [vmem:[#allocation3 + $0x8] sm:$0xff]
    %v2801 = vld [vmem:[#allocation3 + $0x10] sm:$0xff]
    %v2802 = vld [vmem:[#allocation3 + $0x18] sm:$0xff]
    %v2803 = vld [vmem:[#allocation3 + $0x20] sm:$0xff]
    %v2804 = vld [vmem:[#allocation3 + $0x28] sm:$0xff]
    %v2805 = vld [vmem:[#allocation3 + $0x30] sm:$0xff]
    %v2806 = vld [vmem:[#allocation3 + $0x38] sm:$0xff]
    %v2807 = vpack.c.bf16 %v2800, %v2799
    %v2808 = vpack.c.bf16 %v2802, %v2801
    %v2809 = vpack.c.bf16 %v2804, %v2803
    %v2810 = vpack.c.bf16 %v2806, %v2805
    %v2812 = vlaneseq
    %v2813 = vshrl.u32 %v2812, 7
    %v2814 = vsub.s32 0, %v2813
    %v2815 = vrot.slane %v2798, %v2814
    %v2833 = vunpack.c.l.b16 %v2782
    %v2834 = vunpack.c.l.b16 %v2783
    %v2835 = vunpack.c.l.b16 %v2784
    %v2836 = vunpack.c.l.b16 %v2785
    %v2837 = vunpack.c.l.b16 %v2786
    %v2838 = vunpack.c.l.b16 %v2787
    %v2839 = vunpack.c.l.b16 %v2788
    %v2840 = vunpack.c.l.b16 %v2789
    %v2841 = vunpack.c.l.b16 %v2790
    %v2842 = vunpack.c.l.b16 %v2791
    %v2843 = vunpack.c.l.b16 %v2792
    %v2844 = vunpack.c.l.b16 %v2793
    %v2845 = vunpack.c.l.b16 %v2794
    %v2846 = vunpack.c.l.b16 %v2795
    %v2847 = vunpack.c.l.b16 %v2796
    %v2848 = vunpack.c.l.b16 %v2797
    %v2849 = vpack.c.b16 %v2834, %v2833
    %v2850 = vpack.c.b16 %v2836, %v2835
    %v2851 = vpack.c.b16 %v2838, %v2837
    %v2852 = vpack.c.b16 %v2840, %v2839
    %v2853 = vpack.c.b16 %v2842, %v2841
    %v2854 = vpack.c.b16 %v2844, %v2843
    %v2855 = vpack.c.b16 %v2846, %v2845
    %v2856 = vpack.c.b16 %v2848, %v2847
    %2865 = vmatprep.subr.bf16.mxu0 0
    %2866 = vmatpush1.bf16.msra.mxu0 %v2849
    %2867 = vmatprep.subr.bf16.mxu0 0
    %2868 = vmatpush1.bf16.msra.mxu0 %v2850
    %2869 = vmatprep.subr.bf16.mxu0 0
    %2870 = vmatpush1.bf16.msra.mxu0 %v2851
    %2871 = vmatprep.subr.bf16.mxu0 0
    %2872 = vmatpush1.bf16.msra.mxu0 %v2852
    %2873 = vmatprep.subr.bf16.mxu0 0
    %2874 = vmatpush1.bf16.msra.mxu0 %v2853
    %2875 = vmatprep.subr.bf16.mxu0 0
    %2876 = vmatpush1.bf16.msra.mxu0 %v2854
    %2877 = vmatprep.subr.bf16.mxu0 0
    %2878 = vmatpush1.bf16.msra.mxu0 %v2855
    %2879 = vmatprep.subr.bf16.mxu0 0
    %2880 = vmatpush1.bf16.msra.mxu0 %v2856
    %2881 = vmatprep.subr.bf16.mxu0 0
    %2882 = vmatpush1.bf16.msra.mxu0 0
    %2883 = vmatprep.subr.bf16.mxu0 0
    %2884 = vmatpush1.bf16.msra.mxu0 0
    %2885 = vmatprep.subr.bf16.mxu0 0
    %2886 = vmatpush1.bf16.msra.mxu0 0
    %2887 = vmatprep.subr.bf16.mxu0 0
    %2888 = vmatpush1.bf16.msra.mxu0 0
    %2889 = vmatprep.subr.bf16.mxu0 0
    %2890 = vmatpush1.bf16.msra.mxu0 0
    %2891 = vmatprep.subr.bf16.mxu0 0
    %2892 = vmatpush1.bf16.msra.mxu0 0
    %2893 = vmatprep.subr.bf16.mxu0 0
    %2894 = vmatpush1.bf16.msra.mxu0 0
    %2895 = vmatprep.subr.bf16.mxu0 0
    %2896 = vmatpush1.bf16.msra.mxu0 0
    %2897 = vmatprep.mubr.bf16.mxu0 0
    %2898 = vmatmul.mubr.bf16.gmra.mrb[0].mxu0 %v2807
    %v2899 = vpop.f32.mrb[0].mxu0
    %v2900 = vadd.f32 %v2815, %v2899
    %v2901 = vpop.f32.mrb[0].mxu0
    %v2902 = vpop.f32.mrb[0].mxu0
    %v2903 = vadd.f32 %v2815, %v2902
    %v2904 = vpop.f32.mrb[0].mxu0
    %2905 = vmatprep.mubr.bf16.mxu0 0
    %2906 = vmatmul.mubr.bf16.gmra.mrb[0].mxu0 %v2808
    %v2907 = vpop.f32.mrb[0].mxu0
    %v2908 = vadd.f32 %v2815, %v2907
    %v2909 = vpop.f32.mrb[0].mxu0
    %v2910 = vpop.f32.mrb[0].mxu0
    %v2911 = vadd.f32 %v2815, %v2910
    %v2912 = vpop.f32.mrb[0].mxu0
    %2913 = vmatprep.mubr.bf16.mxu0 0
    %2914 = vmatmul.mubr.bf16.gmra.mrb[0].mxu0 %v2809
    %v2915 = vpop.f32.mrb[0].mxu0
    %v2916 = vadd.f32 %v2815, %v2915
    %v2917 = vpop.f32.mrb[0].mxu0
    %v2918 = vpop.f32.mrb[0].mxu0
    %v2919 = vadd.f32 %v2815, %v2918
    %v2920 = vpop.f32.mrb[0].mxu0
    %2921 = vmatprep.mubr.bf16.mxu0 0
    %2922 = vmatmul.mubr.bf16.gmra.mrb[0].mxu0 %v2810
    %v2923 = vpop.f32.mrb[0].mxu0
    %v2924 = vadd.f32 %v2815, %v2923
    %v2925 = vpop.f32.mrb[0].mxu0
    %v2926 = vpop.f32.mrb[0].mxu0
    %v2927 = vadd.f32 %v2815, %v2926
    %v2928 = vpop.f32.mrb[0].mxu0
    %2929 = vdwg.mxu0
    %v2930 = vxor.u32 %v2900, 2147483648
    %v2931 = vxor.u32 %v2903, 2147483648
    %v2932 = vxor.u32 %v2908, 2147483648
    %v2933 = vxor.u32 %v2911, 2147483648
    %v2934 = vxor.u32 %v2916, 2147483648
    %v2935 = vxor.u32 %v2919, 2147483648
    %v2936 = vxor.u32 %v2924, 2147483648
    %v2937 = vxor.u32 %v2927, 2147483648
    %v2938 = vmul.f32 %v2930, 1.442695
    %v2939 = vpow.pop %v2938
    %v2940 = vmul.f32 %v2931, 1.442695
    %v2941 = vpow.pop %v2940
    %v2942 = vmul.f32 %v2932, 1.442695
    %v2943 = vpow.pop %v2942
    %v2944 = vmul.f32 %v2933, 1.442695
    %v2945 = vpow.pop %v2944
    %v2946 = vmul.f32 %v2934, 1.442695
    %v2947 = vpow.pop %v2946
    %v2948 = vmul.f32 %v2935, 1.442695
    %v2949 = vpow.pop %v2948
    %v2950 = vmul.f32 %v2936, 1.442695
    %v2951 = vpow.pop %v2950
    %v2952 = vmul.f32 %v2937, 1.442695
    %v2953 = vpow.pop %v2952
    %v2954 = vadd.f32 %v2939, 1.0
    %v2955 = vadd.f32 %v2941, 1.0
    %v2956 = vadd.f32 %v2943, 1.0
    %v2957 = vadd.f32 %v2945, 1.0
    %v2958 = vadd.f32 %v2947, 1.0
    %v2959 = vadd.f32 %v2949, 1.0
    %v2960 = vadd.f32 %v2951, 1.0
    %v2961 = vadd.f32 %v2953, 1.0
    %v2962 = vrcp.pop %v2954
    %v2963 = vmul.f32 1.0, %v2962
    %v2964 = vrcp.pop %v2955
    %v2965 = vmul.f32 1.0, %v2964
    %v2966 = vrcp.pop %v2956
    %v2967 = vmul.f32 1.0, %v2966
    %v2968 = vrcp.pop %v2957
    %v2969 = vmul.f32 1.0, %v2968
    %v2970 = vrcp.pop %v2958
    %v2971 = vmul.f32 1.0, %v2970
    %v2972 = vrcp.pop %v2959
    %v2973 = vmul.f32 1.0, %v2972
    %v2974 = vrcp.pop %v2960
    %v2975 = vmul.f32 1.0, %v2974
    %v2976 = vrcp.pop %v2961
    %v2977 = vmul.f32 1.0, %v2976
    %2978 = vst [vmem:[#allocation16] sm:$0xff] %v2963
    %2979 = vst [vmem:[#allocation16 + $0x8] sm:$0xff] %v2965
    %2980 = vst [vmem:[#allocation16 + $0x10] sm:$0xff] %v2967
    %2981 = vst [vmem:[#allocation16 + $0x18] sm:$0xff] %v2969
    %2982 = vst [vmem:[#allocation16 + $0x20] sm:$0xff] %v2971
    %2983 = vst [vmem:[#allocation16 + $0x28] sm:$0xff] %v2973
    %2984 = vst [vmem:[#allocation16 + $0x30] sm:$0xff] %v2975
    %2985 = vst [vmem:[#allocation16 + $0x38] sm:$0xff] %v2977
    // Predicated region
    $region74: #{tpu_custom_call.1} parent=1 // pred_check
      _
    $region75: #{tpu_custom_call.1} parent=1 // pred_check_branch
      %2987 = sbr.rel (0) target = $region77
    $region76: #{tpu_custom_call.1} parent=1 // pred_region
      %s2989 = ssub.s32 1024, 1024
      %2990 = vsyncadd [#allocation7], %s2989
      %s2991 = sshll.u32 [#allocation16], 4
      %s2992 = int_to_ptr.vmem [resolvable:$true] %s2991
      %2997 = dma.vmem_to_hbm [thread:$0]  %s2992, 1024, %s11, [#allocation7], 128, 128, 8
    $region77: #{tpu_custom_call.1} parent=1 // pred_fallthru
      _
    // Predicated region
    $region78: #{tpu_custom_call.1} parent=1 // pred_check
      _
    $region79: #{tpu_custom_call.1} parent=1 // pred_check_branch
      %2999 = sbr.rel (0) target = $region81
    $region80: #{tpu_custom_call.1} parent=1 // pred_region
      %3000 = dma.done [#allocation7], 1024
    $region81: #{tpu_custom_call.1} parent=1 // pred_fallthru
      _
    %3001 = vsyncpa [#allocation6], 1
    %3002 = vsyncpa [#allocation9], 1
    %3003 = vsyncpa [#allocation12], 1
    %3004 = vsyncpa [#allocation15], 1
    %3005 = vsyncpa [#allocation7], 1

</llo_original>
